<compile_context>
chip_gen: v5e
topology: v5e:2x2
jax: 0.10.0
libtpu: 0.0.40
codegen_flags: <defaults>
</compile_context>

<pallas_src>
import numpy as np

import jax
import jax.numpy as jnp
from jax.experimental import pallas as pl
from jax.experimental.pallas import tpu as pltpu

LANE = 128  # TPU lane width; all packed N dimensions are padded to this.


def _round_up(x, m):
    return (x + m - 1) // m * m


# ----------------------------- Pallas kernel -------------------------------

def _foster_fused_kernel(a1_ref, w1_ref, b1_ref, pool_ref, shift_ref,
                         w2_ref, b2_ref, gap_ref, wh_ref, bh_ref,
                         feat_ref, head_ref):
    """Whole FOSTERNet forward, VMEM-resident, MXU matmuls with f32 accum."""
    f32 = jnp.float32
    bf16 = jnp.bfloat16

    # conv1 (+bias +ReLU) for BOTH backbones in one lane-dense matmul:
    #   [B*H*W, K1] @ [K1, 128] -> [B*H*W, 128]   (cols 0:n*c1 are real)
    y1 = jnp.dot(a1_ref[...], w1_ref[...], preferred_element_type=f32)
    y1 = jnp.maximum(y1 + b1_ref[...], 0.0).astype(bf16)

    # 2x2 average pool as a matmul with the pooling matrix:
    #   [B*H2*W2, B*H*W] @ [B*H*W, 128] -> [B*H2*W2, 128]
    y1p = jnp.dot(pool_ref[...], y1, preferred_element_type=f32).astype(bf16)

    # conv2 via 9 shifted taps (zero-padded 'same' 3x3 conv), all on the MXU:
    #   y2 = relu( sum_t  S_t @ y1p @ W2_t  + b2 )
    # S_t gathers the (kh,kw)-shifted rows of the pooled map; W2_t holds the
    # per-tap conv2 weights of both backbones packed block-diagonally.
    acc = jnp.zeros((pool_ref.shape[0], w2_ref.shape[2]), dtype=f32)
    for t in range(9):  # static unroll over the 3x3 taps
        shifted = jnp.dot(shift_ref[t], y1p,
                          preferred_element_type=f32).astype(bf16)
        acc = acc + jnp.dot(shifted, w2_ref[t], preferred_element_type=f32)
    y2 = jnp.maximum(acc + b2_ref[...], 0.0).astype(bf16)

    # Global average pool as a matmul -> packed 'features' [B, 128]
    # (cols 0:n*out_dim hold torch.cat([f_0, f_1, ...], dim=1)).
    feats = jnp.dot(gap_ref[...], y2, preferred_element_type=f32)
    feat_ref[...] = feats

    # fc / fe_fc / oldfc fused into one lane-dense head matmul.
    heads = jnp.dot(feats.astype(bf16), wh_ref[...],
                    preferred_element_type=f32)
    head_ref[...] = heads + bh_ref[...]


def _fused_forward_call(a1, packed):
    b = packed["gap"].shape[0]
    vmem = lambda: pl.BlockSpec(memory_space=pltpu.MemorySpace.VMEM)
    return pl.pallas_call(
        _foster_fused_kernel,
        out_shape=(jax.ShapeDtypeStruct((b, LANE), jnp.float32),
                   jax.ShapeDtypeStruct((b, LANE), jnp.float32)),
        in_specs=[vmem() for _ in range(10)],
        out_specs=(vmem(), vmem()),
    )(a1, packed["w1"], packed["b1"], packed["pool"], packed["shift"],
      packed["w2"], packed["b2"], packed["gap"], packed["wh"], packed["bh"])


# ------------------------------- glue (JAX) --------------------------------

def im2col3x3(x_nhwc):
    """3x3 'same'-padding im2col: [B,H,W,C] -> [B*H*W, 9*C] (tiny, jitted)."""
    B, H, W, C = x_nhwc.shape
    xp = jnp.pad(x_nhwc, ((0, 0), (1, 1), (1, 1), (0, 0)))
    cols = [xp[:, kh:kh + H, kw:kw + W, :]
            for kh in range(3) for kw in range(3)]
    return jnp.concatenate(cols, axis=-1).reshape(B * H * W, 9 * C)


def build_forward(cfg):
    """Returns a jitted forward(x_nchw, packed) -> FOSTERNet output dict."""
    nb_classes = cfg["nb_classes"]
    nb_old = cfg["nb_old"]
    feature_dim = cfg["feature_dim"]
    k1p = cfg["k1p"]

    @jax.jit
    def forward(x_nchw, packed):
        # NCHW -> NHWC + shared conv1 im2col (one tiny fused XLA op, reused by
        # both backbones), pad K to the packed width, cast operands to bf16.
        x = jnp.transpose(x_nchw, (0, 2, 3, 1)).astype(jnp.float32)
        a1 = im2col3x3(x)
        a1 = jnp.pad(a1, ((0, 0), (0, k1p - a1.shape[1]))).astype(jnp.bfloat16)

        feats_p, heads_p = _fused_forward_call(a1, packed)

        logits = heads_p[:, :nb_classes]
        out = {
            "logits": logits,
            "fe_logits": heads_p[:, nb_classes:2 * nb_classes],
            "features": feats_p[:, :feature_dim],
            "old_logits": heads_p[:, 2 * nb_classes:2 * nb_classes + nb_old],
        }
        out["eval_logits"] = out["logits"]
        return out

    return forward


# ------------------- parameter creation & one-time packing ------------------

def make_params(key, cin=3, c1=8, out_dim=16, nb_classes=10, nb_old=5,
                n_convnets=2):
    ks = iter(jax.random.split(key, 4 * n_convnets + 8))

    def norm(shape, scale=0.1):
        return scale * jax.random.normal(next(ks), shape, dtype=jnp.float32)

    convnets = [{"w1": norm((3, 3, cin, c1)), "b1": norm((c1,)),
                 "w2": norm((3, 3, c1, out_dim)), "b2": norm((out_dim,))}
                for _ in range(n_convnets)]
    feature_dim = out_dim * n_convnets
    return {
        "convnets": convnets,
        "fc_w": norm((nb_classes, feature_dim)), "fc_b": norm((nb_classes,)),
        "fe_fc_w": norm((nb_classes, out_dim)), "fe_fc_b": norm((nb_classes,)),
        "oldfc_w": norm((nb_old, feature_dim - out_dim)),
        "oldfc_b": norm((nb_old,)),
    }


def pack_params(params, *, batch, height, width):
    """One-time repacking of module weights plus structural (pool/shift/GAP)
    matrices into lane-dense, MXU-friendly operands for the fused kernel."""
    convs = params["convnets"]
    n = len(convs)
    cin, c1 = convs[0]["w1"].shape[2], convs[0]["w1"].shape[3]
    c2 = convs[0]["w2"].shape[3]                      # == out_dim
    nb_classes = params["fc_w"].shape[0]
    nb_old = params["oldfc_w"].shape[0]
    feature_dim = n * c2
    h2, w2d = height // 2, width // 2
    m1, mp = batch * height * width, batch * h2 * w2d

    assert height % 2 == 0 and width % 2 == 0
    assert n * c1 <= LANE and feature_dim <= LANE
    assert 2 * nb_classes + nb_old <= LANE

    k1 = 9 * cin
    k1p = _round_up(k1, 8)

    # conv1: weights of all backbones packed along the N (lane) dimension.
    w1p = np.zeros((k1p, LANE), np.float32)
    b1p = np.zeros((1, LANE), np.float32)
    # conv2: per-tap weights, block-diagonal across backbones.
    w2p = np.zeros((9, LANE, LANE), np.float32)
    b2p = np.zeros((1, LANE), np.float32)
    for i, cvn in enumerate(convs):
        w1p[:k1, i * c1:(i + 1) * c1] = np.asarray(cvn["w1"]).reshape(k1, c1)
        b1p[0, i * c1:(i + 1) * c1] = np.asarray(cvn["b1"])
        w2_i = np.asarray(cvn["w2"])
        for kh in range(3):
            for kw in range(3):
                w2p[kh * 3 + kw,
                    i * c1:(i + 1) * c1,
                    i * c2:(i + 1) * c2] = w2_i[kh, kw]
        b2p[0, i * c2:(i + 1) * c2] = np.asarray(cvn["b2"])

    # Structural matrices (depend on shapes only; built once on the host,
    # vectorized with numpy index arrays).
    out_idx = np.arange(mp).reshape(batch, h2, w2d)     # pooled-map row ids
    src_idx = np.arange(m1).reshape(batch, height, width)

    pool = np.zeros((mp, m1), np.float32)               # 2x2 average pooling
    for da in (0, 1):
        for db in (0, 1):
            pool[out_idx.ravel(),
                 src_idx[:, da::2, db::2].ravel()] = 0.25

    shift = np.zeros((9, mp, mp), np.float32)           # conv2 'same' 3x3 taps
    ho = np.arange(h2)
    wo = np.arange(w2d)
    for kh in range(3):
        for kw in range(3):
            t, dh, dw = kh * 3 + kw, kh - 1, kw - 1
            vh = ho[(ho + dh >= 0) & (ho + dh < h2)]
            vw = wo[(wo + dw >= 0) & (wo + dw < w2d)]
            for b in range(batch):
                rows = out_idx[b][np.ix_(vh, vw)].ravel()
                cols = out_idx[b][np.ix_(vh + dh, vw + dw)].ravel()
                shift[t, rows, cols] = 1.0

    gap = np.zeros((batch, mp), np.float32)             # global average pool
    for b in range(batch):
        gap[b, b * h2 * w2d:(b + 1) * h2 * w2d] = 1.0 / (h2 * w2d)

    # fc / fe_fc / oldfc pre-transposed and packed into one head matmul.
    wh = np.zeros((LANE, LANE), np.float32)
    bh = np.zeros((1, LANE), np.float32)
    wh[:feature_dim, :nb_classes] = np.asarray(params["fc_w"]).T
    wh[feature_dim - c2:feature_dim,
       nb_classes:2 * nb_classes] = np.asarray(params["fe_fc_w"]).T
    wh[:feature_dim - c2,
       2 * nb_classes:2 * nb_classes + nb_old] = np.asarray(params["oldfc_w"]).T
    bh[0, :nb_classes] = np.asarray(params["fc_b"])
    bh[0, nb_classes:2 * nb_classes] = np.asarray(params["fe_fc_b"])
    bh[0, 2 * nb_classes:2 * nb_classes + nb_old] = np.asarray(params["oldfc_b"])

    bf = jnp.bfloat16
    packed = {
        "w1": jnp.asarray(w1p, bf), "b1": jnp.asarray(b1p),
        "pool": jnp.asarray(pool, bf), "shift": jnp.asarray(shift, bf),
        "w2": jnp.asarray(w2p, bf), "b2": jnp.asarray(b2p),
        "gap": jnp.asarray(gap, bf),
        "wh": jnp.asarray(wh, bf), "bh": jnp.asarray(bh),
    }
    cfg = dict(batch=batch, height=height, width=width, k1p=k1p,
               out_dim=c2, n_convnets=n, feature_dim=feature_dim,
               nb_classes=nb_classes, nb_old=nb_old)
    return packed, cfg


# --------------------- pure-JAX f32 reference (validation) ------------------

def reference_forward(x_nchw, params, out_dim):
    x = jnp.transpose(x_nchw, (0, 2, 3, 1)).astype(jnp.float32)
    B, H, W, _ = x.shape
    feats = []
    for p in params["convnets"]:
        c1, c2 = p["w1"].shape[-1], p["w2"].shape[-1]
        y1 = jnp.maximum(im2col3x3(x) @ p["w1"].reshape(-1, c1) + p["b1"], 0.0)
        y1 = y1.reshape(B, H, W, c1)
        y1 = y1.reshape(B, H // 2, 2, W // 2, 2, c1).mean(axis=(2, 4))
        y2 = jnp.maximum(im2col3x3(y1) @ p["w2"].reshape(-1, c2) + p["b2"], 0.0)
        feats.append(y2.reshape(B, (H // 2) * (W // 2), c2).mean(axis=1))
    features = jnp.concatenate(feats, axis=1)
    logits = features @ params["fc_w"].T + params["fc_b"]
    return {
        "logits": logits,
        "fe_logits": features[:, -out_dim:] @ params["fe_fc_w"].T
                     + params["fe_fc_b"],
        "old_logits": features[:, :-out_dim] @ params["oldfc_w"].T
                      + params["oldfc_b"],
        "features": features,
        "eval_logits": logits,
    }


# ----------------------------------- main -----------------------------------

if __name__ == "__main__":
    B, CIN, H, W = 2, 3, 16, 16
    OUT_DIM, C1, NB_CLASSES, NB_OLD, N_CONV = 16, 8, 10, 5, 2

    key = jax.random.PRNGKey(0)
    kx, kp = jax.random.split(key)

    x = jax.random.normal(kx, (B, CIN, H, W), dtype=jnp.float32)  # NCHW input
    params = make_params(kp, cin=CIN, c1=C1, out_dim=OUT_DIM,
                         nb_classes=NB_CLASSES, nb_old=NB_OLD,
                         n_convnets=N_CONV)

    packed, cfg = pack_params(params, batch=B, height=H, width=W)
    forward = build_forward(cfg)

    out = jax.block_until_ready(forward(x, packed))

    assert out["logits"].shape == (B, NB_CLASSES)
    assert out["fe_logits"].shape == (B, NB_CLASSES)
    assert out["old_logits"].shape == (B, NB_OLD)
    assert out["features"].shape == (B, OUT_DIM * N_CONV)
    assert out["eval_logits"].shape == (B, NB_CLASSES)

    # Validate against the pure-JAX f32 reference (bf16 MXU operands -> loose
    # tolerance; values are O(0.1-1), errors are O(1e-3)).
    ref = jax.block_until_ready(reference_forward(x, params, OUT_DIM))
    for name in ("logits", "fe_logits", "old_logits", "features"):
        assert bool(jnp.allclose(out[name], ref[name],
                                 atol=5e-2, rtol=5e-2)), name

    # TODO(synk): training-time bookkeeping (update_fc, copy_fc, weight_align,
    # load_checkpoint) is host-side parameter surgery, not part of forward.
    print("KERNEL_OK")
</pallas_src>

<mosaic_0001>
module attributes {stable_mosaic.version = 11 : i64} {
  func.func @_foster_fused_kernel(%arg0: memref<512x32xbf16, #tpu.memory_space<vmem>>, %arg1: memref<32x128xbf16, #tpu.memory_space<vmem>>, %arg2: memref<1x128xf32, #tpu.memory_space<vmem>>, %arg3: memref<128x512xbf16, #tpu.memory_space<vmem>>, %arg4: memref<9x128x128xbf16, #tpu.memory_space<vmem>>, %arg5: memref<9x128x128xbf16, #tpu.memory_space<vmem>>, %arg6: memref<1x128xf32, #tpu.memory_space<vmem>>, %arg7: memref<2x128xbf16, #tpu.memory_space<vmem>>, %arg8: memref<128x128xbf16, #tpu.memory_space<vmem>>, %arg9: memref<1x128xf32, #tpu.memory_space<vmem>>, %arg10: memref<2x128xf32, #tpu.memory_space<vmem>>, %arg11: memref<2x128xf32, #tpu.memory_space<vmem>>) attributes {dimension_semantics = [], scalar_prefetch = 0 : i64, scratch_operands = 0 : i64, tpu.core_type = #tpu.core_type<tc>} {
    %c0 = arith.constant 0 : index
    %c0_0 = arith.constant 0 : index
    %0 = vector.load %arg0[%c0, %c0_0] : memref<512x32xbf16, #tpu.memory_space<vmem>>, vector<512x32xbf16>
    %c0_1 = arith.constant 0 : index
    %c0_2 = arith.constant 0 : index
    %1 = vector.load %arg1[%c0_1, %c0_2] : memref<32x128xbf16, #tpu.memory_space<vmem>>, vector<32x128xbf16>
    %cst = arith.constant dense<0.000000e+00> : vector<512x128xf32>
    %2 = tpu.matmul %0, %1, %cst {dimension_numbers = #tpu.dot_dimension_numbers<[1], [0], [0], [1], [0, 0, 1, 1], [], []>} : vector<512x32xbf16>, vector<32x128xbf16>, vector<512x128xf32> -> vector<512x128xf32>
    %c0_3 = arith.constant 0 : index
    %c0_4 = arith.constant 0 : index
    %3 = vector.load %arg2[%c0_3, %c0_4] : memref<1x128xf32, #tpu.memory_space<vmem>>, vector<1x128xf32>
    %4 = vector.broadcast %3 : vector<1x128xf32> to vector<512x128xf32>
    %5 = arith.addf %2, %4 : vector<512x128xf32>
    %cst_5 = arith.constant 0.000000e+00 : f32
    %6 = vector.broadcast %cst_5 : f32 to vector<512x128xf32>
    %7 = arith.maximumf %5, %6 : vector<512x128xf32>
    %8 = arith.truncf %7 : vector<512x128xf32> to vector<512x128xbf16>
    %c0_6 = arith.constant 0 : index
    %c0_7 = arith.constant 0 : index
    %9 = vector.load %arg3[%c0_6, %c0_7] : memref<128x512xbf16, #tpu.memory_space<vmem>>, vector<128x512xbf16>
    %cst_8 = arith.constant dense<0.000000e+00> : vector<128x128xf32>
    %10 = tpu.matmul %9, %8, %cst_8 {dimension_numbers = #tpu.dot_dimension_numbers<[1], [0], [0], [1], [0, 0, 1, 1], [], []>} : vector<128x512xbf16>, vector<512x128xbf16>, vector<128x128xf32> -> vector<128x128xf32>
    %11 = arith.truncf %10 : vector<128x128xf32> to vector<128x128xbf16>
    %cst_9 = arith.constant 0.000000e+00 : f32
    %12 = vector.broadcast %cst_9 : f32 to vector<128x128xf32>
    %c0_10 = arith.constant 0 : index
    %c0_11 = arith.constant 0 : index
    %c0_12 = arith.constant 0 : index
    %13 = vector.load %arg4[%c0_10, %c0_11, %c0_12] : memref<9x128x128xbf16, #tpu.memory_space<vmem>>, vector<1x128x128xbf16>
    %14 = vector.shape_cast %13 : vector<1x128x128xbf16> to vector<128x128xbf16>
    %cst_13 = arith.constant dense<0.000000e+00> : vector<128x128xf32>
    %15 = tpu.matmul %14, %11, %cst_13 {dimension_numbers = #tpu.dot_dimension_numbers<[1], [0], [0], [1], [0, 0, 1, 1], [], []>} : vector<128x128xbf16>, vector<128x128xbf16>, vector<128x128xf32> -> vector<128x128xf32>
    %16 = arith.truncf %15 : vector<128x128xf32> to vector<128x128xbf16>
    %c0_14 = arith.constant 0 : index
    %c0_15 = arith.constant 0 : index
    %c0_16 = arith.constant 0 : index
    %17 = vector.load %arg5[%c0_14, %c0_15, %c0_16] : memref<9x128x128xbf16, #tpu.memory_space<vmem>>, vector<1x128x128xbf16>
    %18 = vector.shape_cast %17 : vector<1x128x128xbf16> to vector<128x128xbf16>
    %cst_17 = arith.constant dense<0.000000e+00> : vector<128x128xf32>
    %19 = tpu.matmul %16, %18, %cst_17 {dimension_numbers = #tpu.dot_dimension_numbers<[1], [0], [0], [1], [0, 0, 1, 1], [], []>} : vector<128x128xbf16>, vector<128x128xbf16>, vector<128x128xf32> -> vector<128x128xf32>
    %20 = arith.addf %12, %19 : vector<128x128xf32>
    %c1 = arith.constant 1 : index
    %c0_18 = arith.constant 0 : index
    %c0_19 = arith.constant 0 : index
    %21 = vector.load %arg4[%c1, %c0_18, %c0_19] : memref<9x128x128xbf16, #tpu.memory_space<vmem>>, vector<1x128x128xbf16>
    %22 = vector.shape_cast %21 : vector<1x128x128xbf16> to vector<128x128xbf16>
    %cst_20 = arith.constant dense<0.000000e+00> : vector<128x128xf32>
    %23 = tpu.matmul %22, %11, %cst_20 {dimension_numbers = #tpu.dot_dimension_numbers<[1], [0], [0], [1], [0, 0, 1, 1], [], []>} : vector<128x128xbf16>, vector<128x128xbf16>, vector<128x128xf32> -> vector<128x128xf32>
    %24 = arith.truncf %23 : vector<128x128xf32> to vector<128x128xbf16>
    %c1_21 = arith.constant 1 : index
    %c0_22 = arith.constant 0 : index
    %c0_23 = arith.constant 0 : index
    %25 = vector.load %arg5[%c1_21, %c0_22, %c0_23] : memref<9x128x128xbf16, #tpu.memory_space<vmem>>, vector<1x128x128xbf16>
    %26 = vector.shape_cast %25 : vector<1x128x128xbf16> to vector<128x128xbf16>
    %cst_24 = arith.constant dense<0.000000e+00> : vector<128x128xf32>
    %27 = tpu.matmul %24, %26, %cst_24 {dimension_numbers = #tpu.dot_dimension_numbers<[1], [0], [0], [1], [0, 0, 1, 1], [], []>} : vector<128x128xbf16>, vector<128x128xbf16>, vector<128x128xf32> -> vector<128x128xf32>
    %28 = arith.addf %20, %27 : vector<128x128xf32>
    %c2 = arith.constant 2 : index
    %c0_25 = arith.constant 0 : index
    %c0_26 = arith.constant 0 : index
    %29 = vector.load %arg4[%c2, %c0_25, %c0_26] : memref<9x128x128xbf16, #tpu.memory_space<vmem>>, vector<1x128x128xbf16>
    %30 = vector.shape_cast %29 : vector<1x128x128xbf16> to vector<128x128xbf16>
    %cst_27 = arith.constant dense<0.000000e+00> : vector<128x128xf32>
    %31 = tpu.matmul %30, %11, %cst_27 {dimension_numbers = #tpu.dot_dimension_numbers<[1], [0], [0], [1], [0, 0, 1, 1], [], []>} : vector<128x128xbf16>, vector<128x128xbf16>, vector<128x128xf32> -> vector<128x128xf32>
    %32 = arith.truncf %31 : vector<128x128xf32> to vector<128x128xbf16>
    %c2_28 = arith.constant 2 : index
    %c0_29 = arith.constant 0 : index
    %c0_30 = arith.constant 0 : index
    %33 = vector.load %arg5[%c2_28, %c0_29, %c0_30] : memref<9x128x128xbf16, #tpu.memory_space<vmem>>, vector<1x128x128xbf16>
    %34 = vector.shape_cast %33 : vector<1x128x128xbf16> to vector<128x128xbf16>
    %cst_31 = arith.constant dense<0.000000e+00> : vector<128x128xf32>
    %35 = tpu.matmul %32, %34, %cst_31 {dimension_numbers = #tpu.dot_dimension_numbers<[1], [0], [0], [1], [0, 0, 1, 1], [], []>} : vector<128x128xbf16>, vector<128x128xbf16>, vector<128x128xf32> -> vector<128x128xf32>
    %36 = arith.addf %28, %35 : vector<128x128xf32>
    %c3 = arith.constant 3 : index
    %c0_32 = arith.constant 0 : index
    %c0_33 = arith.constant 0 : index
    %37 = vector.load %arg4[%c3, %c0_32, %c0_33] : memref<9x128x128xbf16, #tpu.memory_space<vmem>>, vector<1x128x128xbf16>
    %38 = vector.shape_cast %37 : vector<1x128x128xbf16> to vector<128x128xbf16>
    %cst_34 = arith.constant dense<0.000000e+00> : vector<128x128xf32>
    %39 = tpu.matmul %38, %11, %cst_34 {dimension_numbers = #tpu.dot_dimension_numbers<[1], [0], [0], [1], [0, 0, 1, 1], [], []>} : vector<128x128xbf16>, vector<128x128xbf16>, vector<128x128xf32> -> vector<128x128xf32>
    %40 = arith.truncf %39 : vector<128x128xf32> to vector<128x128xbf16>
    %c3_35 = arith.constant 3 : index
    %c0_36 = arith.constant 0 : index
    %c0_37 = arith.constant 0 : index
    %41 = vector.load %arg5[%c3_35, %c0_36, %c0_37] : memref<9x128x128xbf16, #tpu.memory_space<vmem>>, vector<1x128x128xbf16>
    %42 = vector.shape_cast %41 : vector<1x128x128xbf16> to vector<128x128xbf16>
    %cst_38 = arith.constant dense<0.000000e+00> : vector<128x128xf32>
    %43 = tpu.matmul %40, %42, %cst_38 {dimension_numbers = #tpu.dot_dimension_numbers<[1], [0], [0], [1], [0, 0, 1, 1], [], []>} : vector<128x128xbf16>, vector<128x128xbf16>, vector<128x128xf32> -> vector<128x128xf32>
    %44 = arith.addf %36, %43 : vector<128x128xf32>
    %c4 = arith.constant 4 : index
    %c0_39 = arith.constant 0 : index
    %c0_40 = arith.constant 0 : index
    %45 = vector.load %arg4[%c4, %c0_39, %c0_40] : memref<9x128x128xbf16, #tpu.memory_space<vmem>>, vector<1x128x128xbf16>
    %46 = vector.shape_cast %45 : vector<1x128x128xbf16> to vector<128x128xbf16>
    %cst_41 = arith.constant dense<0.000000e+00> : vector<128x128xf32>
    %47 = tpu.matmul %46, %11, %cst_41 {dimension_numbers = #tpu.dot_dimension_numbers<[1], [0], [0], [1], [0, 0, 1, 1], [], []>} : vector<128x128xbf16>, vector<128x128xbf16>, vector<128x128xf32> -> vector<128x128xf32>
    %48 = arith.truncf %47 : vector<128x128xf32> to vector<128x128xbf16>
    %c4_42 = arith.constant 4 : index
    %c0_43 = arith.constant 0 : index
    %c0_44 = arith.constant 0 : index
    %49 = vector.load %arg5[%c4_42, %c0_43, %c0_44] : memref<9x128x128xbf16, #tpu.memory_space<vmem>>, vector<1x128x128xbf16>
    %50 = vector.shape_cast %49 : vector<1x128x128xbf16> to vector<128x128xbf16>
    %cst_45 = arith.constant dense<0.000000e+00> : vector<128x128xf32>
    %51 = tpu.matmul %48, %50, %cst_45 {dimension_numbers = #tpu.dot_dimension_numbers<[1], [0], [0], [1], [0, 0, 1, 1], [], []>} : vector<128x128xbf16>, vector<128x128xbf16>, vector<128x128xf32> -> vector<128x128xf32>
    %52 = arith.addf %44, %51 : vector<128x128xf32>
    %c5 = arith.constant 5 : index
    %c0_46 = arith.constant 0 : index
    %c0_47 = arith.constant 0 : index
    %53 = vector.load %arg4[%c5, %c0_46, %c0_47] : memref<9x128x128xbf16, #tpu.memory_space<vmem>>, vector<1x128x128xbf16>
    %54 = vector.shape_cast %53 : vector<1x128x128xbf16> to vector<128x128xbf16>
    %cst_48 = arith.constant dense<0.000000e+00> : vector<128x128xf32>
    %55 = tpu.matmul %54, %11, %cst_48 {dimension_numbers = #tpu.dot_dimension_numbers<[1], [0], [0], [1], [0, 0, 1, 1], [], []>} : vector<128x128xbf16>, vector<128x128xbf16>, vector<128x128xf32> -> vector<128x128xf32>
    %56 = arith.truncf %55 : vector<128x128xf32> to vector<128x128xbf16>
    %c5_49 = arith.constant 5 : index
    %c0_50 = arith.constant 0 : index
    %c0_51 = arith.constant 0 : index
    %57 = vector.load %arg5[%c5_49, %c0_50, %c0_51] : memref<9x128x128xbf16, #tpu.memory_space<vmem>>, vector<1x128x128xbf16>
    %58 = vector.shape_cast %57 : vector<1x128x128xbf16> to vector<128x128xbf16>
    %cst_52 = arith.constant dense<0.000000e+00> : vector<128x128xf32>
    %59 = tpu.matmul %56, %58, %cst_52 {dimension_numbers = #tpu.dot_dimension_numbers<[1], [0], [0], [1], [0, 0, 1, 1], [], []>} : vector<128x128xbf16>, vector<128x128xbf16>, vector<128x128xf32> -> vector<128x128xf32>
    %60 = arith.addf %52, %59 : vector<128x128xf32>
    %c6 = arith.constant 6 : index
    %c0_53 = arith.constant 0 : index
    %c0_54 = arith.constant 0 : index
    %61 = vector.load %arg4[%c6, %c0_53, %c0_54] : memref<9x128x128xbf16, #tpu.memory_space<vmem>>, vector<1x128x128xbf16>
    %62 = vector.shape_cast %61 : vector<1x128x128xbf16> to vector<128x128xbf16>
    %cst_55 = arith.constant dense<0.000000e+00> : vector<128x128xf32>
    %63 = tpu.matmul %62, %11, %cst_55 {dimension_numbers = #tpu.dot_dimension_numbers<[1], [0], [0], [1], [0, 0, 1, 1], [], []>} : vector<128x128xbf16>, vector<128x128xbf16>, vector<128x128xf32> -> vector<128x128xf32>
    %64 = arith.truncf %63 : vector<128x128xf32> to vector<128x128xbf16>
    %c6_56 = arith.constant 6 : index
    %c0_57 = arith.constant 0 : index
    %c0_58 = arith.constant 0 : index
    %65 = vector.load %arg5[%c6_56, %c0_57, %c0_58] : memref<9x128x128xbf16, #tpu.memory_space<vmem>>, vector<1x128x128xbf16>
    %66 = vector.shape_cast %65 : vector<1x128x128xbf16> to vector<128x128xbf16>
    %cst_59 = arith.constant dense<0.000000e+00> : vector<128x128xf32>
    %67 = tpu.matmul %64, %66, %cst_59 {dimension_numbers = #tpu.dot_dimension_numbers<[1], [0], [0], [1], [0, 0, 1, 1], [], []>} : vector<128x128xbf16>, vector<128x128xbf16>, vector<128x128xf32> -> vector<128x128xf32>
    %68 = arith.addf %60, %67 : vector<128x128xf32>
    %c7 = arith.constant 7 : index
    %c0_60 = arith.constant 0 : index
    %c0_61 = arith.constant 0 : index
    %69 = vector.load %arg4[%c7, %c0_60, %c0_61] : memref<9x128x128xbf16, #tpu.memory_space<vmem>>, vector<1x128x128xbf16>
    %70 = vector.shape_cast %69 : vector<1x128x128xbf16> to vector<128x128xbf16>
    %cst_62 = arith.constant dense<0.000000e+00> : vector<128x128xf32>
    %71 = tpu.matmul %70, %11, %cst_62 {dimension_numbers = #tpu.dot_dimension_numbers<[1], [0], [0], [1], [0, 0, 1, 1], [], []>} : vector<128x128xbf16>, vector<128x128xbf16>, vector<128x128xf32> -> vector<128x128xf32>
    %72 = arith.truncf %71 : vector<128x128xf32> to vector<128x128xbf16>
    %c7_63 = arith.constant 7 : index
    %c0_64 = arith.constant 0 : index
    %c0_65 = arith.constant 0 : index
    %73 = vector.load %arg5[%c7_63, %c0_64, %c0_65] : memref<9x128x128xbf16, #tpu.memory_space<vmem>>, vector<1x128x128xbf16>
    %74 = vector.shape_cast %73 : vector<1x128x128xbf16> to vector<128x128xbf16>
    %cst_66 = arith.constant dense<0.000000e+00> : vector<128x128xf32>
    %75 = tpu.matmul %72, %74, %cst_66 {dimension_numbers = #tpu.dot_dimension_numbers<[1], [0], [0], [1], [0, 0, 1, 1], [], []>} : vector<128x128xbf16>, vector<128x128xbf16>, vector<128x128xf32> -> vector<128x128xf32>
    %76 = arith.addf %68, %75 : vector<128x128xf32>
    %c8 = arith.constant 8 : index
    %c0_67 = arith.constant 0 : index
    %c0_68 = arith.constant 0 : index
    %77 = vector.load %arg4[%c8, %c0_67, %c0_68] : memref<9x128x128xbf16, #tpu.memory_space<vmem>>, vector<1x128x128xbf16>
    %78 = vector.shape_cast %77 : vector<1x128x128xbf16> to vector<128x128xbf16>
    %cst_69 = arith.constant dense<0.000000e+00> : vector<128x128xf32>
    %79 = tpu.matmul %78, %11, %cst_69 {dimension_numbers = #tpu.dot_dimension_numbers<[1], [0], [0], [1], [0, 0, 1, 1], [], []>} : vector<128x128xbf16>, vector<128x128xbf16>, vector<128x128xf32> -> vector<128x128xf32>
    %80 = arith.truncf %79 : vector<128x128xf32> to vector<128x128xbf16>
    %c8_70 = arith.constant 8 : index
    %c0_71 = arith.constant 0 : index
    %c0_72 = arith.constant 0 : index
    %81 = vector.load %arg5[%c8_70, %c0_71, %c0_72] : memref<9x128x128xbf16, #tpu.memory_space<vmem>>, vector<1x128x128xbf16>
    %82 = vector.shape_cast %81 : vector<1x128x128xbf16> to vector<128x128xbf16>
    %cst_73 = arith.constant dense<0.000000e+00> : vector<128x128xf32>
    %83 = tpu.matmul %80, %82, %cst_73 {dimension_numbers = #tpu.dot_dimension_numbers<[1], [0], [0], [1], [0, 0, 1, 1], [], []>} : vector<128x128xbf16>, vector<128x128xbf16>, vector<128x128xf32> -> vector<128x128xf32>
    %84 = arith.addf %76, %83 : vector<128x128xf32>
    %c0_74 = arith.constant 0 : index
    %c0_75 = arith.constant 0 : index
    %85 = vector.load %arg6[%c0_74, %c0_75] : memref<1x128xf32, #tpu.memory_space<vmem>>, vector<1x128xf32>
    %86 = vector.broadcast %85 : vector<1x128xf32> to vector<128x128xf32>
    %87 = arith.addf %84, %86 : vector<128x128xf32>
    %cst_76 = arith.constant 0.000000e+00 : f32
    %88 = vector.broadcast %cst_76 : f32 to vector<128x128xf32>
    %89 = arith.maximumf %87, %88 : vector<128x128xf32>
    %90 = arith.truncf %89 : vector<128x128xf32> to vector<128x128xbf16>
    %c0_77 = arith.constant 0 : index
    %c0_78 = arith.constant 0 : index
    %91 = vector.load %arg7[%c0_77, %c0_78] : memref<2x128xbf16, #tpu.memory_space<vmem>>, vector<2x128xbf16>
    %cst_79 = arith.constant dense<0.000000e+00> : vector<2x128xf32>
    %92 = tpu.matmul %91, %90, %cst_79 {dimension_numbers = #tpu.dot_dimension_numbers<[1], [0], [0], [1], [0, 0, 1, 1], [], []>} : vector<2x128xbf16>, vector<128x128xbf16>, vector<2x128xf32> -> vector<2x128xf32>
    %c0_80 = arith.constant 0 : index
    %c0_81 = arith.constant 0 : index
    %93 = vector.load %arg10[%c0_80, %c0_81] : memref<2x128xf32, #tpu.memory_space<vmem>>, vector<2x128xf32>
    tpu.vector_store %arg10[%c0_80, %c0_81], %92 {strides = array<i32>} : memref<2x128xf32, #tpu.memory_space<vmem>>, vector<2x128xf32>,
    %94 = arith.truncf %92 : vector<2x128xf32> to vector<2x128xbf16>
    %c0_82 = arith.constant 0 : index
    %c0_83 = arith.constant 0 : index
    %95 = vector.load %arg8[%c0_82, %c0_83] : memref<128x128xbf16, #tpu.memory_space<vmem>>, vector<128x128xbf16>
    %cst_84 = arith.constant dense<0.000000e+00> : vector<2x128xf32>
    %96 = tpu.matmul %94, %95, %cst_84 {dimension_numbers = #tpu.dot_dimension_numbers<[1], [0], [0], [1], [0, 0, 1, 1], [], []>} : vector<2x128xbf16>, vector<128x128xbf16>, vector<2x128xf32> -> vector<2x128xf32>
    %c0_85 = arith.constant 0 : index
    %c0_86 = arith.constant 0 : index
    %97 = vector.load %arg9[%c0_85, %c0_86] : memref<1x128xf32, #tpu.memory_space<vmem>>, vector<1x128xf32>
    %98 = vector.broadcast %97 : vector<1x128xf32> to vector<2x128xf32>
    %99 = arith.addf %96, %98 : vector<2x128xf32>
    %c0_87 = arith.constant 0 : index
    %c0_88 = arith.constant 0 : index
    %100 = vector.load %arg11[%c0_87, %c0_88] : memref<2x128xf32, #tpu.memory_space<vmem>>, vector<2x128xf32>
    tpu.vector_store %arg11[%c0_87, %c0_88], %99 {strides = array<i32>} : memref<2x128xf32, #tpu.memory_space<vmem>>, vector<2x128xf32>,
    return
  }
}

</mosaic_0001>

<llo_original>
// kernel: forward.1
$region0: #{forward.1}
  #allocation0 [shape = 'u32[]', space=smem, size = 0x4, offset = 0x4, fixed_abs, tag = 'smem constant byte address 0x4 - core index']
  #allocation1 [shape = 'u32[72,128]{1,0:T(1,128)}', space=vmem, size = 0x9000, scoped, tag = 'internal scratch']
  %s0 = inlined_call_operand.vmem [shape: bf16[512,32], index: 0, kind: input, shape index: {}]
  %s1 = inlined_call_operand.vmem [shape: bf16[32,128], index: 1, kind: input, shape index: {}]
  %s2 = inlined_call_operand.vmem [shape: f32[1,128], index: 2, kind: input, shape index: {}]
  %s3 = inlined_call_operand.vmem [shape: bf16[128,512], index: 3, kind: input, shape index: {}]
  %s4 = inlined_call_operand.vmem [shape: bf16[9,128,128], index: 4, kind: input, shape index: {}]
  %s5 = inlined_call_operand.vmem [shape: bf16[9,128,128], index: 5, kind: input, shape index: {}]
  %s6 = inlined_call_operand.vmem [shape: f32[1,128], index: 6, kind: input, shape index: {}]
  %s7 = inlined_call_operand.vmem [shape: bf16[2,128], index: 7, kind: input, shape index: {}]
  %s8 = inlined_call_operand.vmem [shape: bf16[128,128], index: 8, kind: input, shape index: {}]
  %s9 = inlined_call_operand.vmem [shape: f32[1,128], index: 9, kind: input, shape index: {}]
  %s10 = inlined_call_operand.hbm [shape: f32[2,128], index: 10, kind: output, shape index: {0}]
  %s11 = inlined_call_operand.vmem [shape: f32[2,128], index: 11, kind: output, shape index: {1}]
  %12 = xla_tuple %s10, %s11
  %s13 = sld [smem:[#allocation0]]
  $region58: #{forward.1} parent=0
    _
  %s15 = ssub.s32 1, %s13
  %s16 = scalar_select 0, %s15, %s13
  $region1: #{forward.1} parent=0
    #allocation2 [shape = 'u8[1024]{0}', space=vmem, size = 0x400, scoped, tag = 'output window, operand 0, single buffered']
    #allocation3 [shape = 's32[1]{0}', space=sflag, size = 0x4, scoped, tag = 'scoped memory for forward.1']
    %17 = vsyncpa [#allocation3], 0
    // Predicated region
    $region2: #{forward.1} parent=1 // pred_check
      _
    $region3: #{forward.1} parent=1 // pred_check_branch
      %19 = sbr.rel (0) target = $region5
    $region4: #{forward.1} parent=1 // pred_region
      _
    $region5: #{forward.1} parent=1 // pred_fallthru
      _
    // Predicated region
    $region6: #{forward.1} parent=1 // pred_check
      _
    $region7: #{forward.1} parent=1 // pred_check_branch
      %21 = sbr.rel (0) target = $region9
    $region8: #{forward.1} parent=1 // pred_region
      _
    $region9: #{forward.1} parent=1 // pred_fallthru
      _
    // Predicated region
    $region10: #{forward.1} parent=1 // pred_check
      _
    $region11: #{forward.1} parent=1 // pred_check_branch
      %23 = sbr.rel (0) target = $region13
    $region12: #{forward.1} parent=1 // pred_region
      _
    $region13: #{forward.1} parent=1 // pred_fallthru
      _
    // Predicated region
    $region14: #{forward.1} parent=1 // pred_check
      _
    $region15: #{forward.1} parent=1 // pred_check_branch
      %25 = sbr.rel (0) target = $region17
    $region16: #{forward.1} parent=1 // pred_region
      _
    $region17: #{forward.1} parent=1 // pred_fallthru
      _
    // Predicated region
    $region18: #{forward.1} parent=1 // pred_check
      _
    $region19: #{forward.1} parent=1 // pred_check_branch
      %27 = sbr.rel (0) target = $region21
    $region20: #{forward.1} parent=1 // pred_region
      _
    $region21: #{forward.1} parent=1 // pred_fallthru
      _
    // Predicated region
    $region22: #{forward.1} parent=1 // pred_check
      _
    $region23: #{forward.1} parent=1 // pred_check_branch
      %29 = sbr.rel (0) target = $region25
    $region24: #{forward.1} parent=1 // pred_region
      _
    $region25: #{forward.1} parent=1 // pred_fallthru
      _
    // Predicated region
    $region26: #{forward.1} parent=1 // pred_check
      _
    $region27: #{forward.1} parent=1 // pred_check_branch
      %31 = sbr.rel (0) target = $region29
    $region28: #{forward.1} parent=1 // pred_region
      _
    $region29: #{forward.1} parent=1 // pred_fallthru
      _
    // Predicated region
    $region30: #{forward.1} parent=1 // pred_check
      _
    $region31: #{forward.1} parent=1 // pred_check_branch
      %33 = sbr.rel (0) target = $region33
    $region32: #{forward.1} parent=1 // pred_region
      _
    $region33: #{forward.1} parent=1 // pred_fallthru
      _
    // Predicated region
    $region34: #{forward.1} parent=1 // pred_check
      _
    $region35: #{forward.1} parent=1 // pred_check_branch
      %35 = sbr.rel (0) target = $region37
    $region36: #{forward.1} parent=1 // pred_region
      _
    $region37: #{forward.1} parent=1 // pred_fallthru
      _
    // Predicated region
    $region38: #{forward.1} parent=1 // pred_check
      _
    $region39: #{forward.1} parent=1 // pred_check_branch
      %37 = sbr.rel (0) target = $region41
    $region40: #{forward.1} parent=1 // pred_region
      _
    $region41: #{forward.1} parent=1 // pred_fallthru
      _
    %v39 = vld [vmem:[%s0] sm:$0xf]
    %v40 = vld [vmem:[%s0 + $0x4] sm:$0xf]
    %v41 = vld [vmem:[%s0 + $0x8] sm:$0xf]
    %v42 = vld [vmem:[%s0 + $0xc] sm:$0xf]
    %v43 = vld [vmem:[%s0 + $0x10] sm:$0xf]
    %v44 = vld [vmem:[%s0 + $0x14] sm:$0xf]
    %v45 = vld [vmem:[%s0 + $0x18] sm:$0xf]
    %v46 = vld [vmem:[%s0 + $0x1c] sm:$0xf]
    %v47 = vld [vmem:[%s0 + $0x20] sm:$0xf]
    %v48 = vld [vmem:[%s0 + $0x24] sm:$0xf]
    %v49 = vld [vmem:[%s0 + $0x28] sm:$0xf]
    %v50 = vld [vmem:[%s0 + $0x2c] sm:$0xf]
    %v51 = vld [vmem:[%s0 + $0x30] sm:$0xf]
    %v52 = vld [vmem:[%s0 + $0x34] sm:$0xf]
    %v53 = vld [vmem:[%s0 + $0x38] sm:$0xf]
    %v54 = vld [vmem:[%s0 + $0x3c] sm:$0xf]
    %v55 = vld [vmem:[%s0 + $0x40] sm:$0xf]
    %v56 = vld [vmem:[%s0 + $0x44] sm:$0xf]
    %v57 = vld [vmem:[%s0 + $0x48] sm:$0xf]
    %v58 = vld [vmem:[%s0 + $0x4c] sm:$0xf]
    %v59 = vld [vmem:[%s0 + $0x50] sm:$0xf]
    %v60 = vld [vmem:[%s0 + $0x54] sm:$0xf]
    %v61 = vld [vmem:[%s0 + $0x58] sm:$0xf]
    %v62 = vld [vmem:[%s0 + $0x5c] sm:$0xf]
    %v63 = vld [vmem:[%s0 + $0x60] sm:$0xf]
    %v64 = vld [vmem:[%s0 + $0x64] sm:$0xf]
    %v65 = vld [vmem:[%s0 + $0x68] sm:$0xf]
    %v66 = vld [vmem:[%s0 + $0x6c] sm:$0xf]
    %v67 = vld [vmem:[%s0 + $0x70] sm:$0xf]
    %v68 = vld [vmem:[%s0 + $0x74] sm:$0xf]
    %v69 = vld [vmem:[%s0 + $0x78] sm:$0xf]
    %v70 = vld [vmem:[%s0 + $0x7c] sm:$0xf]
    %v71 = vld [vmem:[%s0 + $0x80] sm:$0xf]
    %v72 = vld [vmem:[%s0 + $0x84] sm:$0xf]
    %v73 = vld [vmem:[%s0 + $0x88] sm:$0xf]
    %v74 = vld [vmem:[%s0 + $0x8c] sm:$0xf]
    %v75 = vld [vmem:[%s0 + $0x90] sm:$0xf]
    %v76 = vld [vmem:[%s0 + $0x94] sm:$0xf]
    %v77 = vld [vmem:[%s0 + $0x98] sm:$0xf]
    %v78 = vld [vmem:[%s0 + $0x9c] sm:$0xf]
    %v79 = vld [vmem:[%s0 + $0xa0] sm:$0xf]
    %v80 = vld [vmem:[%s0 + $0xa4] sm:$0xf]
    %v81 = vld [vmem:[%s0 + $0xa8] sm:$0xf]
    %v82 = vld [vmem:[%s0 + $0xac] sm:$0xf]
    %v83 = vld [vmem:[%s0 + $0xb0] sm:$0xf]
    %v84 = vld [vmem:[%s0 + $0xb4] sm:$0xf]
    %v85 = vld [vmem:[%s0 + $0xb8] sm:$0xf]
    %v86 = vld [vmem:[%s0 + $0xbc] sm:$0xf]
    %v87 = vld [vmem:[%s0 + $0xc0] sm:$0xf]
    %v88 = vld [vmem:[%s0 + $0xc4] sm:$0xf]
    %v89 = vld [vmem:[%s0 + $0xc8] sm:$0xf]
    %v90 = vld [vmem:[%s0 + $0xcc] sm:$0xf]
    %v91 = vld [vmem:[%s0 + $0xd0] sm:$0xf]
    %v92 = vld [vmem:[%s0 + $0xd4] sm:$0xf]
    %v93 = vld [vmem:[%s0 + $0xd8] sm:$0xf]
    %v94 = vld [vmem:[%s0 + $0xdc] sm:$0xf]
    %v95 = vld [vmem:[%s0 + $0xe0] sm:$0xf]
    %v96 = vld [vmem:[%s0 + $0xe4] sm:$0xf]
    %v97 = vld [vmem:[%s0 + $0xe8] sm:$0xf]
    %v98 = vld [vmem:[%s0 + $0xec] sm:$0xf]
    %v99 = vld [vmem:[%s0 + $0xf0] sm:$0xf]
    %v100 = vld [vmem:[%s0 + $0xf4] sm:$0xf]
    %v101 = vld [vmem:[%s0 + $0xf8] sm:$0xf]
    %v102 = vld [vmem:[%s0 + $0xfc] sm:$0xf]
    %v103 = vld [vmem:[%s1] sm:$0xf]
    %v104 = vld [vmem:[%s1 + $0x4] sm:$0xf]
    %v105 = vld [vmem:[%s1 + $0x8] sm:$0xf]
    %v106 = vld [vmem:[%s1 + $0xc] sm:$0xf]
    %v107 = vld [vmem:[%s2] sm:$0x1]
    %v109 = vperm.slane %v107, 0
    %v175 = vunpack.c.l.b16 %v39
    %v176 = vunpack.c.l.b16 %v40
    %v177 = vunpack.c.l.b16 %v41
    %v178 = vunpack.c.l.b16 %v42
    %v179 = vunpack.c.l.b16 %v43
    %v180 = vunpack.c.l.b16 %v44
    %v181 = vunpack.c.l.b16 %v45
    %v182 = vunpack.c.l.b16 %v46
    %v183 = vunpack.c.l.b16 %v47
    %v184 = vunpack.c.l.b16 %v48
    %v185 = vunpack.c.l.b16 %v49
    %v186 = vunpack.c.l.b16 %v50
    %v187 = vunpack.c.l.b16 %v51
    %v188 = vunpack.c.l.b16 %v52
    %v189 = vunpack.c.l.b16 %v53
    %v190 = vunpack.c.l.b16 %v54
    %v191 = vunpack.c.l.b16 %v55
    %v192 = vunpack.c.l.b16 %v56
    %v193 = vunpack.c.l.b16 %v57
    %v194 = vunpack.c.l.b16 %v58
    %v195 = vunpack.c.l.b16 %v59
    %v196 = vunpack.c.l.b16 %v60
    %v197 = vunpack.c.l.b16 %v61
    %v198 = vunpack.c.l.b16 %v62
    %v199 = vunpack.c.l.b16 %v63
    %v200 = vunpack.c.l.b16 %v64
    %v201 = vunpack.c.l.b16 %v65
    %v202 = vunpack.c.l.b16 %v66
    %v203 = vunpack.c.l.b16 %v67
    %v204 = vunpack.c.l.b16 %v68
    %v205 = vunpack.c.l.b16 %v69
    %v206 = vunpack.c.l.b16 %v70
    %v207 = vunpack.c.l.b16 %v71
    %v208 = vunpack.c.l.b16 %v72
    %v209 = vunpack.c.l.b16 %v73
    %v210 = vunpack.c.l.b16 %v74
    %v211 = vunpack.c.l.b16 %v75
    %v212 = vunpack.c.l.b16 %v76
    %v213 = vunpack.c.l.b16 %v77
    %v214 = vunpack.c.l.b16 %v78
    %v215 = vunpack.c.l.b16 %v79
    %v216 = vunpack.c.l.b16 %v80
    %v217 = vunpack.c.l.b16 %v81
    %v218 = vunpack.c.l.b16 %v82
    %v219 = vunpack.c.l.b16 %v83
    %v220 = vunpack.c.l.b16 %v84
    %v221 = vunpack.c.l.b16 %v85
    %v222 = vunpack.c.l.b16 %v86
    %v223 = vunpack.c.l.b16 %v87
    %v224 = vunpack.c.l.b16 %v88
    %v225 = vunpack.c.l.b16 %v89
    %v226 = vunpack.c.l.b16 %v90
    %v227 = vunpack.c.l.b16 %v91
    %v228 = vunpack.c.l.b16 %v92
    %v229 = vunpack.c.l.b16 %v93
    %v230 = vunpack.c.l.b16 %v94
    %v231 = vunpack.c.l.b16 %v95
    %v232 = vunpack.c.l.b16 %v96
    %v233 = vunpack.c.l.b16 %v97
    %v234 = vunpack.c.l.b16 %v98
    %v235 = vunpack.c.l.b16 %v99
    %v236 = vunpack.c.l.b16 %v100
    %v237 = vunpack.c.l.b16 %v101
    %v238 = vunpack.c.l.b16 %v102
    %v239 = vpack.c.b16 %v176, %v175
    %v240 = vpack.c.b16 %v178, %v177
    %v241 = vpack.c.b16 %v180, %v179
    %v242 = vpack.c.b16 %v182, %v181
    %v243 = vpack.c.b16 %v184, %v183
    %v244 = vpack.c.b16 %v186, %v185
    %v245 = vpack.c.b16 %v188, %v187
    %v246 = vpack.c.b16 %v190, %v189
    %v247 = vpack.c.b16 %v192, %v191
    %v248 = vpack.c.b16 %v194, %v193
    %v249 = vpack.c.b16 %v196, %v195
    %v250 = vpack.c.b16 %v198, %v197
    %v251 = vpack.c.b16 %v200, %v199
    %v252 = vpack.c.b16 %v202, %v201
    %v253 = vpack.c.b16 %v204, %v203
    %v254 = vpack.c.b16 %v206, %v205
    %v255 = vpack.c.b16 %v208, %v207
    %v256 = vpack.c.b16 %v210, %v209
    %v257 = vpack.c.b16 %v212, %v211
    %v258 = vpack.c.b16 %v214, %v213
    %v259 = vpack.c.b16 %v216, %v215
    %v260 = vpack.c.b16 %v218, %v217
    %v261 = vpack.c.b16 %v220, %v219
    %v262 = vpack.c.b16 %v222, %v221
    %v263 = vpack.c.b16 %v224, %v223
    %v264 = vpack.c.b16 %v226, %v225
    %v265 = vpack.c.b16 %v228, %v227
    %v266 = vpack.c.b16 %v230, %v229
    %v267 = vpack.c.b16 %v232, %v231
    %v268 = vpack.c.b16 %v234, %v233
    %v269 = vpack.c.b16 %v236, %v235
    %v270 = vpack.c.b16 %v238, %v237
    %v275 = vunpack.c.l.b16 %v103
    %v276 = vunpack.c.l.b16 %v104
    %v277 = vunpack.c.l.b16 %v105
    %v278 = vunpack.c.l.b16 %v106
    %v279 = vpack.c.b16 %v276, %v275
    %v280 = vpack.c.b16 %v278, %v277
    %vm283 = vcmask 261120
    %v285 = vsel %vm283, %v239, 0
    %v288 = vsel %vm283, %v240, 0
    %v291 = vsel %vm283, %v241, 0
    %v294 = vsel %vm283, %v242, 0
    %v297 = vsel %vm283, %v243, 0
    %v300 = vsel %vm283, %v244, 0
    %v303 = vsel %vm283, %v245, 0
    %v306 = vsel %vm283, %v246, 0
    %v309 = vsel %vm283, %v247, 0
    %v312 = vsel %vm283, %v248, 0
    %v315 = vsel %vm283, %v249, 0
    %v318 = vsel %vm283, %v250, 0
    %v321 = vsel %vm283, %v251, 0
    %v324 = vsel %vm283, %v252, 0
    %v327 = vsel %vm283, %v253, 0
    %v330 = vsel %vm283, %v254, 0
    %v333 = vsel %vm283, %v255, 0
    %v336 = vsel %vm283, %v256, 0
    %v339 = vsel %vm283, %v257, 0
    %v342 = vsel %vm283, %v258, 0
    %v345 = vsel %vm283, %v259, 0
    %v348 = vsel %vm283, %v260, 0
    %v351 = vsel %vm283, %v261, 0
    %v354 = vsel %vm283, %v262, 0
    %v357 = vsel %vm283, %v263, 0
    %v360 = vsel %vm283, %v264, 0
    %v363 = vsel %vm283, %v265, 0
    %v366 = vsel %vm283, %v266, 0
    %v369 = vsel %vm283, %v267, 0
    %v372 = vsel %vm283, %v268, 0
    %v375 = vsel %vm283, %v269, 0
    %v378 = vsel %vm283, %v270, 0
    %380 = vmatpush.bf16.msra.mxu0 0
    %381 = vmatpush.bf16.msra.mxu0 0
    %382 = vmatpush.bf16.msra.mxu0 0
    %383 = vmatpush.bf16.msra.mxu0 0
    %384 = vmatpush.bf16.msra.mxu0 0
    %385 = vmatpush.bf16.msra.mxu0 0
    %386 = vmatpush.bf16.msra.mxu0 %v280
    %387 = vmatpush.bf16.msra.mxu0 %v279
    %388 = vmatmul.bf16.gmra.mxu0 %v285
    %v389 = vpop.f32.mrf.mxu0
    %v390 = vadd.f32 %v109, %v389
    %v391 = vpop.f32.mrf.mxu0
    %v392 = vadd.f32 %v109, %v391
    %393 = vmatmul.bf16.gmra.mxu0 %v288
    %v394 = vpop.f32.mrf.mxu0
    %v395 = vadd.f32 %v109, %v394
    %v396 = vpop.f32.mrf.mxu0
    %v397 = vadd.f32 %v109, %v396
    %398 = vmatmul.bf16.gmra.mxu0 %v291
    %v399 = vpop.f32.mrf.mxu0
    %v400 = vadd.f32 %v109, %v399
    %v401 = vpop.f32.mrf.mxu0
    %v402 = vadd.f32 %v109, %v401
    %403 = vmatmul.bf16.gmra.mxu0 %v294
    %v404 = vpop.f32.mrf.mxu0
    %v405 = vadd.f32 %v109, %v404
    %v406 = vpop.f32.mrf.mxu0
    %v407 = vadd.f32 %v109, %v406
    %408 = vmatmul.bf16.gmra.mxu0 %v297
    %v409 = vpop.f32.mrf.mxu0
    %v410 = vadd.f32 %v109, %v409
    %v411 = vpop.f32.mrf.mxu0
    %v412 = vadd.f32 %v109, %v411
    %413 = vmatmul.bf16.gmra.mxu0 %v300
    %v414 = vpop.f32.mrf.mxu0
    %v415 = vadd.f32 %v109, %v414
    %v416 = vpop.f32.mrf.mxu0
    %v417 = vadd.f32 %v109, %v416
    %418 = vmatmul.bf16.gmra.mxu0 %v303
    %v419 = vpop.f32.mrf.mxu0
    %v420 = vadd.f32 %v109, %v419
    %v421 = vpop.f32.mrf.mxu0
    %v422 = vadd.f32 %v109, %v421
    %423 = vmatmul.bf16.gmra.mxu0 %v306
    %v424 = vpop.f32.mrf.mxu0
    %v425 = vadd.f32 %v109, %v424
    %v426 = vpop.f32.mrf.mxu0
    %v427 = vadd.f32 %v109, %v426
    %428 = vmatmul.bf16.gmra.mxu0 %v309
    %v429 = vpop.f32.mrf.mxu0
    %v430 = vadd.f32 %v109, %v429
    %v431 = vpop.f32.mrf.mxu0
    %v432 = vadd.f32 %v109, %v431
    %433 = vmatmul.bf16.gmra.mxu0 %v312
    %v434 = vpop.f32.mrf.mxu0
    %v435 = vadd.f32 %v109, %v434
    %v436 = vpop.f32.mrf.mxu0
    %v437 = vadd.f32 %v109, %v436
    %438 = vmatmul.bf16.gmra.mxu0 %v315
    %v439 = vpop.f32.mrf.mxu0
    %v440 = vadd.f32 %v109, %v439
    %v441 = vpop.f32.mrf.mxu0
    %v442 = vadd.f32 %v109, %v441
    %443 = vmatmul.bf16.gmra.mxu0 %v318
    %v444 = vpop.f32.mrf.mxu0
    %v445 = vadd.f32 %v109, %v444
    %v446 = vpop.f32.mrf.mxu0
    %v447 = vadd.f32 %v109, %v446
    %448 = vmatmul.bf16.gmra.mxu0 %v321
    %v449 = vpop.f32.mrf.mxu0
    %v450 = vadd.f32 %v109, %v449
    %v451 = vpop.f32.mrf.mxu0
    %v452 = vadd.f32 %v109, %v451
    %453 = vmatmul.bf16.gmra.mxu0 %v324
    %v454 = vpop.f32.mrf.mxu0
    %v455 = vadd.f32 %v109, %v454
    %v456 = vpop.f32.mrf.mxu0
    %v457 = vadd.f32 %v109, %v456
    %458 = vmatmul.bf16.gmra.mxu0 %v327
    %v459 = vpop.f32.mrf.mxu0
    %v460 = vadd.f32 %v109, %v459
    %v461 = vpop.f32.mrf.mxu0
    %v462 = vadd.f32 %v109, %v461
    %463 = vmatmul.bf16.gmra.mxu0 %v330
    %v464 = vpop.f32.mrf.mxu0
    %v465 = vadd.f32 %v109, %v464
    %v466 = vpop.f32.mrf.mxu0
    %v467 = vadd.f32 %v109, %v466
    %468 = vmatmul.bf16.gmra.mxu0 %v333
    %v469 = vpop.f32.mrf.mxu0
    %v470 = vadd.f32 %v109, %v469
    %v471 = vpop.f32.mrf.mxu0
    %v472 = vadd.f32 %v109, %v471
    %473 = vmatmul.bf16.gmra.mxu0 %v336
    %v474 = vpop.f32.mrf.mxu0
    %v475 = vadd.f32 %v109, %v474
    %v476 = vpop.f32.mrf.mxu0
    %v477 = vadd.f32 %v109, %v476
    %478 = vmatmul.bf16.gmra.mxu0 %v339
    %v479 = vpop.f32.mrf.mxu0
    %v480 = vadd.f32 %v109, %v479
    %v481 = vpop.f32.mrf.mxu0
    %v482 = vadd.f32 %v109, %v481
    %483 = vmatmul.bf16.gmra.mxu0 %v342
    %v484 = vpop.f32.mrf.mxu0
    %v485 = vadd.f32 %v109, %v484
    %v486 = vpop.f32.mrf.mxu0
    %v487 = vadd.f32 %v109, %v486
    %488 = vmatmul.bf16.gmra.mxu0 %v345
    %v489 = vpop.f32.mrf.mxu0
    %v490 = vadd.f32 %v109, %v489
    %v491 = vpop.f32.mrf.mxu0
    %v492 = vadd.f32 %v109, %v491
    %493 = vmatmul.bf16.gmra.mxu0 %v348
    %v494 = vpop.f32.mrf.mxu0
    %v495 = vadd.f32 %v109, %v494
    %v496 = vpop.f32.mrf.mxu0
    %v497 = vadd.f32 %v109, %v496
    %498 = vmatmul.bf16.gmra.mxu0 %v351
    %v499 = vpop.f32.mrf.mxu0
    %v500 = vadd.f32 %v109, %v499
    %v501 = vpop.f32.mrf.mxu0
    %v502 = vadd.f32 %v109, %v501
    %503 = vmatmul.bf16.gmra.mxu0 %v354
    %v504 = vpop.f32.mrf.mxu0
    %v505 = vadd.f32 %v109, %v504
    %v506 = vpop.f32.mrf.mxu0
    %v507 = vadd.f32 %v109, %v506
    %508 = vmatmul.bf16.gmra.mxu0 %v357
    %v509 = vpop.f32.mrf.mxu0
    %v510 = vadd.f32 %v109, %v509
    %v511 = vpop.f32.mrf.mxu0
    %v512 = vadd.f32 %v109, %v511
    %513 = vmatmul.bf16.gmra.mxu0 %v360
    %v514 = vpop.f32.mrf.mxu0
    %v515 = vadd.f32 %v109, %v514
    %v516 = vpop.f32.mrf.mxu0
    %v517 = vadd.f32 %v109, %v516
    %518 = vmatmul.bf16.gmra.mxu0 %v363
    %v519 = vpop.f32.mrf.mxu0
    %v520 = vadd.f32 %v109, %v519
    %v521 = vpop.f32.mrf.mxu0
    %v522 = vadd.f32 %v109, %v521
    %523 = vmatmul.bf16.gmra.mxu0 %v366
    %v524 = vpop.f32.mrf.mxu0
    %v525 = vadd.f32 %v109, %v524
    %v526 = vpop.f32.mrf.mxu0
    %v527 = vadd.f32 %v109, %v526
    %528 = vmatmul.bf16.gmra.mxu0 %v369
    %v529 = vpop.f32.mrf.mxu0
    %v530 = vadd.f32 %v109, %v529
    %v531 = vpop.f32.mrf.mxu0
    %v532 = vadd.f32 %v109, %v531
    %533 = vmatmul.bf16.gmra.mxu0 %v372
    %v534 = vpop.f32.mrf.mxu0
    %v535 = vadd.f32 %v109, %v534
    %v536 = vpop.f32.mrf.mxu0
    %v537 = vadd.f32 %v109, %v536
    %538 = vmatmul.bf16.gmra.mxu0 %v375
    %v539 = vpop.f32.mrf.mxu0
    %v540 = vadd.f32 %v109, %v539
    %v541 = vpop.f32.mrf.mxu0
    %v542 = vadd.f32 %v109, %v541
    %543 = vmatmul.bf16.gmra.mxu0 %v378
    %v544 = vpop.f32.mrf.mxu0
    %v545 = vadd.f32 %v109, %v544
    %v546 = vpop.f32.mrf.mxu0
    %v547 = vadd.f32 %v109, %v546
    %548 = vdwg.mxu0
    %v549 = vmax.f32 %v390, 0.0
    %v550 = vmax.f32 %v392, 0.0
    %v551 = vmax.f32 %v395, 0.0
    %v552 = vmax.f32 %v397, 0.0
    %v553 = vmax.f32 %v400, 0.0
    %v554 = vmax.f32 %v402, 0.0
    %v555 = vmax.f32 %v405, 0.0
    %v556 = vmax.f32 %v407, 0.0
    %v557 = vmax.f32 %v410, 0.0
    %v558 = vmax.f32 %v412, 0.0
    %v559 = vmax.f32 %v415, 0.0
    %v560 = vmax.f32 %v417, 0.0
    %v561 = vmax.f32 %v420, 0.0
    %v562 = vmax.f32 %v422, 0.0
    %v563 = vmax.f32 %v425, 0.0
    %v564 = vmax.f32 %v427, 0.0
    %v565 = vmax.f32 %v430, 0.0
    %v566 = vmax.f32 %v432, 0.0
    %v567 = vmax.f32 %v435, 0.0
    %v568 = vmax.f32 %v437, 0.0
    %v569 = vmax.f32 %v440, 0.0
    %v570 = vmax.f32 %v442, 0.0
    %v571 = vmax.f32 %v445, 0.0
    %v572 = vmax.f32 %v447, 0.0
    %v573 = vmax.f32 %v450, 0.0
    %v574 = vmax.f32 %v452, 0.0
    %v575 = vmax.f32 %v455, 0.0
    %v576 = vmax.f32 %v457, 0.0
    %v577 = vmax.f32 %v460, 0.0
    %v578 = vmax.f32 %v462, 0.0
    %v579 = vmax.f32 %v465, 0.0
    %v580 = vmax.f32 %v467, 0.0
    %v581 = vmax.f32 %v470, 0.0
    %v582 = vmax.f32 %v472, 0.0
    %v583 = vmax.f32 %v475, 0.0
    %v584 = vmax.f32 %v477, 0.0
    %v585 = vmax.f32 %v480, 0.0
    %v586 = vmax.f32 %v482, 0.0
    %v587 = vmax.f32 %v485, 0.0
    %v588 = vmax.f32 %v487, 0.0
    %v589 = vmax.f32 %v490, 0.0
    %v590 = vmax.f32 %v492, 0.0
    %v591 = vmax.f32 %v495, 0.0
    %v592 = vmax.f32 %v497, 0.0
    %v593 = vmax.f32 %v500, 0.0
    %v594 = vmax.f32 %v502, 0.0
    %v595 = vmax.f32 %v505, 0.0
    %v596 = vmax.f32 %v507, 0.0
    %v597 = vmax.f32 %v510, 0.0
    %v598 = vmax.f32 %v512, 0.0
    %v599 = vmax.f32 %v515, 0.0
    %v600 = vmax.f32 %v517, 0.0
    %v601 = vmax.f32 %v520, 0.0
    %v602 = vmax.f32 %v522, 0.0
    %v603 = vmax.f32 %v525, 0.0
    %v604 = vmax.f32 %v527, 0.0
    %v605 = vmax.f32 %v530, 0.0
    %v606 = vmax.f32 %v532, 0.0
    %v607 = vmax.f32 %v535, 0.0
    %v608 = vmax.f32 %v537, 0.0
    %v609 = vmax.f32 %v540, 0.0
    %v610 = vmax.f32 %v542, 0.0
    %v611 = vmax.f32 %v545, 0.0
    %v612 = vmax.f32 %v547, 0.0
    %v613 = vpack.c.bf16 %v550, %v549
    %v614 = vpack.c.bf16 %v552, %v551
    %v615 = vpack.c.bf16 %v554, %v553
    %v616 = vpack.c.bf16 %v556, %v555
    %v617 = vpack.c.bf16 %v558, %v557
    %v618 = vpack.c.bf16 %v560, %v559
    %v619 = vpack.c.bf16 %v562, %v561
    %v620 = vpack.c.bf16 %v564, %v563
    %v621 = vpack.c.bf16 %v566, %v565
    %v622 = vpack.c.bf16 %v568, %v567
    %v623 = vpack.c.bf16 %v570, %v569
    %v624 = vpack.c.bf16 %v572, %v571
    %v625 = vpack.c.bf16 %v574, %v573
    %v626 = vpack.c.bf16 %v576, %v575
    %v627 = vpack.c.bf16 %v578, %v577
    %v628 = vpack.c.bf16 %v580, %v579
    %v629 = vpack.c.bf16 %v582, %v581
    %v630 = vpack.c.bf16 %v584, %v583
    %v631 = vpack.c.bf16 %v586, %v585
    %v632 = vpack.c.bf16 %v588, %v587
    %v633 = vpack.c.bf16 %v590, %v589
    %v634 = vpack.c.bf16 %v592, %v591
    %v635 = vpack.c.bf16 %v594, %v593
    %v636 = vpack.c.bf16 %v596, %v595
    %v637 = vpack.c.bf16 %v598, %v597
    %v638 = vpack.c.bf16 %v600, %v599
    %v639 = vpack.c.bf16 %v602, %v601
    %v640 = vpack.c.bf16 %v604, %v603
    %v641 = vpack.c.bf16 %v606, %v605
    %v642 = vpack.c.bf16 %v608, %v607
    %v643 = vpack.c.bf16 %v610, %v609
    %v644 = vpack.c.bf16 %v612, %v611
    %v645 = vld [vmem:[%s3] sm:$0xff]
    %v646 = vld [vmem:[%s3 + $0x8] sm:$0xff]
    %v647 = vld [vmem:[%s3 + $0x10] sm:$0xff]
    %v648 = vld [vmem:[%s3 + $0x18] sm:$0xff]
    %v649 = vld [vmem:[%s3 + $0x20] sm:$0xff]
    %v650 = vld [vmem:[%s3 + $0x28] sm:$0xff]
    %v651 = vld [vmem:[%s3 + $0x30] sm:$0xff]
    %v652 = vld [vmem:[%s3 + $0x38] sm:$0xff]
    %v653 = vld [vmem:[%s3 + $0x40] sm:$0xff]
    %v654 = vld [vmem:[%s3 + $0x48] sm:$0xff]
    %v655 = vld [vmem:[%s3 + $0x50] sm:$0xff]
    %v656 = vld [vmem:[%s3 + $0x58] sm:$0xff]
    %v657 = vld [vmem:[%s3 + $0x60] sm:$0xff]
    %v658 = vld [vmem:[%s3 + $0x68] sm:$0xff]
    %v659 = vld [vmem:[%s3 + $0x70] sm:$0xff]
    %v660 = vld [vmem:[%s3 + $0x78] sm:$0xff]
    %v661 = vld [vmem:[%s3 + $0x80] sm:$0xff]
    %v662 = vld [vmem:[%s3 + $0x88] sm:$0xff]
    %v663 = vld [vmem:[%s3 + $0x90] sm:$0xff]
    %v664 = vld [vmem:[%s3 + $0x98] sm:$0xff]
    %v665 = vld [vmem:[%s3 + $0xa0] sm:$0xff]
    %v666 = vld [vmem:[%s3 + $0xa8] sm:$0xff]
    %v667 = vld [vmem:[%s3 + $0xb0] sm:$0xff]
    %v668 = vld [vmem:[%s3 + $0xb8] sm:$0xff]
    %v669 = vld [vmem:[%s3 + $0xc0] sm:$0xff]
    %v670 = vld [vmem:[%s3 + $0xc8] sm:$0xff]
    %v671 = vld [vmem:[%s3 + $0xd0] sm:$0xff]
    %v672 = vld [vmem:[%s3 + $0xd8] sm:$0xff]
    %v673 = vld [vmem:[%s3 + $0xe0] sm:$0xff]
    %v674 = vld [vmem:[%s3 + $0xe8] sm:$0xff]
    %v675 = vld [vmem:[%s3 + $0xf0] sm:$0xff]
    %v676 = vld [vmem:[%s3 + $0xf8] sm:$0xff]
    %v709 = vunpack.c.l.b16 %v645
    %v710 = vunpack.c.h.b16 %v645
    %v711 = vunpack.c.l.b16 %v646
    %v712 = vunpack.c.h.b16 %v646
    %v713 = vunpack.c.l.b16 %v647
    %v714 = vunpack.c.h.b16 %v647
    %v715 = vunpack.c.l.b16 %v648
    %v716 = vunpack.c.h.b16 %v648
    %v717 = vunpack.c.l.b16 %v649
    %v718 = vunpack.c.h.b16 %v649
    %v719 = vunpack.c.l.b16 %v650
    %v720 = vunpack.c.h.b16 %v650
    %v721 = vunpack.c.l.b16 %v651
    %v722 = vunpack.c.h.b16 %v651
    %v723 = vunpack.c.l.b16 %v652
    %v724 = vunpack.c.h.b16 %v652
    %v725 = vunpack.c.l.b16 %v653
    %v726 = vunpack.c.h.b16 %v653
    %v727 = vunpack.c.l.b16 %v654
    %v728 = vunpack.c.h.b16 %v654
    %v729 = vunpack.c.l.b16 %v655
    %v730 = vunpack.c.h.b16 %v655
    %v731 = vunpack.c.l.b16 %v656
    %v732 = vunpack.c.h.b16 %v656
    %v733 = vunpack.c.l.b16 %v657
    %v734 = vunpack.c.h.b16 %v657
    %v735 = vunpack.c.l.b16 %v658
    %v736 = vunpack.c.h.b16 %v658
    %v737 = vunpack.c.l.b16 %v659
    %v738 = vunpack.c.h.b16 %v659
    %v739 = vunpack.c.l.b16 %v660
    %v740 = vunpack.c.h.b16 %v660
    %v741 = vunpack.c.l.b16 %v661
    %v742 = vunpack.c.h.b16 %v661
    %v743 = vunpack.c.l.b16 %v662
    %v744 = vunpack.c.h.b16 %v662
    %v745 = vunpack.c.l.b16 %v663
    %v746 = vunpack.c.h.b16 %v663
    %v747 = vunpack.c.l.b16 %v664
    %v748 = vunpack.c.h.b16 %v664
    %v749 = vunpack.c.l.b16 %v665
    %v750 = vunpack.c.h.b16 %v665
    %v751 = vunpack.c.l.b16 %v666
    %v752 = vunpack.c.h.b16 %v666
    %v753 = vunpack.c.l.b16 %v667
    %v754 = vunpack.c.h.b16 %v667
    %v755 = vunpack.c.l.b16 %v668
    %v756 = vunpack.c.h.b16 %v668
    %v757 = vunpack.c.l.b16 %v669
    %v758 = vunpack.c.h.b16 %v669
    %v759 = vunpack.c.l.b16 %v670
    %v760 = vunpack.c.h.b16 %v670
    %v761 = vunpack.c.l.b16 %v671
    %v762 = vunpack.c.h.b16 %v671
    %v763 = vunpack.c.l.b16 %v672
    %v764 = vunpack.c.h.b16 %v672
    %v765 = vunpack.c.l.b16 %v673
    %v766 = vunpack.c.h.b16 %v673
    %v767 = vunpack.c.l.b16 %v674
    %v768 = vunpack.c.h.b16 %v674
    %v769 = vunpack.c.l.b16 %v675
    %v770 = vunpack.c.h.b16 %v675
    %v771 = vunpack.c.l.b16 %v676
    %v772 = vunpack.c.h.b16 %v676
    %v773 = vpack.c.b16 %v713, %v709
    %v774 = vpack.c.b16 %v714, %v710
    %v775 = vpack.c.b16 %v715, %v711
    %v776 = vpack.c.b16 %v716, %v712
    %v777 = vpack.c.b16 %v721, %v717
    %v778 = vpack.c.b16 %v722, %v718
    %v779 = vpack.c.b16 %v723, %v719
    %v780 = vpack.c.b16 %v724, %v720
    %v781 = vpack.c.b16 %v729, %v725
    %v782 = vpack.c.b16 %v730, %v726
    %v783 = vpack.c.b16 %v731, %v727
    %v784 = vpack.c.b16 %v732, %v728
    %v785 = vpack.c.b16 %v737, %v733
    %v786 = vpack.c.b16 %v738, %v734
    %v787 = vpack.c.b16 %v739, %v735
    %v788 = vpack.c.b16 %v740, %v736
    %v789 = vpack.c.b16 %v745, %v741
    %v790 = vpack.c.b16 %v746, %v742
    %v791 = vpack.c.b16 %v747, %v743
    %v792 = vpack.c.b16 %v748, %v744
    %v793 = vpack.c.b16 %v753, %v749
    %v794 = vpack.c.b16 %v754, %v750
    %v795 = vpack.c.b16 %v755, %v751
    %v796 = vpack.c.b16 %v756, %v752
    %v797 = vpack.c.b16 %v761, %v757
    %v798 = vpack.c.b16 %v762, %v758
    %v799 = vpack.c.b16 %v763, %v759
    %v800 = vpack.c.b16 %v764, %v760
    %v801 = vpack.c.b16 %v769, %v765
    %v802 = vpack.c.b16 %v770, %v766
    %v803 = vpack.c.b16 %v771, %v767
    %v804 = vpack.c.b16 %v772, %v768
    %837 = vmatpush.bf16.msra.mxu0 %v620
    %838 = vmatpush.bf16.msra.mxu0 %v619
    %839 = vmatpush.bf16.msra.mxu0 %v618
    %840 = vmatpush.bf16.msra.mxu0 %v617
    %841 = vmatpush.bf16.msra.mxu0 %v616
    %842 = vmatpush.bf16.msra.mxu0 %v615
    %843 = vmatpush.bf16.msra.mxu0 %v614
    %844 = vmatpush.bf16.msra.mxu0 %v613
    %845 = vmatmul.bf16.gmra.mxu0 %v773
    %v846 = vpop.f32.mrf.mxu0
    %v847 = vadd.f32 0.0, %v846
    %v848 = vpop.f32.mrf.mxu0
    %v849 = vadd.f32 0.0, %v848
    %850 = vmatmul.bf16.gmra.mxu0 %v777
    %v851 = vpop.f32.mrf.mxu0
    %v852 = vadd.f32 0.0, %v851
    %v853 = vpop.f32.mrf.mxu0
    %v854 = vadd.f32 0.0, %v853
    %855 = vmatmul.bf16.gmra.mxu0 %v781
    %v856 = vpop.f32.mrf.mxu0
    %v857 = vadd.f32 0.0, %v856
    %v858 = vpop.f32.mrf.mxu0
    %v859 = vadd.f32 0.0, %v858
    %860 = vmatmul.bf16.gmra.mxu0 %v785
    %v861 = vpop.f32.mrf.mxu0
    %v862 = vadd.f32 0.0, %v861
    %v863 = vpop.f32.mrf.mxu0
    %v864 = vadd.f32 0.0, %v863
    %865 = vmatmul.bf16.gmra.mxu0 %v789
    %v866 = vpop.f32.mrf.mxu0
    %v867 = vadd.f32 0.0, %v866
    %v868 = vpop.f32.mrf.mxu0
    %v869 = vadd.f32 0.0, %v868
    %870 = vmatmul.bf16.gmra.mxu0 %v793
    %v871 = vpop.f32.mrf.mxu0
    %v872 = vadd.f32 0.0, %v871
    %v873 = vpop.f32.mrf.mxu0
    %v874 = vadd.f32 0.0, %v873
    %875 = vmatmul.bf16.gmra.mxu0 %v797
    %v876 = vpop.f32.mrf.mxu0
    %v877 = vadd.f32 0.0, %v876
    %v878 = vpop.f32.mrf.mxu0
    %v879 = vadd.f32 0.0, %v878
    %880 = vmatmul.bf16.gmra.mxu0 %v801
    %v881 = vpop.f32.mrf.mxu0
    %v882 = vadd.f32 0.0, %v881
    %v883 = vpop.f32.mrf.mxu0
    %v884 = vadd.f32 0.0, %v883
    %885 = vdwg.mxu0
    %886 = vmatpush.bf16.msra.mxu0 %v628
    %887 = vmatpush.bf16.msra.mxu0 %v627
    %888 = vmatpush.bf16.msra.mxu0 %v626
    %889 = vmatpush.bf16.msra.mxu0 %v625
    %890 = vmatpush.bf16.msra.mxu0 %v624
    %891 = vmatpush.bf16.msra.mxu0 %v623
    %892 = vmatpush.bf16.msra.mxu0 %v622
    %893 = vmatpush.bf16.msra.mxu0 %v621
    %894 = vmatmul.bf16.gmra.mxu0 %v774
    %v895 = vpop.f32.mrf.mxu0
    %v896 = vadd.f32 %v847, %v895
    %v897 = vpop.f32.mrf.mxu0
    %v898 = vadd.f32 %v849, %v897
    %899 = vmatmul.bf16.gmra.mxu0 %v778
    %v900 = vpop.f32.mrf.mxu0
    %v901 = vadd.f32 %v852, %v900
    %v902 = vpop.f32.mrf.mxu0
    %v903 = vadd.f32 %v854, %v902
    %904 = vmatmul.bf16.gmra.mxu0 %v782
    %v905 = vpop.f32.mrf.mxu0
    %v906 = vadd.f32 %v857, %v905
    %v907 = vpop.f32.mrf.mxu0
    %v908 = vadd.f32 %v859, %v907
    %909 = vmatmul.bf16.gmra.mxu0 %v786
    %v910 = vpop.f32.mrf.mxu0
    %v911 = vadd.f32 %v862, %v910
    %v912 = vpop.f32.mrf.mxu0
    %v913 = vadd.f32 %v864, %v912
    %914 = vmatmul.bf16.gmra.mxu0 %v790
    %v915 = vpop.f32.mrf.mxu0
    %v916 = vadd.f32 %v867, %v915
    %v917 = vpop.f32.mrf.mxu0
    %v918 = vadd.f32 %v869, %v917
    %919 = vmatmul.bf16.gmra.mxu0 %v794
    %v920 = vpop.f32.mrf.mxu0
    %v921 = vadd.f32 %v872, %v920
    %v922 = vpop.f32.mrf.mxu0
    %v923 = vadd.f32 %v874, %v922
    %924 = vmatmul.bf16.gmra.mxu0 %v798
    %v925 = vpop.f32.mrf.mxu0
    %v926 = vadd.f32 %v877, %v925
    %v927 = vpop.f32.mrf.mxu0
    %v928 = vadd.f32 %v879, %v927
    %929 = vmatmul.bf16.gmra.mxu0 %v802
    %v930 = vpop.f32.mrf.mxu0
    %v931 = vadd.f32 %v882, %v930
    %v932 = vpop.f32.mrf.mxu0
    %v933 = vadd.f32 %v884, %v932
    %934 = vdwg.mxu0
    %935 = vmatpush.bf16.msra.mxu0 %v636
    %936 = vmatpush.bf16.msra.mxu0 %v635
    %937 = vmatpush.bf16.msra.mxu0 %v634
    %938 = vmatpush.bf16.msra.mxu0 %v633
    %939 = vmatpush.bf16.msra.mxu0 %v632
    %940 = vmatpush.bf16.msra.mxu0 %v631
    %941 = vmatpush.bf16.msra.mxu0 %v630
    %942 = vmatpush.bf16.msra.mxu0 %v629
    %943 = vmatmul.bf16.gmra.mxu0 %v775
    %v944 = vpop.f32.mrf.mxu0
    %v945 = vadd.f32 %v896, %v944
    %v946 = vpop.f32.mrf.mxu0
    %v947 = vadd.f32 %v898, %v946
    %948 = vmatmul.bf16.gmra.mxu0 %v779
    %v949 = vpop.f32.mrf.mxu0
    %v950 = vadd.f32 %v901, %v949
    %v951 = vpop.f32.mrf.mxu0
    %v952 = vadd.f32 %v903, %v951
    %953 = vmatmul.bf16.gmra.mxu0 %v783
    %v954 = vpop.f32.mrf.mxu0
    %v955 = vadd.f32 %v906, %v954
    %v956 = vpop.f32.mrf.mxu0
    %v957 = vadd.f32 %v908, %v956
    %958 = vmatmul.bf16.gmra.mxu0 %v787
    %v959 = vpop.f32.mrf.mxu0
    %v960 = vadd.f32 %v911, %v959
    %v961 = vpop.f32.mrf.mxu0
    %v962 = vadd.f32 %v913, %v961
    %963 = vmatmul.bf16.gmra.mxu0 %v791
    %v964 = vpop.f32.mrf.mxu0
    %v965 = vadd.f32 %v916, %v964
    %v966 = vpop.f32.mrf.mxu0
    %v967 = vadd.f32 %v918, %v966
    %968 = vmatmul.bf16.gmra.mxu0 %v795
    %v969 = vpop.f32.mrf.mxu0
    %v970 = vadd.f32 %v921, %v969
    %v971 = vpop.f32.mrf.mxu0
    %v972 = vadd.f32 %v923, %v971
    %973 = vmatmul.bf16.gmra.mxu0 %v799
    %v974 = vpop.f32.mrf.mxu0
    %v975 = vadd.f32 %v926, %v974
    %v976 = vpop.f32.mrf.mxu0
    %v977 = vadd.f32 %v928, %v976
    %978 = vmatmul.bf16.gmra.mxu0 %v803
    %v979 = vpop.f32.mrf.mxu0
    %v980 = vadd.f32 %v931, %v979
    %v981 = vpop.f32.mrf.mxu0
    %v982 = vadd.f32 %v933, %v981
    %983 = vdwg.mxu0
    %984 = vmatpush.bf16.msra.mxu0 %v644
    %985 = vmatpush.bf16.msra.mxu0 %v643
    %986 = vmatpush.bf16.msra.mxu0 %v642
    %987 = vmatpush.bf16.msra.mxu0 %v641
    %988 = vmatpush.bf16.msra.mxu0 %v640
    %989 = vmatpush.bf16.msra.mxu0 %v639
    %990 = vmatpush.bf16.msra.mxu0 %v638
    %991 = vmatpush.bf16.msra.mxu0 %v637
    %992 = vmatmul.bf16.gmra.mxu0 %v776
    %v993 = vpop.f32.mrf.mxu0
    %v994 = vadd.f32 %v945, %v993
    %v995 = vpop.f32.mrf.mxu0
    %v996 = vadd.f32 %v947, %v995
    %997 = vmatmul.bf16.gmra.mxu0 %v780
    %v998 = vpop.f32.mrf.mxu0
    %v999 = vadd.f32 %v950, %v998
    %v1000 = vpop.f32.mrf.mxu0
    %v1001 = vadd.f32 %v952, %v1000
    %1002 = vmatmul.bf16.gmra.mxu0 %v784
    %v1003 = vpop.f32.mrf.mxu0
    %v1004 = vadd.f32 %v955, %v1003
    %v1005 = vpop.f32.mrf.mxu0
    %v1006 = vadd.f32 %v957, %v1005
    %1007 = vmatmul.bf16.gmra.mxu0 %v788
    %v1008 = vpop.f32.mrf.mxu0
    %v1009 = vadd.f32 %v960, %v1008
    %v1010 = vpop.f32.mrf.mxu0
    %v1011 = vadd.f32 %v962, %v1010
    %1012 = vmatmul.bf16.gmra.mxu0 %v792
    %v1013 = vpop.f32.mrf.mxu0
    %v1014 = vadd.f32 %v965, %v1013
    %v1015 = vpop.f32.mrf.mxu0
    %v1016 = vadd.f32 %v967, %v1015
    %1017 = vmatmul.bf16.gmra.mxu0 %v796
    %v1018 = vpop.f32.mrf.mxu0
    %v1019 = vadd.f32 %v970, %v1018
    %v1020 = vpop.f32.mrf.mxu0
    %v1021 = vadd.f32 %v972, %v1020
    %1022 = vmatmul.bf16.gmra.mxu0 %v800
    %v1023 = vpop.f32.mrf.mxu0
    %v1024 = vadd.f32 %v975, %v1023
    %v1025 = vpop.f32.mrf.mxu0
    %v1026 = vadd.f32 %v977, %v1025
    %1027 = vmatmul.bf16.gmra.mxu0 %v804
    %v1028 = vpop.f32.mrf.mxu0
    %v1029 = vadd.f32 %v980, %v1028
    %v1030 = vpop.f32.mrf.mxu0
    %v1031 = vadd.f32 %v982, %v1030
    %1032 = vdwg.mxu0
    %v1033 = vpack.c.bf16 %v996, %v994
    %v1034 = vpack.c.bf16 %v1001, %v999
    %v1035 = vpack.c.bf16 %v1006, %v1004
    %v1036 = vpack.c.bf16 %v1011, %v1009
    %v1037 = vpack.c.bf16 %v1016, %v1014
    %v1038 = vpack.c.bf16 %v1021, %v1019
    %v1039 = vpack.c.bf16 %v1026, %v1024
    %v1040 = vpack.c.bf16 %v1031, %v1029
    %v1041 = vld [vmem:[%s4] sm:$0xf]
    %v1042 = vld [vmem:[%s4 + $0x4] sm:$0xf]
    %v1043 = vld [vmem:[%s4 + $0x8] sm:$0xf]
    %v1044 = vld [vmem:[%s4 + $0xc] sm:$0xf]
    %v1045 = vld [vmem:[%s4 + $0x10] sm:$0xf]
    %v1046 = vld [vmem:[%s4 + $0x14] sm:$0xf]
    %v1047 = vld [vmem:[%s4 + $0x18] sm:$0xf]
    %v1048 = vld [vmem:[%s4 + $0x1c] sm:$0xf]
    %v1049 = vld [vmem:[%s4 + $0x20] sm:$0xf]
    %v1050 = vld [vmem:[%s4 + $0x24] sm:$0xf]
    %v1051 = vld [vmem:[%s4 + $0x28] sm:$0xf]
    %v1052 = vld [vmem:[%s4 + $0x2c] sm:$0xf]
    %v1053 = vld [vmem:[%s4 + $0x30] sm:$0xf]
    %v1054 = vld [vmem:[%s4 + $0x34] sm:$0xf]
    %v1055 = vld [vmem:[%s4 + $0x38] sm:$0xf]
    %v1056 = vld [vmem:[%s4 + $0x3c] sm:$0xf]
    %v1073 = vunpack.c.l.b16 %v1041
    %v1074 = vunpack.c.l.b16 %v1042
    %v1075 = vunpack.c.l.b16 %v1043
    %v1076 = vunpack.c.l.b16 %v1044
    %v1077 = vunpack.c.l.b16 %v1045
    %v1078 = vunpack.c.l.b16 %v1046
    %v1079 = vunpack.c.l.b16 %v1047
    %v1080 = vunpack.c.l.b16 %v1048
    %v1081 = vunpack.c.l.b16 %v1049
    %v1082 = vunpack.c.l.b16 %v1050
    %v1083 = vunpack.c.l.b16 %v1051
    %v1084 = vunpack.c.l.b16 %v1052
    %v1085 = vunpack.c.l.b16 %v1053
    %v1086 = vunpack.c.l.b16 %v1054
    %v1087 = vunpack.c.l.b16 %v1055
    %v1088 = vunpack.c.l.b16 %v1056
    %v1089 = vpack.c.b16 %v1074, %v1073
    %v1090 = vpack.c.b16 %v1076, %v1075
    %v1091 = vpack.c.b16 %v1078, %v1077
    %v1092 = vpack.c.b16 %v1080, %v1079
    %v1093 = vpack.c.b16 %v1082, %v1081
    %v1094 = vpack.c.b16 %v1084, %v1083
    %v1095 = vpack.c.b16 %v1086, %v1085
    %v1096 = vpack.c.b16 %v1088, %v1087
    %1105 = vmatpush.bf16.msra.mxu0 %v1040
    %1106 = vmatpush.bf16.msra.mxu0 %v1039
    %1107 = vmatpush.bf16.msra.mxu0 %v1038
    %1108 = vmatpush.bf16.msra.mxu0 %v1037
    %1109 = vmatpush.bf16.msra.mxu0 %v1036
    %1110 = vmatpush.bf16.msra.mxu0 %v1035
    %1111 = vmatpush.bf16.msra.mxu0 %v1034
    %1112 = vmatpush.bf16.msra.mxu0 %v1033
    %1113 = vmatmul.bf16.gmra.mxu0 %v1089
    %v1114 = vpop.f32.mrf.mxu0
    %v1115 = vadd.f32 0.0, %v1114
    %v1116 = vpop.f32.mrf.mxu0
    %v1117 = vadd.f32 0.0, %v1116
    %1118 = vmatmul.bf16.gmra.mxu0 %v1090
    %v1119 = vpop.f32.mrf.mxu0
    %v1120 = vadd.f32 0.0, %v1119
    %v1121 = vpop.f32.mrf.mxu0
    %v1122 = vadd.f32 0.0, %v1121
    %1123 = vmatmul.bf16.gmra.mxu0 %v1091
    %v1124 = vpop.f32.mrf.mxu0
    %v1125 = vadd.f32 0.0, %v1124
    %v1126 = vpop.f32.mrf.mxu0
    %v1127 = vadd.f32 0.0, %v1126
    %1128 = vmatmul.bf16.gmra.mxu0 %v1092
    %v1129 = vpop.f32.mrf.mxu0
    %v1130 = vadd.f32 0.0, %v1129
    %v1131 = vpop.f32.mrf.mxu0
    %v1132 = vadd.f32 0.0, %v1131
    %1133 = vmatmul.bf16.gmra.mxu0 %v1093
    %v1134 = vpop.f32.mrf.mxu0
    %v1135 = vadd.f32 0.0, %v1134
    %v1136 = vpop.f32.mrf.mxu0
    %v1137 = vadd.f32 0.0, %v1136
    %1138 = vmatmul.bf16.gmra.mxu0 %v1094
    %v1139 = vpop.f32.mrf.mxu0
    %v1140 = vadd.f32 0.0, %v1139
    %v1141 = vpop.f32.mrf.mxu0
    %v1142 = vadd.f32 0.0, %v1141
    %1143 = vmatmul.bf16.gmra.mxu0 %v1095
    %v1144 = vpop.f32.mrf.mxu0
    %v1145 = vadd.f32 0.0, %v1144
    %v1146 = vpop.f32.mrf.mxu0
    %v1147 = vadd.f32 0.0, %v1146
    %1148 = vmatmul.bf16.gmra.mxu0 %v1096
    %v1149 = vpop.f32.mrf.mxu0
    %v1150 = vadd.f32 0.0, %v1149
    %v1151 = vpop.f32.mrf.mxu0
    %v1152 = vadd.f32 0.0, %v1151
    %1153 = vdwg.mxu0
    %v1154 = vpack.c.bf16 %v1117, %v1115
    %v1155 = vpack.c.bf16 %v1122, %v1120
    %v1156 = vpack.c.bf16 %v1127, %v1125
    %v1157 = vpack.c.bf16 %v1132, %v1130
    %v1158 = vpack.c.bf16 %v1137, %v1135
    %v1159 = vpack.c.bf16 %v1142, %v1140
    %v1160 = vpack.c.bf16 %v1147, %v1145
    %v1161 = vpack.c.bf16 %v1152, %v1150
    %v1162 = vld [vmem:[%s5] sm:$0xf]
    %v1163 = vld [vmem:[%s5 + $0x4] sm:$0xf]
    %v1164 = vld [vmem:[%s5 + $0x8] sm:$0xf]
    %v1165 = vld [vmem:[%s5 + $0xc] sm:$0xf]
    %v1166 = vld [vmem:[%s5 + $0x10] sm:$0xf]
    %v1167 = vld [vmem:[%s5 + $0x14] sm:$0xf]
    %v1168 = vld [vmem:[%s5 + $0x18] sm:$0xf]
    %v1169 = vld [vmem:[%s5 + $0x1c] sm:$0xf]
    %v1170 = vld [vmem:[%s5 + $0x20] sm:$0xf]
    %v1171 = vld [vmem:[%s5 + $0x24] sm:$0xf]
    %v1172 = vld [vmem:[%s5 + $0x28] sm:$0xf]
    %v1173 = vld [vmem:[%s5 + $0x2c] sm:$0xf]
    %v1174 = vld [vmem:[%s5 + $0x30] sm:$0xf]
    %v1175 = vld [vmem:[%s5 + $0x34] sm:$0xf]
    %v1176 = vld [vmem:[%s5 + $0x38] sm:$0xf]
    %v1177 = vld [vmem:[%s5 + $0x3c] sm:$0xf]
    %s1178 = scalar_lea.vmem %s4, 64
    %v1179 = vld [vmem:[%s1178] sm:$0xf]
    %v1180 = vld [vmem:[%s1178 + $0x4] sm:$0xf]
    %v1181 = vld [vmem:[%s1178 + $0x8] sm:$0xf]
    %v1182 = vld [vmem:[%s1178 + $0xc] sm:$0xf]
    %v1183 = vld [vmem:[%s1178 + $0x10] sm:$0xf]
    %v1184 = vld [vmem:[%s1178 + $0x14] sm:$0xf]
    %v1185 = vld [vmem:[%s1178 + $0x18] sm:$0xf]
    %v1186 = vld [vmem:[%s1178 + $0x1c] sm:$0xf]
    %v1187 = vld [vmem:[%s1178 + $0x20] sm:$0xf]
    %v1188 = vld [vmem:[%s1178 + $0x24] sm:$0xf]
    %v1189 = vld [vmem:[%s1178 + $0x28] sm:$0xf]
    %v1190 = vld [vmem:[%s1178 + $0x2c] sm:$0xf]
    %v1191 = vld [vmem:[%s1178 + $0x30] sm:$0xf]
    %v1192 = vld [vmem:[%s1178 + $0x34] sm:$0xf]
    %v1193 = vld [vmem:[%s1178 + $0x38] sm:$0xf]
    %v1194 = vld [vmem:[%s1178 + $0x3c] sm:$0xf]
    %v1211 = vunpack.c.l.b16 %v1179
    %v1212 = vunpack.c.l.b16 %v1180
    %v1213 = vunpack.c.l.b16 %v1181
    %v1214 = vunpack.c.l.b16 %v1182
    %v1215 = vunpack.c.l.b16 %v1183
    %v1216 = vunpack.c.l.b16 %v1184
    %v1217 = vunpack.c.l.b16 %v1185
    %v1218 = vunpack.c.l.b16 %v1186
    %v1219 = vunpack.c.l.b16 %v1187
    %v1220 = vunpack.c.l.b16 %v1188
    %v1221 = vunpack.c.l.b16 %v1189
    %v1222 = vunpack.c.l.b16 %v1190
    %v1223 = vunpack.c.l.b16 %v1191
    %v1224 = vunpack.c.l.b16 %v1192
    %v1225 = vunpack.c.l.b16 %v1193
    %v1226 = vunpack.c.l.b16 %v1194
    %v1227 = vpack.c.b16 %v1212, %v1211
    %v1228 = vpack.c.b16 %v1214, %v1213
    %v1229 = vpack.c.b16 %v1216, %v1215
    %v1230 = vpack.c.b16 %v1218, %v1217
    %v1231 = vpack.c.b16 %v1220, %v1219
    %v1232 = vpack.c.b16 %v1222, %v1221
    %v1233 = vpack.c.b16 %v1224, %v1223
    %v1234 = vpack.c.b16 %v1226, %v1225
    %1243 = vmatpush.bf16.msra.mxu0 %v1040
    %1244 = vmatpush.bf16.msra.mxu0 %v1039
    %1245 = vmatpush.bf16.msra.mxu0 %v1038
    %1246 = vmatpush.bf16.msra.mxu0 %v1037
    %1247 = vmatpush.bf16.msra.mxu0 %v1036
    %1248 = vmatpush.bf16.msra.mxu0 %v1035
    %1249 = vmatpush.bf16.msra.mxu0 %v1034
    %1250 = vmatpush.bf16.msra.mxu0 %v1033
    %1251 = vmatmul.bf16.gmra.mxu0 %v1227
    %v1252 = vpop.f32.mrf.mxu0
    %v1253 = vadd.f32 0.0, %v1252
    %v1254 = vpop.f32.mrf.mxu0
    %v1255 = vadd.f32 0.0, %v1254
    %1256 = vmatmul.bf16.gmra.mxu0 %v1228
    %v1257 = vpop.f32.mrf.mxu0
    %v1258 = vadd.f32 0.0, %v1257
    %v1259 = vpop.f32.mrf.mxu0
    %v1260 = vadd.f32 0.0, %v1259
    %1261 = vmatmul.bf16.gmra.mxu0 %v1229
    %v1262 = vpop.f32.mrf.mxu0
    %v1263 = vadd.f32 0.0, %v1262
    %v1264 = vpop.f32.mrf.mxu0
    %v1265 = vadd.f32 0.0, %v1264
    %1266 = vmatmul.bf16.gmra.mxu0 %v1230
    %v1267 = vpop.f32.mrf.mxu0
    %v1268 = vadd.f32 0.0, %v1267
    %v1269 = vpop.f32.mrf.mxu0
    %v1270 = vadd.f32 0.0, %v1269
    %1271 = vmatmul.bf16.gmra.mxu0 %v1231
    %v1272 = vpop.f32.mrf.mxu0
    %v1273 = vadd.f32 0.0, %v1272
    %v1274 = vpop.f32.mrf.mxu0
    %v1275 = vadd.f32 0.0, %v1274
    %1276 = vmatmul.bf16.gmra.mxu0 %v1232
    %v1277 = vpop.f32.mrf.mxu0
    %v1278 = vadd.f32 0.0, %v1277
    %v1279 = vpop.f32.mrf.mxu0
    %v1280 = vadd.f32 0.0, %v1279
    %1281 = vmatmul.bf16.gmra.mxu0 %v1233
    %v1282 = vpop.f32.mrf.mxu0
    %v1283 = vadd.f32 0.0, %v1282
    %v1284 = vpop.f32.mrf.mxu0
    %v1285 = vadd.f32 0.0, %v1284
    %1286 = vmatmul.bf16.gmra.mxu0 %v1234
    %v1287 = vpop.f32.mrf.mxu0
    %v1288 = vadd.f32 0.0, %v1287
    %v1289 = vpop.f32.mrf.mxu0
    %v1290 = vadd.f32 0.0, %v1289
    %1291 = vdwg.mxu0
    %v1292 = vpack.c.bf16 %v1255, %v1253
    %v1293 = vpack.c.bf16 %v1260, %v1258
    %v1294 = vpack.c.bf16 %v1265, %v1263
    %v1295 = vpack.c.bf16 %v1270, %v1268
    %v1296 = vpack.c.bf16 %v1275, %v1273
    %v1297 = vpack.c.bf16 %v1280, %v1278
    %v1298 = vpack.c.bf16 %v1285, %v1283
    %v1299 = vpack.c.bf16 %v1290, %v1288
    %s1300 = scalar_lea.vmem %s5, 64
    %v1301 = vld [vmem:[%s1300] sm:$0xf]
    %v1302 = vld [vmem:[%s1300 + $0x4] sm:$0xf]
    %v1303 = vld [vmem:[%s1300 + $0x8] sm:$0xf]
    %v1304 = vld [vmem:[%s1300 + $0xc] sm:$0xf]
    %v1305 = vld [vmem:[%s1300 + $0x10] sm:$0xf]
    %v1306 = vld [vmem:[%s1300 + $0x14] sm:$0xf]
    %v1307 = vld [vmem:[%s1300 + $0x18] sm:$0xf]
    %v1308 = vld [vmem:[%s1300 + $0x1c] sm:$0xf]
    %v1309 = vld [vmem:[%s1300 + $0x20] sm:$0xf]
    %v1310 = vld [vmem:[%s1300 + $0x24] sm:$0xf]
    %v1311 = vld [vmem:[%s1300 + $0x28] sm:$0xf]
    %v1312 = vld [vmem:[%s1300 + $0x2c] sm:$0xf]
    %v1313 = vld [vmem:[%s1300 + $0x30] sm:$0xf]
    %v1314 = vld [vmem:[%s1300 + $0x34] sm:$0xf]
    %v1315 = vld [vmem:[%s1300 + $0x38] sm:$0xf]
    %v1316 = vld [vmem:[%s1300 + $0x3c] sm:$0xf]
    %v1333 = vunpack.c.l.b16 %v1301
    %v1334 = vunpack.c.l.b16 %v1302
    %v1335 = vunpack.c.l.b16 %v1303
    %v1336 = vunpack.c.l.b16 %v1304
    %v1337 = vunpack.c.l.b16 %v1305
    %v1338 = vunpack.c.l.b16 %v1306
    %v1339 = vunpack.c.l.b16 %v1307
    %v1340 = vunpack.c.l.b16 %v1308
    %v1341 = vunpack.c.l.b16 %v1309
    %v1342 = vunpack.c.l.b16 %v1310
    %v1343 = vunpack.c.l.b16 %v1311
    %v1344 = vunpack.c.l.b16 %v1312
    %v1345 = vunpack.c.l.b16 %v1313
    %v1346 = vunpack.c.l.b16 %v1314
    %v1347 = vunpack.c.l.b16 %v1315
    %v1348 = vunpack.c.l.b16 %v1316
    %v1349 = vpack.c.b16 %v1334, %v1333
    %v1350 = vpack.c.b16 %v1336, %v1335
    %v1351 = vpack.c.b16 %v1338, %v1337
    %v1352 = vpack.c.b16 %v1340, %v1339
    %v1353 = vpack.c.b16 %v1342, %v1341
    %v1354 = vpack.c.b16 %v1344, %v1343
    %v1355 = vpack.c.b16 %v1346, %v1345
    %v1356 = vpack.c.b16 %v1348, %v1347
    %1365 = vmatpush.bf16.msra.mxu0 %v1356
    %1366 = vmatpush.bf16.msra.mxu0 %v1355
    %1367 = vmatpush.bf16.msra.mxu0 %v1354
    %1368 = vmatpush.bf16.msra.mxu0 %v1353
    %1369 = vmatpush.bf16.msra.mxu0 %v1352
    %1370 = vmatpush.bf16.msra.mxu0 %v1351
    %1371 = vmatpush.bf16.msra.mxu0 %v1350
    %1372 = vmatpush.bf16.msra.mxu0 %v1349
    %1373 = vmatmul.bf16.gmra.mxu0 %v1292
    %v1374 = vpop.f32.mrf.mxu0
    %v1375 = vadd.f32 0.0, %v1374
    %v1376 = vpop.f32.mrf.mxu0
    %v1377 = vadd.f32 0.0, %v1376
    %1378 = vmatmul.bf16.gmra.mxu0 %v1293
    %v1379 = vpop.f32.mrf.mxu0
    %v1380 = vadd.f32 0.0, %v1379
    %v1381 = vpop.f32.mrf.mxu0
    %v1382 = vadd.f32 0.0, %v1381
    %1383 = vmatmul.bf16.gmra.mxu0 %v1294
    %v1384 = vpop.f32.mrf.mxu0
    %v1385 = vadd.f32 0.0, %v1384
    %v1386 = vpop.f32.mrf.mxu0
    %v1387 = vadd.f32 0.0, %v1386
    %1388 = vmatmul.bf16.gmra.mxu0 %v1295
    %v1389 = vpop.f32.mrf.mxu0
    %v1390 = vadd.f32 0.0, %v1389
    %v1391 = vpop.f32.mrf.mxu0
    %v1392 = vadd.f32 0.0, %v1391
    %1393 = vmatmul.bf16.gmra.mxu0 %v1296
    %v1394 = vpop.f32.mrf.mxu0
    %v1395 = vadd.f32 0.0, %v1394
    %v1396 = vpop.f32.mrf.mxu0
    %v1397 = vadd.f32 0.0, %v1396
    %1398 = vmatmul.bf16.gmra.mxu0 %v1297
    %v1399 = vpop.f32.mrf.mxu0
    %v1400 = vadd.f32 0.0, %v1399
    %v1401 = vpop.f32.mrf.mxu0
    %v1402 = vadd.f32 0.0, %v1401
    %1403 = vmatmul.bf16.gmra.mxu0 %v1298
    %v1404 = vpop.f32.mrf.mxu0
    %v1405 = vadd.f32 0.0, %v1404
    %v1406 = vpop.f32.mrf.mxu0
    %v1407 = vadd.f32 0.0, %v1406
    %1408 = vmatmul.bf16.gmra.mxu0 %v1299
    %v1409 = vpop.f32.mrf.mxu0
    %v1410 = vadd.f32 0.0, %v1409
    %v1411 = vpop.f32.mrf.mxu0
    %v1412 = vadd.f32 0.0, %v1411
    %1413 = vdwg.mxu0
    %v1430 = vunpack.c.l.b16 %v1162
    %v1431 = vunpack.c.l.b16 %v1163
    %v1432 = vunpack.c.l.b16 %v1164
    %v1433 = vunpack.c.l.b16 %v1165
    %v1434 = vunpack.c.l.b16 %v1166
    %v1435 = vunpack.c.l.b16 %v1167
    %v1436 = vunpack.c.l.b16 %v1168
    %v1437 = vunpack.c.l.b16 %v1169
    %v1438 = vunpack.c.l.b16 %v1170
    %v1439 = vunpack.c.l.b16 %v1171
    %v1440 = vunpack.c.l.b16 %v1172
    %v1441 = vunpack.c.l.b16 %v1173
    %v1442 = vunpack.c.l.b16 %v1174
    %v1443 = vunpack.c.l.b16 %v1175
    %v1444 = vunpack.c.l.b16 %v1176
    %v1445 = vunpack.c.l.b16 %v1177
    %v1446 = vpack.c.b16 %v1431, %v1430
    %v1447 = vpack.c.b16 %v1433, %v1432
    %v1448 = vpack.c.b16 %v1435, %v1434
    %v1449 = vpack.c.b16 %v1437, %v1436
    %v1450 = vpack.c.b16 %v1439, %v1438
    %v1451 = vpack.c.b16 %v1441, %v1440
    %v1452 = vpack.c.b16 %v1443, %v1442
    %v1453 = vpack.c.b16 %v1445, %v1444
    %1462 = vmatpush.bf16.msra.mxu0 %v1453
    %1463 = vmatpush.bf16.msra.mxu0 %v1452
    %1464 = vmatpush.bf16.msra.mxu0 %v1451
    %1465 = vmatpush.bf16.msra.mxu0 %v1450
    %1466 = vmatpush.bf16.msra.mxu0 %v1449
    %1467 = vmatpush.bf16.msra.mxu0 %v1448
    %1468 = vmatpush.bf16.msra.mxu0 %v1447
    %1469 = vmatpush.bf16.msra.mxu0 %v1446
    %1470 = vmatmul.bf16.gmra.mxu0 %v1154
    %v1471 = vpop.f32.mrf.mxu0
    %v1472 = vadd.f32 %v1375, %v1471
    %v1473 = vpop.f32.mrf.mxu0
    %v1474 = vadd.f32 %v1377, %v1473
    %1475 = vmatmul.bf16.gmra.mxu0 %v1155
    %v1476 = vpop.f32.mrf.mxu0
    %v1477 = vadd.f32 %v1380, %v1476
    %v1478 = vpop.f32.mrf.mxu0
    %v1479 = vadd.f32 %v1382, %v1478
    %1480 = vmatmul.bf16.gmra.mxu0 %v1156
    %v1481 = vpop.f32.mrf.mxu0
    %v1482 = vadd.f32 %v1385, %v1481
    %v1483 = vpop.f32.mrf.mxu0
    %v1484 = vadd.f32 %v1387, %v1483
    %1485 = vmatmul.bf16.gmra.mxu0 %v1157
    %v1486 = vpop.f32.mrf.mxu0
    %v1487 = vadd.f32 %v1390, %v1486
    %v1488 = vpop.f32.mrf.mxu0
    %v1489 = vadd.f32 %v1392, %v1488
    %1490 = vmatmul.bf16.gmra.mxu0 %v1158
    %v1491 = vpop.f32.mrf.mxu0
    %v1492 = vadd.f32 %v1395, %v1491
    %v1493 = vpop.f32.mrf.mxu0
    %v1494 = vadd.f32 %v1397, %v1493
    %1495 = vmatmul.bf16.gmra.mxu0 %v1159
    %v1496 = vpop.f32.mrf.mxu0
    %v1497 = vadd.f32 %v1400, %v1496
    %v1498 = vpop.f32.mrf.mxu0
    %v1499 = vadd.f32 %v1402, %v1498
    %1500 = vmatmul.bf16.gmra.mxu0 %v1160
    %v1501 = vpop.f32.mrf.mxu0
    %v1502 = vadd.f32 %v1405, %v1501
    %v1503 = vpop.f32.mrf.mxu0
    %v1504 = vadd.f32 %v1407, %v1503
    %1505 = vmatmul.bf16.gmra.mxu0 %v1161
    %v1506 = vpop.f32.mrf.mxu0
    %v1507 = vadd.f32 %v1410, %v1506
    %v1508 = vpop.f32.mrf.mxu0
    %v1509 = vadd.f32 %v1412, %v1508
    %1510 = vdwg.mxu0
    %s1511 = scalar_lea.vmem %s4, 128
    %v1512 = vld [vmem:[%s1511] sm:$0xf]
    %v1513 = vld [vmem:[%s1511 + $0x4] sm:$0xf]
    %v1514 = vld [vmem:[%s1511 + $0x8] sm:$0xf]
    %v1515 = vld [vmem:[%s1511 + $0xc] sm:$0xf]
    %v1516 = vld [vmem:[%s1511 + $0x10] sm:$0xf]
    %v1517 = vld [vmem:[%s1511 + $0x14] sm:$0xf]
    %v1518 = vld [vmem:[%s1511 + $0x18] sm:$0xf]
    %v1519 = vld [vmem:[%s1511 + $0x1c] sm:$0xf]
    %v1520 = vld [vmem:[%s1511 + $0x20] sm:$0xf]
    %v1521 = vld [vmem:[%s1511 + $0x24] sm:$0xf]
    %v1522 = vld [vmem:[%s1511 + $0x28] sm:$0xf]
    %v1523 = vld [vmem:[%s1511 + $0x2c] sm:$0xf]
    %v1524 = vld [vmem:[%s1511 + $0x30] sm:$0xf]
    %v1525 = vld [vmem:[%s1511 + $0x34] sm:$0xf]
    %v1526 = vld [vmem:[%s1511 + $0x38] sm:$0xf]
    %v1527 = vld [vmem:[%s1511 + $0x3c] sm:$0xf]
    %v1544 = vunpack.c.l.b16 %v1512
    %v1545 = vunpack.c.l.b16 %v1513
    %v1546 = vunpack.c.l.b16 %v1514
    %v1547 = vunpack.c.l.b16 %v1515
    %v1548 = vunpack.c.l.b16 %v1516
    %v1549 = vunpack.c.l.b16 %v1517
    %v1550 = vunpack.c.l.b16 %v1518
    %v1551 = vunpack.c.l.b16 %v1519
    %v1552 = vunpack.c.l.b16 %v1520
    %v1553 = vunpack.c.l.b16 %v1521
    %v1554 = vunpack.c.l.b16 %v1522
    %v1555 = vunpack.c.l.b16 %v1523
    %v1556 = vunpack.c.l.b16 %v1524
    %v1557 = vunpack.c.l.b16 %v1525
    %v1558 = vunpack.c.l.b16 %v1526
    %v1559 = vunpack.c.l.b16 %v1527
    %v1560 = vpack.c.b16 %v1545, %v1544
    %v1561 = vpack.c.b16 %v1547, %v1546
    %v1562 = vpack.c.b16 %v1549, %v1548
    %v1563 = vpack.c.b16 %v1551, %v1550
    %v1564 = vpack.c.b16 %v1553, %v1552
    %v1565 = vpack.c.b16 %v1555, %v1554
    %v1566 = vpack.c.b16 %v1557, %v1556
    %v1567 = vpack.c.b16 %v1559, %v1558
    %1576 = vmatpush.bf16.msra.mxu0 %v1040
    %1577 = vmatpush.bf16.msra.mxu0 %v1039
    %1578 = vmatpush.bf16.msra.mxu0 %v1038
    %1579 = vmatpush.bf16.msra.mxu0 %v1037
    %1580 = vmatpush.bf16.msra.mxu0 %v1036
    %1581 = vmatpush.bf16.msra.mxu0 %v1035
    %1582 = vmatpush.bf16.msra.mxu0 %v1034
    %1583 = vmatpush.bf16.msra.mxu0 %v1033
    %1584 = vmatmul.bf16.gmra.mxu0 %v1560
    %v1585 = vpop.f32.mrf.mxu0
    %v1586 = vadd.f32 0.0, %v1585
    %v1587 = vpop.f32.mrf.mxu0
    %v1588 = vadd.f32 0.0, %v1587
    %1589 = vmatmul.bf16.gmra.mxu0 %v1561
    %v1590 = vpop.f32.mrf.mxu0
    %v1591 = vadd.f32 0.0, %v1590
    %v1592 = vpop.f32.mrf.mxu0
    %v1593 = vadd.f32 0.0, %v1592
    %1594 = vmatmul.bf16.gmra.mxu0 %v1562
    %v1595 = vpop.f32.mrf.mxu0
    %v1596 = vadd.f32 0.0, %v1595
    %v1597 = vpop.f32.mrf.mxu0
    %v1598 = vadd.f32 0.0, %v1597
    %1599 = vmatmul.bf16.gmra.mxu0 %v1563
    %v1600 = vpop.f32.mrf.mxu0
    %v1601 = vadd.f32 0.0, %v1600
    %v1602 = vpop.f32.mrf.mxu0
    %v1603 = vadd.f32 0.0, %v1602
    %1604 = vmatmul.bf16.gmra.mxu0 %v1564
    %v1605 = vpop.f32.mrf.mxu0
    %v1606 = vadd.f32 0.0, %v1605
    %v1607 = vpop.f32.mrf.mxu0
    %v1608 = vadd.f32 0.0, %v1607
    %1609 = vmatmul.bf16.gmra.mxu0 %v1565
    %v1610 = vpop.f32.mrf.mxu0
    %v1611 = vadd.f32 0.0, %v1610
    %v1612 = vpop.f32.mrf.mxu0
    %v1613 = vadd.f32 0.0, %v1612
    %1614 = vmatmul.bf16.gmra.mxu0 %v1566
    %v1615 = vpop.f32.mrf.mxu0
    %v1616 = vadd.f32 0.0, %v1615
    %v1617 = vpop.f32.mrf.mxu0
    %v1618 = vadd.f32 0.0, %v1617
    %1619 = vmatmul.bf16.gmra.mxu0 %v1567
    %v1620 = vpop.f32.mrf.mxu0
    %v1621 = vadd.f32 0.0, %v1620
    %v1622 = vpop.f32.mrf.mxu0
    %v1623 = vadd.f32 0.0, %v1622
    %1624 = vdwg.mxu0
    %v1625 = vpack.c.bf16 %v1588, %v1586
    %v1626 = vpack.c.bf16 %v1593, %v1591
    %v1627 = vpack.c.bf16 %v1598, %v1596
    %v1628 = vpack.c.bf16 %v1603, %v1601
    %v1629 = vpack.c.bf16 %v1608, %v1606
    %v1630 = vpack.c.bf16 %v1613, %v1611
    %v1631 = vpack.c.bf16 %v1618, %v1616
    %v1632 = vpack.c.bf16 %v1623, %v1621
    %s1633 = scalar_lea.vmem %s5, 128
    %v1634 = vld [vmem:[%s1633] sm:$0xf]
    %v1635 = vld [vmem:[%s1633 + $0x4] sm:$0xf]
    %v1636 = vld [vmem:[%s1633 + $0x8] sm:$0xf]
    %v1637 = vld [vmem:[%s1633 + $0xc] sm:$0xf]
    %v1638 = vld [vmem:[%s1633 + $0x10] sm:$0xf]
    %v1639 = vld [vmem:[%s1633 + $0x14] sm:$0xf]
    %v1640 = vld [vmem:[%s1633 + $0x18] sm:$0xf]
    %v1641 = vld [vmem:[%s1633 + $0x1c] sm:$0xf]
    %v1642 = vld [vmem:[%s1633 + $0x20] sm:$0xf]
    %v1643 = vld [vmem:[%s1633 + $0x24] sm:$0xf]
    %v1644 = vld [vmem:[%s1633 + $0x28] sm:$0xf]
    %v1645 = vld [vmem:[%s1633 + $0x2c] sm:$0xf]
    %v1646 = vld [vmem:[%s1633 + $0x30] sm:$0xf]
    %v1647 = vld [vmem:[%s1633 + $0x34] sm:$0xf]
    %v1648 = vld [vmem:[%s1633 + $0x38] sm:$0xf]
    %v1649 = vld [vmem:[%s1633 + $0x3c] sm:$0xf]
    %v1666 = vunpack.c.l.b16 %v1634
    %v1667 = vunpack.c.l.b16 %v1635
    %v1668 = vunpack.c.l.b16 %v1636
    %v1669 = vunpack.c.l.b16 %v1637
    %v1670 = vunpack.c.l.b16 %v1638
    %v1671 = vunpack.c.l.b16 %v1639
    %v1672 = vunpack.c.l.b16 %v1640
    %v1673 = vunpack.c.l.b16 %v1641
    %v1674 = vunpack.c.l.b16 %v1642
    %v1675 = vunpack.c.l.b16 %v1643
    %v1676 = vunpack.c.l.b16 %v1644
    %v1677 = vunpack.c.l.b16 %v1645
    %v1678 = vunpack.c.l.b16 %v1646
    %v1679 = vunpack.c.l.b16 %v1647
    %v1680 = vunpack.c.l.b16 %v1648
    %v1681 = vunpack.c.l.b16 %v1649
    %v1682 = vpack.c.b16 %v1667, %v1666
    %v1683 = vpack.c.b16 %v1669, %v1668
    %v1684 = vpack.c.b16 %v1671, %v1670
    %v1685 = vpack.c.b16 %v1673, %v1672
    %v1686 = vpack.c.b16 %v1675, %v1674
    %v1687 = vpack.c.b16 %v1677, %v1676
    %v1688 = vpack.c.b16 %v1679, %v1678
    %v1689 = vpack.c.b16 %v1681, %v1680
    %1698 = vmatpush.bf16.msra.mxu0 %v1689
    %1699 = vmatpush.bf16.msra.mxu0 %v1688
    %1700 = vmatpush.bf16.msra.mxu0 %v1687
    %1701 = vmatpush.bf16.msra.mxu0 %v1686
    %1702 = vmatpush.bf16.msra.mxu0 %v1685
    %1703 = vmatpush.bf16.msra.mxu0 %v1684
    %1704 = vmatpush.bf16.msra.mxu0 %v1683
    %1705 = vmatpush.bf16.msra.mxu0 %v1682
    %1706 = vmatmul.bf16.gmra.mxu0 %v1625
    %v1707 = vpop.f32.mrf.mxu0
    %v1708 = vadd.f32 0.0, %v1707
    %v1709 = vpop.f32.mrf.mxu0
    %v1710 = vadd.f32 0.0, %v1709
    %1711 = vmatmul.bf16.gmra.mxu0 %v1626
    %v1712 = vpop.f32.mrf.mxu0
    %v1713 = vadd.f32 0.0, %v1712
    %v1714 = vpop.f32.mrf.mxu0
    %v1715 = vadd.f32 0.0, %v1714
    %1716 = vmatmul.bf16.gmra.mxu0 %v1627
    %v1717 = vpop.f32.mrf.mxu0
    %v1718 = vadd.f32 0.0, %v1717
    %v1719 = vpop.f32.mrf.mxu0
    %v1720 = vadd.f32 0.0, %v1719
    %1721 = vmatmul.bf16.gmra.mxu0 %v1628
    %v1722 = vpop.f32.mrf.mxu0
    %v1723 = vadd.f32 0.0, %v1722
    %v1724 = vpop.f32.mrf.mxu0
    %v1725 = vadd.f32 0.0, %v1724
    %1726 = vmatmul.bf16.gmra.mxu0 %v1629
    %v1727 = vpop.f32.mrf.mxu0
    %v1728 = vadd.f32 0.0, %v1727
    %v1729 = vpop.f32.mrf.mxu0
    %v1730 = vadd.f32 0.0, %v1729
    %1731 = vmatmul.bf16.gmra.mxu0 %v1630
    %v1732 = vpop.f32.mrf.mxu0
    %v1733 = vadd.f32 0.0, %v1732
    %v1734 = vpop.f32.mrf.mxu0
    %v1735 = vadd.f32 0.0, %v1734
    %1736 = vmatmul.bf16.gmra.mxu0 %v1631
    %v1737 = vpop.f32.mrf.mxu0
    %v1738 = vadd.f32 0.0, %v1737
    %v1739 = vpop.f32.mrf.mxu0
    %v1740 = vadd.f32 0.0, %v1739
    %1741 = vmatmul.bf16.gmra.mxu0 %v1632
    %v1742 = vpop.f32.mrf.mxu0
    %v1743 = vadd.f32 0.0, %v1742
    %v1744 = vpop.f32.mrf.mxu0
    %v1745 = vadd.f32 0.0, %v1744
    %1746 = vdwg.mxu0
    %v1747 = vadd.f32 %v1472, %v1708
    %v1748 = vadd.f32 %v1474, %v1710
    %v1749 = vadd.f32 %v1477, %v1713
    %v1750 = vadd.f32 %v1479, %v1715
    %v1751 = vadd.f32 %v1482, %v1718
    %v1752 = vadd.f32 %v1484, %v1720
    %v1753 = vadd.f32 %v1487, %v1723
    %v1754 = vadd.f32 %v1489, %v1725
    %v1755 = vadd.f32 %v1492, %v1728
    %v1756 = vadd.f32 %v1494, %v1730
    %v1757 = vadd.f32 %v1497, %v1733
    %v1758 = vadd.f32 %v1499, %v1735
    %v1759 = vadd.f32 %v1502, %v1738
    %v1760 = vadd.f32 %v1504, %v1740
    %v1761 = vadd.f32 %v1507, %v1743
    %v1762 = vadd.f32 %v1509, %v1745
    %s1763 = scalar_lea.vmem %s4, 192
    %v1764 = vld [vmem:[%s1763] sm:$0xf]
    %v1765 = vld [vmem:[%s1763 + $0x4] sm:$0xf]
    %v1766 = vld [vmem:[%s1763 + $0x8] sm:$0xf]
    %v1767 = vld [vmem:[%s1763 + $0xc] sm:$0xf]
    %v1768 = vld [vmem:[%s1763 + $0x10] sm:$0xf]
    %v1769 = vld [vmem:[%s1763 + $0x14] sm:$0xf]
    %v1770 = vld [vmem:[%s1763 + $0x18] sm:$0xf]
    %v1771 = vld [vmem:[%s1763 + $0x1c] sm:$0xf]
    %v1772 = vld [vmem:[%s1763 + $0x20] sm:$0xf]
    %v1773 = vld [vmem:[%s1763 + $0x24] sm:$0xf]
    %v1774 = vld [vmem:[%s1763 + $0x28] sm:$0xf]
    %v1775 = vld [vmem:[%s1763 + $0x2c] sm:$0xf]
    %v1776 = vld [vmem:[%s1763 + $0x30] sm:$0xf]
    %v1777 = vld [vmem:[%s1763 + $0x34] sm:$0xf]
    %v1778 = vld [vmem:[%s1763 + $0x38] sm:$0xf]
    %v1779 = vld [vmem:[%s1763 + $0x3c] sm:$0xf]
    %v1796 = vunpack.c.l.b16 %v1764
    %v1797 = vunpack.c.l.b16 %v1765
    %v1798 = vunpack.c.l.b16 %v1766
    %v1799 = vunpack.c.l.b16 %v1767
    %v1800 = vunpack.c.l.b16 %v1768
    %v1801 = vunpack.c.l.b16 %v1769
    %v1802 = vunpack.c.l.b16 %v1770
    %v1803 = vunpack.c.l.b16 %v1771
    %v1804 = vunpack.c.l.b16 %v1772
    %v1805 = vunpack.c.l.b16 %v1773
    %v1806 = vunpack.c.l.b16 %v1774
    %v1807 = vunpack.c.l.b16 %v1775
    %v1808 = vunpack.c.l.b16 %v1776
    %v1809 = vunpack.c.l.b16 %v1777
    %v1810 = vunpack.c.l.b16 %v1778
    %v1811 = vunpack.c.l.b16 %v1779
    %v1812 = vpack.c.b16 %v1797, %v1796
    %v1813 = vpack.c.b16 %v1799, %v1798
    %v1814 = vpack.c.b16 %v1801, %v1800
    %v1815 = vpack.c.b16 %v1803, %v1802
    %v1816 = vpack.c.b16 %v1805, %v1804
    %v1817 = vpack.c.b16 %v1807, %v1806
    %v1818 = vpack.c.b16 %v1809, %v1808
    %v1819 = vpack.c.b16 %v1811, %v1810
    %1828 = vmatpush.bf16.msra.mxu0 %v1040
    %1829 = vmatpush.bf16.msra.mxu0 %v1039
    %1830 = vmatpush.bf16.msra.mxu0 %v1038
    %1831 = vmatpush.bf16.msra.mxu0 %v1037
    %1832 = vmatpush.bf16.msra.mxu0 %v1036
    %1833 = vmatpush.bf16.msra.mxu0 %v1035
    %1834 = vmatpush.bf16.msra.mxu0 %v1034
    %1835 = vmatpush.bf16.msra.mxu0 %v1033
    %1836 = vmatmul.bf16.gmra.mxu0 %v1812
    %v1837 = vpop.f32.mrf.mxu0
    %v1838 = vadd.f32 0.0, %v1837
    %v1839 = vpop.f32.mrf.mxu0
    %v1840 = vadd.f32 0.0, %v1839
    %1841 = vmatmul.bf16.gmra.mxu0 %v1813
    %v1842 = vpop.f32.mrf.mxu0
    %v1843 = vadd.f32 0.0, %v1842
    %v1844 = vpop.f32.mrf.mxu0
    %v1845 = vadd.f32 0.0, %v1844
    %1846 = vmatmul.bf16.gmra.mxu0 %v1814
    %v1847 = vpop.f32.mrf.mxu0
    %v1848 = vadd.f32 0.0, %v1847
    %v1849 = vpop.f32.mrf.mxu0
    %v1850 = vadd.f32 0.0, %v1849
    %1851 = vmatmul.bf16.gmra.mxu0 %v1815
    %v1852 = vpop.f32.mrf.mxu0
    %v1853 = vadd.f32 0.0, %v1852
    %v1854 = vpop.f32.mrf.mxu0
    %v1855 = vadd.f32 0.0, %v1854
    %1856 = vmatmul.bf16.gmra.mxu0 %v1816
    %v1857 = vpop.f32.mrf.mxu0
    %v1858 = vadd.f32 0.0, %v1857
    %v1859 = vpop.f32.mrf.mxu0
    %v1860 = vadd.f32 0.0, %v1859
    %1861 = vmatmul.bf16.gmra.mxu0 %v1817
    %v1862 = vpop.f32.mrf.mxu0
    %v1863 = vadd.f32 0.0, %v1862
    %v1864 = vpop.f32.mrf.mxu0
    %v1865 = vadd.f32 0.0, %v1864
    %1866 = vmatmul.bf16.gmra.mxu0 %v1818
    %v1867 = vpop.f32.mrf.mxu0
    %v1868 = vadd.f32 0.0, %v1867
    %v1869 = vpop.f32.mrf.mxu0
    %v1870 = vadd.f32 0.0, %v1869
    %1871 = vmatmul.bf16.gmra.mxu0 %v1819
    %v1872 = vpop.f32.mrf.mxu0
    %v1873 = vadd.f32 0.0, %v1872
    %v1874 = vpop.f32.mrf.mxu0
    %v1875 = vadd.f32 0.0, %v1874
    %1876 = vdwg.mxu0
    %v1877 = vpack.c.bf16 %v1840, %v1838
    %v1878 = vpack.c.bf16 %v1845, %v1843
    %v1879 = vpack.c.bf16 %v1850, %v1848
    %v1880 = vpack.c.bf16 %v1855, %v1853
    %v1881 = vpack.c.bf16 %v1860, %v1858
    %v1882 = vpack.c.bf16 %v1865, %v1863
    %v1883 = vpack.c.bf16 %v1870, %v1868
    %v1884 = vpack.c.bf16 %v1875, %v1873
    %s1885 = scalar_lea.vmem %s5, 192
    %v1886 = vld [vmem:[%s1885] sm:$0xf]
    %v1887 = vld [vmem:[%s1885 + $0x4] sm:$0xf]
    %v1888 = vld [vmem:[%s1885 + $0x8] sm:$0xf]
    %v1889 = vld [vmem:[%s1885 + $0xc] sm:$0xf]
    %v1890 = vld [vmem:[%s1885 + $0x10] sm:$0xf]
    %v1891 = vld [vmem:[%s1885 + $0x14] sm:$0xf]
    %v1892 = vld [vmem:[%s1885 + $0x18] sm:$0xf]
    %v1893 = vld [vmem:[%s1885 + $0x1c] sm:$0xf]
    %v1894 = vld [vmem:[%s1885 + $0x20] sm:$0xf]
    %v1895 = vld [vmem:[%s1885 + $0x24] sm:$0xf]
    %v1896 = vld [vmem:[%s1885 + $0x28] sm:$0xf]
    %v1897 = vld [vmem:[%s1885 + $0x2c] sm:$0xf]
    %v1898 = vld [vmem:[%s1885 + $0x30] sm:$0xf]
    %v1899 = vld [vmem:[%s1885 + $0x34] sm:$0xf]
    %v1900 = vld [vmem:[%s1885 + $0x38] sm:$0xf]
    %v1901 = vld [vmem:[%s1885 + $0x3c] sm:$0xf]
    %v1918 = vunpack.c.l.b16 %v1886
    %v1919 = vunpack.c.l.b16 %v1887
    %v1920 = vunpack.c.l.b16 %v1888
    %v1921 = vunpack.c.l.b16 %v1889
    %v1922 = vunpack.c.l.b16 %v1890
    %v1923 = vunpack.c.l.b16 %v1891
    %v1924 = vunpack.c.l.b16 %v1892
    %v1925 = vunpack.c.l.b16 %v1893
    %v1926 = vunpack.c.l.b16 %v1894
    %v1927 = vunpack.c.l.b16 %v1895
    %v1928 = vunpack.c.l.b16 %v1896
    %v1929 = vunpack.c.l.b16 %v1897
    %v1930 = vunpack.c.l.b16 %v1898
    %v1931 = vunpack.c.l.b16 %v1899
    %v1932 = vunpack.c.l.b16 %v1900
    %v1933 = vunpack.c.l.b16 %v1901
    %v1934 = vpack.c.b16 %v1919, %v1918
    %v1935 = vpack.c.b16 %v1921, %v1920
    %v1936 = vpack.c.b16 %v1923, %v1922
    %v1937 = vpack.c.b16 %v1925, %v1924
    %v1938 = vpack.c.b16 %v1927, %v1926
    %v1939 = vpack.c.b16 %v1929, %v1928
    %v1940 = vpack.c.b16 %v1931, %v1930
    %v1941 = vpack.c.b16 %v1933, %v1932
    %1950 = vmatpush.bf16.msra.mxu0 %v1941
    %1951 = vmatpush.bf16.msra.mxu0 %v1940
    %1952 = vmatpush.bf16.msra.mxu0 %v1939
    %1953 = vmatpush.bf16.msra.mxu0 %v1938
    %1954 = vmatpush.bf16.msra.mxu0 %v1937
    %1955 = vmatpush.bf16.msra.mxu0 %v1936
    %1956 = vmatpush.bf16.msra.mxu0 %v1935
    %1957 = vmatpush.bf16.msra.mxu0 %v1934
    %1958 = vmatmul.bf16.gmra.mxu0 %v1877
    %v1959 = vpop.f32.mrf.mxu0
    %v1960 = vadd.f32 0.0, %v1959
    %v1961 = vpop.f32.mrf.mxu0
    %v1962 = vadd.f32 0.0, %v1961
    %1963 = vmatmul.bf16.gmra.mxu0 %v1878
    %v1964 = vpop.f32.mrf.mxu0
    %v1965 = vadd.f32 0.0, %v1964
    %v1966 = vpop.f32.mrf.mxu0
    %v1967 = vadd.f32 0.0, %v1966
    %1968 = vmatmul.bf16.gmra.mxu0 %v1879
    %v1969 = vpop.f32.mrf.mxu0
    %v1970 = vadd.f32 0.0, %v1969
    %v1971 = vpop.f32.mrf.mxu0
    %v1972 = vadd.f32 0.0, %v1971
    %1973 = vmatmul.bf16.gmra.mxu0 %v1880
    %v1974 = vpop.f32.mrf.mxu0
    %v1975 = vadd.f32 0.0, %v1974
    %v1976 = vpop.f32.mrf.mxu0
    %v1977 = vadd.f32 0.0, %v1976
    %1978 = vmatmul.bf16.gmra.mxu0 %v1881
    %v1979 = vpop.f32.mrf.mxu0
    %v1980 = vadd.f32 0.0, %v1979
    %v1981 = vpop.f32.mrf.mxu0
    %v1982 = vadd.f32 0.0, %v1981
    %1983 = vmatmul.bf16.gmra.mxu0 %v1882
    %v1984 = vpop.f32.mrf.mxu0
    %v1985 = vadd.f32 0.0, %v1984
    %v1986 = vpop.f32.mrf.mxu0
    %v1987 = vadd.f32 0.0, %v1986
    %1988 = vmatmul.bf16.gmra.mxu0 %v1883
    %v1989 = vpop.f32.mrf.mxu0
    %v1990 = vadd.f32 0.0, %v1989
    %v1991 = vpop.f32.mrf.mxu0
    %v1992 = vadd.f32 0.0, %v1991
    %1993 = vmatmul.bf16.gmra.mxu0 %v1884
    %v1994 = vpop.f32.mrf.mxu0
    %v1995 = vadd.f32 0.0, %v1994
    %v1996 = vpop.f32.mrf.mxu0
    %v1997 = vadd.f32 0.0, %v1996
    %1998 = vdwg.mxu0
    %v1999 = vadd.f32 %v1747, %v1960
    %v2000 = vadd.f32 %v1748, %v1962
    %v2001 = vadd.f32 %v1749, %v1965
    %v2002 = vadd.f32 %v1750, %v1967
    %v2003 = vadd.f32 %v1751, %v1970
    %v2004 = vadd.f32 %v1752, %v1972
    %v2005 = vadd.f32 %v1753, %v1975
    %v2006 = vadd.f32 %v1754, %v1977
    %v2007 = vadd.f32 %v1755, %v1980
    %v2008 = vadd.f32 %v1756, %v1982
    %v2009 = vadd.f32 %v1757, %v1985
    %v2010 = vadd.f32 %v1758, %v1987
    %v2011 = vadd.f32 %v1759, %v1990
    %v2012 = vadd.f32 %v1760, %v1992
    %v2013 = vadd.f32 %v1761, %v1995
    %v2014 = vadd.f32 %v1762, %v1997
    %s2015 = scalar_lea.vmem %s4, 256
    %v2016 = vld [vmem:[%s2015] sm:$0xf]
    %v2017 = vld [vmem:[%s2015 + $0x4] sm:$0xf]
    %v2018 = vld [vmem:[%s2015 + $0x8] sm:$0xf]
    %v2019 = vld [vmem:[%s2015 + $0xc] sm:$0xf]
    %v2020 = vld [vmem:[%s2015 + $0x10] sm:$0xf]
    %v2021 = vld [vmem:[%s2015 + $0x14] sm:$0xf]
    %v2022 = vld [vmem:[%s2015 + $0x18] sm:$0xf]
    %v2023 = vld [vmem:[%s2015 + $0x1c] sm:$0xf]
    %v2024 = vld [vmem:[%s2015 + $0x20] sm:$0xf]
    %v2025 = vld [vmem:[%s2015 + $0x24] sm:$0xf]
    %v2026 = vld [vmem:[%s2015 + $0x28] sm:$0xf]
    %v2027 = vld [vmem:[%s2015 + $0x2c] sm:$0xf]
    %v2028 = vld [vmem:[%s2015 + $0x30] sm:$0xf]
    %v2029 = vld [vmem:[%s2015 + $0x34] sm:$0xf]
    %v2030 = vld [vmem:[%s2015 + $0x38] sm:$0xf]
    %v2031 = vld [vmem:[%s2015 + $0x3c] sm:$0xf]
    %v2048 = vunpack.c.l.b16 %v2016
    %v2049 = vunpack.c.l.b16 %v2017
    %v2050 = vunpack.c.l.b16 %v2018
    %v2051 = vunpack.c.l.b16 %v2019
    %v2052 = vunpack.c.l.b16 %v2020
    %v2053 = vunpack.c.l.b16 %v2021
    %v2054 = vunpack.c.l.b16 %v2022
    %v2055 = vunpack.c.l.b16 %v2023
    %v2056 = vunpack.c.l.b16 %v2024
    %v2057 = vunpack.c.l.b16 %v2025
    %v2058 = vunpack.c.l.b16 %v2026
    %v2059 = vunpack.c.l.b16 %v2027
    %v2060 = vunpack.c.l.b16 %v2028
    %v2061 = vunpack.c.l.b16 %v2029
    %v2062 = vunpack.c.l.b16 %v2030
    %v2063 = vunpack.c.l.b16 %v2031
    %v2064 = vpack.c.b16 %v2049, %v2048
    %v2065 = vpack.c.b16 %v2051, %v2050
    %v2066 = vpack.c.b16 %v2053, %v2052
    %v2067 = vpack.c.b16 %v2055, %v2054
    %v2068 = vpack.c.b16 %v2057, %v2056
    %v2069 = vpack.c.b16 %v2059, %v2058
    %v2070 = vpack.c.b16 %v2061, %v2060
    %v2071 = vpack.c.b16 %v2063, %v2062
    %2080 = vmatpush.bf16.msra.mxu0 %v1040
    %2081 = vmatpush.bf16.msra.mxu0 %v1039
    %2082 = vmatpush.bf16.msra.mxu0 %v1038
    %2083 = vmatpush.bf16.msra.mxu0 %v1037
    %2084 = vmatpush.bf16.msra.mxu0 %v1036
    %2085 = vmatpush.bf16.msra.mxu0 %v1035
    %2086 = vmatpush.bf16.msra.mxu0 %v1034
    %2087 = vmatpush.bf16.msra.mxu0 %v1033
    %2088 = vmatmul.bf16.gmra.mxu0 %v2064
    %v2089 = vpop.f32.mrf.mxu0
    %v2090 = vadd.f32 0.0, %v2089
    %v2091 = vpop.f32.mrf.mxu0
    %v2092 = vadd.f32 0.0, %v2091
    %2093 = vmatmul.bf16.gmra.mxu0 %v2065
    %v2094 = vpop.f32.mrf.mxu0
    %v2095 = vadd.f32 0.0, %v2094
    %v2096 = vpop.f32.mrf.mxu0
    %v2097 = vadd.f32 0.0, %v2096
    %2098 = vmatmul.bf16.gmra.mxu0 %v2066
    %v2099 = vpop.f32.mrf.mxu0
    %v2100 = vadd.f32 0.0, %v2099
    %v2101 = vpop.f32.mrf.mxu0
    %v2102 = vadd.f32 0.0, %v2101
    %2103 = vmatmul.bf16.gmra.mxu0 %v2067
    %v2104 = vpop.f32.mrf.mxu0
    %v2105 = vadd.f32 0.0, %v2104
    %v2106 = vpop.f32.mrf.mxu0
    %v2107 = vadd.f32 0.0, %v2106
    %2108 = vmatmul.bf16.gmra.mxu0 %v2068
    %v2109 = vpop.f32.mrf.mxu0
    %v2110 = vadd.f32 0.0, %v2109
    %v2111 = vpop.f32.mrf.mxu0
    %v2112 = vadd.f32 0.0, %v2111
    %2113 = vmatmul.bf16.gmra.mxu0 %v2069
    %v2114 = vpop.f32.mrf.mxu0
    %v2115 = vadd.f32 0.0, %v2114
    %v2116 = vpop.f32.mrf.mxu0
    %v2117 = vadd.f32 0.0, %v2116
    %2118 = vmatmul.bf16.gmra.mxu0 %v2070
    %v2119 = vpop.f32.mrf.mxu0
    %v2120 = vadd.f32 0.0, %v2119
    %v2121 = vpop.f32.mrf.mxu0
    %v2122 = vadd.f32 0.0, %v2121
    %2123 = vmatmul.bf16.gmra.mxu0 %v2071
    %v2124 = vpop.f32.mrf.mxu0
    %v2125 = vadd.f32 0.0, %v2124
    %v2126 = vpop.f32.mrf.mxu0
    %v2127 = vadd.f32 0.0, %v2126
    %2128 = vdwg.mxu0
    %v2129 = vpack.c.bf16 %v2092, %v2090
    %v2130 = vpack.c.bf16 %v2097, %v2095
    %v2131 = vpack.c.bf16 %v2102, %v2100
    %v2132 = vpack.c.bf16 %v2107, %v2105
    %v2133 = vpack.c.bf16 %v2112, %v2110
    %v2134 = vpack.c.bf16 %v2117, %v2115
    %v2135 = vpack.c.bf16 %v2122, %v2120
    %v2136 = vpack.c.bf16 %v2127, %v2125
    %s2137 = scalar_lea.vmem %s5, 256
    %v2138 = vld [vmem:[%s2137] sm:$0xf]
    %v2139 = vld [vmem:[%s2137 + $0x4] sm:$0xf]
    %v2140 = vld [vmem:[%s2137 + $0x8] sm:$0xf]
    %v2141 = vld [vmem:[%s2137 + $0xc] sm:$0xf]
    %v2142 = vld [vmem:[%s2137 + $0x10] sm:$0xf]
    %v2143 = vld [vmem:[%s2137 + $0x14] sm:$0xf]
    %v2144 = vld [vmem:[%s2137 + $0x18] sm:$0xf]
    %v2145 = vld [vmem:[%s2137 + $0x1c] sm:$0xf]
    %v2146 = vld [vmem:[%s2137 + $0x20] sm:$0xf]
    %v2147 = vld [vmem:[%s2137 + $0x24] sm:$0xf]
    %v2148 = vld [vmem:[%s2137 + $0x28] sm:$0xf]
    %v2149 = vld [vmem:[%s2137 + $0x2c] sm:$0xf]
    %v2150 = vld [vmem:[%s2137 + $0x30] sm:$0xf]
    %v2151 = vld [vmem:[%s2137 + $0x34] sm:$0xf]
    %v2152 = vld [vmem:[%s2137 + $0x38] sm:$0xf]
    %v2153 = vld [vmem:[%s2137 + $0x3c] sm:$0xf]
    %v2170 = vunpack.c.l.b16 %v2138
    %v2171 = vunpack.c.l.b16 %v2139
    %v2172 = vunpack.c.l.b16 %v2140
    %v2173 = vunpack.c.l.b16 %v2141
    %v2174 = vunpack.c.l.b16 %v2142
    %v2175 = vunpack.c.l.b16 %v2143
    %v2176 = vunpack.c.l.b16 %v2144
    %v2177 = vunpack.c.l.b16 %v2145
    %v2178 = vunpack.c.l.b16 %v2146
    %v2179 = vunpack.c.l.b16 %v2147
    %v2180 = vunpack.c.l.b16 %v2148
    %v2181 = vunpack.c.l.b16 %v2149
    %v2182 = vunpack.c.l.b16 %v2150
    %v2183 = vunpack.c.l.b16 %v2151
    %v2184 = vunpack.c.l.b16 %v2152
    %v2185 = vunpack.c.l.b16 %v2153
    %v2186 = vpack.c.b16 %v2171, %v2170
    %v2187 = vpack.c.b16 %v2173, %v2172
    %v2188 = vpack.c.b16 %v2175, %v2174
    %v2189 = vpack.c.b16 %v2177, %v2176
    %v2190 = vpack.c.b16 %v2179, %v2178
    %v2191 = vpack.c.b16 %v2181, %v2180
    %v2192 = vpack.c.b16 %v2183, %v2182
    %v2193 = vpack.c.b16 %v2185, %v2184
    %2202 = vmatpush.bf16.msra.mxu0 %v2193
    %2203 = vmatpush.bf16.msra.mxu0 %v2192
    %2204 = vmatpush.bf16.msra.mxu0 %v2191
    %2205 = vmatpush.bf16.msra.mxu0 %v2190
    %2206 = vmatpush.bf16.msra.mxu0 %v2189
    %2207 = vmatpush.bf16.msra.mxu0 %v2188
    %2208 = vmatpush.bf16.msra.mxu0 %v2187
    %2209 = vmatpush.bf16.msra.mxu0 %v2186
    %2210 = vmatmul.bf16.gmra.mxu0 %v2129
    %v2211 = vpop.f32.mrf.mxu0
    %v2212 = vadd.f32 0.0, %v2211
    %v2213 = vpop.f32.mrf.mxu0
    %v2214 = vadd.f32 0.0, %v2213
    %2215 = vmatmul.bf16.gmra.mxu0 %v2130
    %v2216 = vpop.f32.mrf.mxu0
    %v2217 = vadd.f32 0.0, %v2216
    %v2218 = vpop.f32.mrf.mxu0
    %v2219 = vadd.f32 0.0, %v2218
    %2220 = vmatmul.bf16.gmra.mxu0 %v2131
    %v2221 = vpop.f32.mrf.mxu0
    %v2222 = vadd.f32 0.0, %v2221
    %v2223 = vpop.f32.mrf.mxu0
    %v2224 = vadd.f32 0.0, %v2223
    %2225 = vmatmul.bf16.gmra.mxu0 %v2132
    %v2226 = vpop.f32.mrf.mxu0
    %v2227 = vadd.f32 0.0, %v2226
    %v2228 = vpop.f32.mrf.mxu0
    %v2229 = vadd.f32 0.0, %v2228
    %2230 = vmatmul.bf16.gmra.mxu0 %v2133
    %v2231 = vpop.f32.mrf.mxu0
    %v2232 = vadd.f32 0.0, %v2231
    %v2233 = vpop.f32.mrf.mxu0
    %v2234 = vadd.f32 0.0, %v2233
    %2235 = vmatmul.bf16.gmra.mxu0 %v2134
    %v2236 = vpop.f32.mrf.mxu0
    %v2237 = vadd.f32 0.0, %v2236
    %v2238 = vpop.f32.mrf.mxu0
    %v2239 = vadd.f32 0.0, %v2238
    %2240 = vmatmul.bf16.gmra.mxu0 %v2135
    %v2241 = vpop.f32.mrf.mxu0
    %v2242 = vadd.f32 0.0, %v2241
    %v2243 = vpop.f32.mrf.mxu0
    %v2244 = vadd.f32 0.0, %v2243
    %2245 = vmatmul.bf16.gmra.mxu0 %v2136
    %v2246 = vpop.f32.mrf.mxu0
    %v2247 = vadd.f32 0.0, %v2246
    %v2248 = vpop.f32.mrf.mxu0
    %v2249 = vadd.f32 0.0, %v2248
    %2250 = vdwg.mxu0
    %v2251 = vadd.f32 %v1999, %v2212
    %v2252 = vadd.f32 %v2000, %v2214
    %v2253 = vadd.f32 %v2001, %v2217
    %v2254 = vadd.f32 %v2002, %v2219
    %v2255 = vadd.f32 %v2003, %v2222
    %v2256 = vadd.f32 %v2004, %v2224
    %v2257 = vadd.f32 %v2005, %v2227
    %v2258 = vadd.f32 %v2006, %v2229
    %v2259 = vadd.f32 %v2007, %v2232
    %v2260 = vadd.f32 %v2008, %v2234
    %v2261 = vadd.f32 %v2009, %v2237
    %v2262 = vadd.f32 %v2010, %v2239
    %v2263 = vadd.f32 %v2011, %v2242
    %v2264 = vadd.f32 %v2012, %v2244
    %v2265 = vadd.f32 %v2013, %v2247
    %v2266 = vadd.f32 %v2014, %v2249
    %s2267 = scalar_lea.vmem %s4, 320
    %v2268 = vld [vmem:[%s2267] sm:$0xf]
    %v2269 = vld [vmem:[%s2267 + $0x4] sm:$0xf]
    %v2270 = vld [vmem:[%s2267 + $0x8] sm:$0xf]
    %v2271 = vld [vmem:[%s2267 + $0xc] sm:$0xf]
    %v2272 = vld [vmem:[%s2267 + $0x10] sm:$0xf]
    %v2273 = vld [vmem:[%s2267 + $0x14] sm:$0xf]
    %v2274 = vld [vmem:[%s2267 + $0x18] sm:$0xf]
    %v2275 = vld [vmem:[%s2267 + $0x1c] sm:$0xf]
    %v2276 = vld [vmem:[%s2267 + $0x20] sm:$0xf]
    %v2277 = vld [vmem:[%s2267 + $0x24] sm:$0xf]
    %v2278 = vld [vmem:[%s2267 + $0x28] sm:$0xf]
    %v2279 = vld [vmem:[%s2267 + $0x2c] sm:$0xf]
    %v2280 = vld [vmem:[%s2267 + $0x30] sm:$0xf]
    %v2281 = vld [vmem:[%s2267 + $0x34] sm:$0xf]
    %v2282 = vld [vmem:[%s2267 + $0x38] sm:$0xf]
    %v2283 = vld [vmem:[%s2267 + $0x3c] sm:$0xf]
    %v2300 = vunpack.c.l.b16 %v2268
    %v2301 = vunpack.c.l.b16 %v2269
    %v2302 = vunpack.c.l.b16 %v2270
    %v2303 = vunpack.c.l.b16 %v2271
    %v2304 = vunpack.c.l.b16 %v2272
    %v2305 = vunpack.c.l.b16 %v2273
    %v2306 = vunpack.c.l.b16 %v2274
    %v2307 = vunpack.c.l.b16 %v2275
    %v2308 = vunpack.c.l.b16 %v2276
    %v2309 = vunpack.c.l.b16 %v2277
    %v2310 = vunpack.c.l.b16 %v2278
    %v2311 = vunpack.c.l.b16 %v2279
    %v2312 = vunpack.c.l.b16 %v2280
    %v2313 = vunpack.c.l.b16 %v2281
    %v2314 = vunpack.c.l.b16 %v2282
    %v2315 = vunpack.c.l.b16 %v2283
    %v2316 = vpack.c.b16 %v2301, %v2300
    %v2317 = vpack.c.b16 %v2303, %v2302
    %v2318 = vpack.c.b16 %v2305, %v2304
    %v2319 = vpack.c.b16 %v2307, %v2306
    %v2320 = vpack.c.b16 %v2309, %v2308
    %v2321 = vpack.c.b16 %v2311, %v2310
    %v2322 = vpack.c.b16 %v2313, %v2312
    %v2323 = vpack.c.b16 %v2315, %v2314
    %2332 = vmatpush.bf16.msra.mxu0 %v1040
    %2333 = vmatpush.bf16.msra.mxu0 %v1039
    %2334 = vmatpush.bf16.msra.mxu0 %v1038
    %2335 = vmatpush.bf16.msra.mxu0 %v1037
    %2336 = vmatpush.bf16.msra.mxu0 %v1036
    %2337 = vmatpush.bf16.msra.mxu0 %v1035
    %2338 = vmatpush.bf16.msra.mxu0 %v1034
    %2339 = vmatpush.bf16.msra.mxu0 %v1033
    %2340 = vmatmul.bf16.gmra.mxu0 %v2316
    %v2341 = vpop.f32.mrf.mxu0
    %v2342 = vadd.f32 0.0, %v2341
    %v2343 = vpop.f32.mrf.mxu0
    %v2344 = vadd.f32 0.0, %v2343
    %2345 = vmatmul.bf16.gmra.mxu0 %v2317
    %v2346 = vpop.f32.mrf.mxu0
    %v2347 = vadd.f32 0.0, %v2346
    %v2348 = vpop.f32.mrf.mxu0
    %v2349 = vadd.f32 0.0, %v2348
    %2350 = vmatmul.bf16.gmra.mxu0 %v2318
    %v2351 = vpop.f32.mrf.mxu0
    %v2352 = vadd.f32 0.0, %v2351
    %v2353 = vpop.f32.mrf.mxu0
    %v2354 = vadd.f32 0.0, %v2353
    %2355 = vmatmul.bf16.gmra.mxu0 %v2319
    %v2356 = vpop.f32.mrf.mxu0
    %v2357 = vadd.f32 0.0, %v2356
    %v2358 = vpop.f32.mrf.mxu0
    %v2359 = vadd.f32 0.0, %v2358
    %2360 = vmatmul.bf16.gmra.mxu0 %v2320
    %v2361 = vpop.f32.mrf.mxu0
    %v2362 = vadd.f32 0.0, %v2361
    %v2363 = vpop.f32.mrf.mxu0
    %v2364 = vadd.f32 0.0, %v2363
    %2365 = vmatmul.bf16.gmra.mxu0 %v2321
    %v2366 = vpop.f32.mrf.mxu0
    %v2367 = vadd.f32 0.0, %v2366
    %v2368 = vpop.f32.mrf.mxu0
    %v2369 = vadd.f32 0.0, %v2368
    %2370 = vmatmul.bf16.gmra.mxu0 %v2322
    %v2371 = vpop.f32.mrf.mxu0
    %v2372 = vadd.f32 0.0, %v2371
    %v2373 = vpop.f32.mrf.mxu0
    %v2374 = vadd.f32 0.0, %v2373
    %2375 = vmatmul.bf16.gmra.mxu0 %v2323
    %v2376 = vpop.f32.mrf.mxu0
    %v2377 = vadd.f32 0.0, %v2376
    %v2378 = vpop.f32.mrf.mxu0
    %v2379 = vadd.f32 0.0, %v2378
    %2380 = vdwg.mxu0
    %v2381 = vpack.c.bf16 %v2344, %v2342
    %v2382 = vpack.c.bf16 %v2349, %v2347
    %v2383 = vpack.c.bf16 %v2354, %v2352
    %v2384 = vpack.c.bf16 %v2359, %v2357
    %v2385 = vpack.c.bf16 %v2364, %v2362
    %v2386 = vpack.c.bf16 %v2369, %v2367
    %v2387 = vpack.c.bf16 %v2374, %v2372
    %v2388 = vpack.c.bf16 %v2379, %v2377
    %s2389 = scalar_lea.vmem %s5, 320
    %v2390 = vld [vmem:[%s2389] sm:$0xf]
    %v2391 = vld [vmem:[%s2389 + $0x4] sm:$0xf]
    %v2392 = vld [vmem:[%s2389 + $0x8] sm:$0xf]
    %v2393 = vld [vmem:[%s2389 + $0xc] sm:$0xf]
    %v2394 = vld [vmem:[%s2389 + $0x10] sm:$0xf]
    %v2395 = vld [vmem:[%s2389 + $0x14] sm:$0xf]
    %v2396 = vld [vmem:[%s2389 + $0x18] sm:$0xf]
    %v2397 = vld [vmem:[%s2389 + $0x1c] sm:$0xf]
    %v2398 = vld [vmem:[%s2389 + $0x20] sm:$0xf]
    %v2399 = vld [vmem:[%s2389 + $0x24] sm:$0xf]
    %v2400 = vld [vmem:[%s2389 + $0x28] sm:$0xf]
    %v2401 = vld [vmem:[%s2389 + $0x2c] sm:$0xf]
    %v2402 = vld [vmem:[%s2389 + $0x30] sm:$0xf]
    %v2403 = vld [vmem:[%s2389 + $0x34] sm:$0xf]
    %v2404 = vld [vmem:[%s2389 + $0x38] sm:$0xf]
    %v2405 = vld [vmem:[%s2389 + $0x3c] sm:$0xf]
    %v2422 = vunpack.c.l.b16 %v2390
    %v2423 = vunpack.c.l.b16 %v2391
    %v2424 = vunpack.c.l.b16 %v2392
    %v2425 = vunpack.c.l.b16 %v2393
    %v2426 = vunpack.c.l.b16 %v2394
    %v2427 = vunpack.c.l.b16 %v2395
    %v2428 = vunpack.c.l.b16 %v2396
    %v2429 = vunpack.c.l.b16 %v2397
    %v2430 = vunpack.c.l.b16 %v2398
    %v2431 = vunpack.c.l.b16 %v2399
    %v2432 = vunpack.c.l.b16 %v2400
    %v2433 = vunpack.c.l.b16 %v2401
    %v2434 = vunpack.c.l.b16 %v2402
    %v2435 = vunpack.c.l.b16 %v2403
    %v2436 = vunpack.c.l.b16 %v2404
    %v2437 = vunpack.c.l.b16 %v2405
    %v2438 = vpack.c.b16 %v2423, %v2422
    %v2439 = vpack.c.b16 %v2425, %v2424
    %v2440 = vpack.c.b16 %v2427, %v2426
    %v2441 = vpack.c.b16 %v2429, %v2428
    %v2442 = vpack.c.b16 %v2431, %v2430
    %v2443 = vpack.c.b16 %v2433, %v2432
    %v2444 = vpack.c.b16 %v2435, %v2434
    %v2445 = vpack.c.b16 %v2437, %v2436
    %2454 = vmatpush.bf16.msra.mxu0 %v2445
    %2455 = vmatpush.bf16.msra.mxu0 %v2444
    %2456 = vmatpush.bf16.msra.mxu0 %v2443
    %2457 = vmatpush.bf16.msra.mxu0 %v2442
    %2458 = vmatpush.bf16.msra.mxu0 %v2441
    %2459 = vmatpush.bf16.msra.mxu0 %v2440
    %2460 = vmatpush.bf16.msra.mxu0 %v2439
    %2461 = vmatpush.bf16.msra.mxu0 %v2438
    %2462 = vmatmul.bf16.gmra.mxu0 %v2381
    %v2463 = vpop.f32.mrf.mxu0
    %v2464 = vadd.f32 0.0, %v2463
    %v2465 = vpop.f32.mrf.mxu0
    %v2466 = vadd.f32 0.0, %v2465
    %2467 = vmatmul.bf16.gmra.mxu0 %v2382
    %v2468 = vpop.f32.mrf.mxu0
    %v2469 = vadd.f32 0.0, %v2468
    %v2470 = vpop.f32.mrf.mxu0
    %v2471 = vadd.f32 0.0, %v2470
    %2472 = vmatmul.bf16.gmra.mxu0 %v2383
    %v2473 = vpop.f32.mrf.mxu0
    %v2474 = vadd.f32 0.0, %v2473
    %v2475 = vpop.f32.mrf.mxu0
    %v2476 = vadd.f32 0.0, %v2475
    %2477 = vmatmul.bf16.gmra.mxu0 %v2384
    %v2478 = vpop.f32.mrf.mxu0
    %v2479 = vadd.f32 0.0, %v2478
    %v2480 = vpop.f32.mrf.mxu0
    %v2481 = vadd.f32 0.0, %v2480
    %2482 = vmatmul.bf16.gmra.mxu0 %v2385
    %v2483 = vpop.f32.mrf.mxu0
    %v2484 = vadd.f32 0.0, %v2483
    %v2485 = vpop.f32.mrf.mxu0
    %v2486 = vadd.f32 0.0, %v2485
    %2487 = vmatmul.bf16.gmra.mxu0 %v2386
    %v2488 = vpop.f32.mrf.mxu0
    %v2489 = vadd.f32 0.0, %v2488
    %v2490 = vpop.f32.mrf.mxu0
    %v2491 = vadd.f32 0.0, %v2490
    %2492 = vmatmul.bf16.gmra.mxu0 %v2387
    %v2493 = vpop.f32.mrf.mxu0
    %v2494 = vadd.f32 0.0, %v2493
    %v2495 = vpop.f32.mrf.mxu0
    %v2496 = vadd.f32 0.0, %v2495
    %2497 = vmatmul.bf16.gmra.mxu0 %v2388
    %v2498 = vpop.f32.mrf.mxu0
    %v2499 = vadd.f32 0.0, %v2498
    %v2500 = vpop.f32.mrf.mxu0
    %v2501 = vadd.f32 0.0, %v2500
    %2502 = vdwg.mxu0
    %v2503 = vadd.f32 %v2251, %v2464
    %v2504 = vadd.f32 %v2252, %v2466
    %v2505 = vadd.f32 %v2253, %v2469
    %v2506 = vadd.f32 %v2254, %v2471
    %v2507 = vadd.f32 %v2255, %v2474
    %v2508 = vadd.f32 %v2256, %v2476
    %v2509 = vadd.f32 %v2257, %v2479
    %v2510 = vadd.f32 %v2258, %v2481
    %v2511 = vadd.f32 %v2259, %v2484
    %v2512 = vadd.f32 %v2260, %v2486
    %v2513 = vadd.f32 %v2261, %v2489
    %v2514 = vadd.f32 %v2262, %v2491
    %v2515 = vadd.f32 %v2263, %v2494
    %v2516 = vadd.f32 %v2264, %v2496
    %v2517 = vadd.f32 %v2265, %v2499
    %v2518 = vadd.f32 %v2266, %v2501
    %s2519 = scalar_lea.vmem %s4, 384
    %v2520 = vld [vmem:[%s2519] sm:$0xf]
    %v2521 = vld [vmem:[%s2519 + $0x4] sm:$0xf]
    %v2522 = vld [vmem:[%s2519 + $0x8] sm:$0xf]
    %v2523 = vld [vmem:[%s2519 + $0xc] sm:$0xf]
    %v2524 = vld [vmem:[%s2519 + $0x10] sm:$0xf]
    %v2525 = vld [vmem:[%s2519 + $0x14] sm:$0xf]
    %v2526 = vld [vmem:[%s2519 + $0x18] sm:$0xf]
    %v2527 = vld [vmem:[%s2519 + $0x1c] sm:$0xf]
    %v2528 = vld [vmem:[%s2519 + $0x20] sm:$0xf]
    %v2529 = vld [vmem:[%s2519 + $0x24] sm:$0xf]
    %v2530 = vld [vmem:[%s2519 + $0x28] sm:$0xf]
    %v2531 = vld [vmem:[%s2519 + $0x2c] sm:$0xf]
    %v2532 = vld [vmem:[%s2519 + $0x30] sm:$0xf]
    %v2533 = vld [vmem:[%s2519 + $0x34] sm:$0xf]
    %v2534 = vld [vmem:[%s2519 + $0x38] sm:$0xf]
    %v2535 = vld [vmem:[%s2519 + $0x3c] sm:$0xf]
    %v2552 = vunpack.c.l.b16 %v2520
    %v2553 = vunpack.c.l.b16 %v2521
    %v2554 = vunpack.c.l.b16 %v2522
    %v2555 = vunpack.c.l.b16 %v2523
    %v2556 = vunpack.c.l.b16 %v2524
    %v2557 = vunpack.c.l.b16 %v2525
    %v2558 = vunpack.c.l.b16 %v2526
    %v2559 = vunpack.c.l.b16 %v2527
    %v2560 = vunpack.c.l.b16 %v2528
    %v2561 = vunpack.c.l.b16 %v2529
    %v2562 = vunpack.c.l.b16 %v2530
    %v2563 = vunpack.c.l.b16 %v2531
    %v2564 = vunpack.c.l.b16 %v2532
    %v2565 = vunpack.c.l.b16 %v2533
    %v2566 = vunpack.c.l.b16 %v2534
    %v2567 = vunpack.c.l.b16 %v2535
    %v2568 = vpack.c.b16 %v2553, %v2552
    %v2569 = vpack.c.b16 %v2555, %v2554
    %v2570 = vpack.c.b16 %v2557, %v2556
    %v2571 = vpack.c.b16 %v2559, %v2558
    %v2572 = vpack.c.b16 %v2561, %v2560
    %v2573 = vpack.c.b16 %v2563, %v2562
    %v2574 = vpack.c.b16 %v2565, %v2564
    %v2575 = vpack.c.b16 %v2567, %v2566
    %2584 = vmatpush.bf16.msra.mxu0 %v1040
    %2585 = vmatpush.bf16.msra.mxu0 %v1039
    %2586 = vmatpush.bf16.msra.mxu0 %v1038
    %2587 = vmatpush.bf16.msra.mxu0 %v1037
    %2588 = vmatpush.bf16.msra.mxu0 %v1036
    %2589 = vmatpush.bf16.msra.mxu0 %v1035
    %2590 = vmatpush.bf16.msra.mxu0 %v1034
    %2591 = vmatpush.bf16.msra.mxu0 %v1033
    %2592 = vmatmul.bf16.gmra.mxu0 %v2568
    %v2593 = vpop.f32.mrf.mxu0
    %v2594 = vadd.f32 0.0, %v2593
    %v2595 = vpop.f32.mrf.mxu0
    %v2596 = vadd.f32 0.0, %v2595
    %2597 = vmatmul.bf16.gmra.mxu0 %v2569
    %v2598 = vpop.f32.mrf.mxu0
    %v2599 = vadd.f32 0.0, %v2598
    %v2600 = vpop.f32.mrf.mxu0
    %v2601 = vadd.f32 0.0, %v2600
    %2602 = vmatmul.bf16.gmra.mxu0 %v2570
    %v2603 = vpop.f32.mrf.mxu0
    %v2604 = vadd.f32 0.0, %v2603
    %v2605 = vpop.f32.mrf.mxu0
    %v2606 = vadd.f32 0.0, %v2605
    %2607 = vmatmul.bf16.gmra.mxu0 %v2571
    %v2608 = vpop.f32.mrf.mxu0
    %v2609 = vadd.f32 0.0, %v2608
    %v2610 = vpop.f32.mrf.mxu0
    %v2611 = vadd.f32 0.0, %v2610
    %2612 = vmatmul.bf16.gmra.mxu0 %v2572
    %v2613 = vpop.f32.mrf.mxu0
    %v2614 = vadd.f32 0.0, %v2613
    %v2615 = vpop.f32.mrf.mxu0
    %v2616 = vadd.f32 0.0, %v2615
    %2617 = vmatmul.bf16.gmra.mxu0 %v2573
    %v2618 = vpop.f32.mrf.mxu0
    %v2619 = vadd.f32 0.0, %v2618
    %v2620 = vpop.f32.mrf.mxu0
    %v2621 = vadd.f32 0.0, %v2620
    %2622 = vmatmul.bf16.gmra.mxu0 %v2574
    %v2623 = vpop.f32.mrf.mxu0
    %v2624 = vadd.f32 0.0, %v2623
    %v2625 = vpop.f32.mrf.mxu0
    %v2626 = vadd.f32 0.0, %v2625
    %2627 = vmatmul.bf16.gmra.mxu0 %v2575
    %v2628 = vpop.f32.mrf.mxu0
    %v2629 = vadd.f32 0.0, %v2628
    %v2630 = vpop.f32.mrf.mxu0
    %v2631 = vadd.f32 0.0, %v2630
    %2632 = vdwg.mxu0
    %v2633 = vpack.c.bf16 %v2596, %v2594
    %v2634 = vpack.c.bf16 %v2601, %v2599
    %v2635 = vpack.c.bf16 %v2606, %v2604
    %v2636 = vpack.c.bf16 %v2611, %v2609
    %v2637 = vpack.c.bf16 %v2616, %v2614
    %v2638 = vpack.c.bf16 %v2621, %v2619
    %v2639 = vpack.c.bf16 %v2626, %v2624
    %v2640 = vpack.c.bf16 %v2631, %v2629
    %s2641 = scalar_lea.vmem %s5, 384
    %v2642 = vld [vmem:[%s2641] sm:$0xf]
    %v2643 = vld [vmem:[%s2641 + $0x4] sm:$0xf]
    %v2644 = vld [vmem:[%s2641 + $0x8] sm:$0xf]
    %v2645 = vld [vmem:[%s2641 + $0xc] sm:$0xf]
    %v2646 = vld [vmem:[%s2641 + $0x10] sm:$0xf]
    %v2647 = vld [vmem:[%s2641 + $0x14] sm:$0xf]
    %v2648 = vld [vmem:[%s2641 + $0x18] sm:$0xf]
    %v2649 = vld [vmem:[%s2641 + $0x1c] sm:$0xf]
    %v2650 = vld [vmem:[%s2641 + $0x20] sm:$0xf]
    %v2651 = vld [vmem:[%s2641 + $0x24] sm:$0xf]
    %v2652 = vld [vmem:[%s2641 + $0x28] sm:$0xf]
    %v2653 = vld [vmem:[%s2641 + $0x2c] sm:$0xf]
    %v2654 = vld [vmem:[%s2641 + $0x30] sm:$0xf]
    %v2655 = vld [vmem:[%s2641 + $0x34] sm:$0xf]
    %v2656 = vld [vmem:[%s2641 + $0x38] sm:$0xf]
    %v2657 = vld [vmem:[%s2641 + $0x3c] sm:$0xf]
    %v2674 = vunpack.c.l.b16 %v2642
    %v2675 = vunpack.c.l.b16 %v2643
    %v2676 = vunpack.c.l.b16 %v2644
    %v2677 = vunpack.c.l.b16 %v2645
    %v2678 = vunpack.c.l.b16 %v2646
    %v2679 = vunpack.c.l.b16 %v2647
    %v2680 = vunpack.c.l.b16 %v2648
    %v2681 = vunpack.c.l.b16 %v2649
    %v2682 = vunpack.c.l.b16 %v2650
    %v2683 = vunpack.c.l.b16 %v2651
    %v2684 = vunpack.c.l.b16 %v2652
    %v2685 = vunpack.c.l.b16 %v2653
    %v2686 = vunpack.c.l.b16 %v2654
    %v2687 = vunpack.c.l.b16 %v2655
    %v2688 = vunpack.c.l.b16 %v2656
    %v2689 = vunpack.c.l.b16 %v2657
    %v2690 = vpack.c.b16 %v2675, %v2674
    %v2691 = vpack.c.b16 %v2677, %v2676
    %v2692 = vpack.c.b16 %v2679, %v2678
    %v2693 = vpack.c.b16 %v2681, %v2680
    %v2694 = vpack.c.b16 %v2683, %v2682
    %v2695 = vpack.c.b16 %v2685, %v2684
    %v2696 = vpack.c.b16 %v2687, %v2686
    %v2697 = vpack.c.b16 %v2689, %v2688
    %2706 = vmatpush.bf16.msra.mxu0 %v2697
    %2707 = vmatpush.bf16.msra.mxu0 %v2696
    %2708 = vmatpush.bf16.msra.mxu0 %v2695
    %2709 = vmatpush.bf16.msra.mxu0 %v2694
    %2710 = vmatpush.bf16.msra.mxu0 %v2693
    %2711 = vmatpush.bf16.msra.mxu0 %v2692
    %2712 = vmatpush.bf16.msra.mxu0 %v2691
    %2713 = vmatpush.bf16.msra.mxu0 %v2690
    %2714 = vmatmul.bf16.gmra.mxu0 %v2633
    %v2715 = vpop.f32.mrf.mxu0
    %v2716 = vadd.f32 0.0, %v2715
    %v2717 = vpop.f32.mrf.mxu0
    %v2718 = vadd.f32 0.0, %v2717
    %2719 = vmatmul.bf16.gmra.mxu0 %v2634
    %v2720 = vpop.f32.mrf.mxu0
    %v2721 = vadd.f32 0.0, %v2720
    %v2722 = vpop.f32.mrf.mxu0
    %v2723 = vadd.f32 0.0, %v2722
    %2724 = vmatmul.bf16.gmra.mxu0 %v2635
    %v2725 = vpop.f32.mrf.mxu0
    %v2726 = vadd.f32 0.0, %v2725
    %v2727 = vpop.f32.mrf.mxu0
    %v2728 = vadd.f32 0.0, %v2727
    %2729 = vmatmul.bf16.gmra.mxu0 %v2636
    %v2730 = vpop.f32.mrf.mxu0
    %v2731 = vadd.f32 0.0, %v2730
    %v2732 = vpop.f32.mrf.mxu0
    %v2733 = vadd.f32 0.0, %v2732
    %2734 = vmatmul.bf16.gmra.mxu0 %v2637
    %v2735 = vpop.f32.mrf.mxu0
    %v2736 = vadd.f32 0.0, %v2735
    %v2737 = vpop.f32.mrf.mxu0
    %v2738 = vadd.f32 0.0, %v2737
    %2739 = vmatmul.bf16.gmra.mxu0 %v2638
    %v2740 = vpop.f32.mrf.mxu0
    %v2741 = vadd.f32 0.0, %v2740
    %v2742 = vpop.f32.mrf.mxu0
    %v2743 = vadd.f32 0.0, %v2742
    %2744 = vmatmul.bf16.gmra.mxu0 %v2639
    %v2745 = vpop.f32.mrf.mxu0
    %v2746 = vadd.f32 0.0, %v2745
    %v2747 = vpop.f32.mrf.mxu0
    %v2748 = vadd.f32 0.0, %v2747
    %2749 = vmatmul.bf16.gmra.mxu0 %v2640
    %v2750 = vpop.f32.mrf.mxu0
    %v2751 = vadd.f32 0.0, %v2750
    %v2752 = vpop.f32.mrf.mxu0
    %v2753 = vadd.f32 0.0, %v2752
    %2754 = vdwg.mxu0
    %v2755 = vadd.f32 %v2503, %v2716
    %v2756 = vadd.f32 %v2504, %v2718
    %v2757 = vadd.f32 %v2505, %v2721
    %v2758 = vadd.f32 %v2506, %v2723
    %v2759 = vadd.f32 %v2507, %v2726
    %v2760 = vadd.f32 %v2508, %v2728
    %v2761 = vadd.f32 %v2509, %v2731
    %v2762 = vadd.f32 %v2510, %v2733
    %v2763 = vadd.f32 %v2511, %v2736
    %v2764 = vadd.f32 %v2512, %v2738
    %v2765 = vadd.f32 %v2513, %v2741
    %v2766 = vadd.f32 %v2514, %v2743
    %v2767 = vadd.f32 %v2515, %v2746
    %v2768 = vadd.f32 %v2516, %v2748
    %v2769 = vadd.f32 %v2517, %v2751
    %v2770 = vadd.f32 %v2518, %v2753
    %s2771 = scalar_lea.vmem %s4, 448
    %v2772 = vld [vmem:[%s2771] sm:$0xf]
    %v2773 = vld [vmem:[%s2771 + $0x4] sm:$0xf]
    %v2774 = vld [vmem:[%s2771 + $0x8] sm:$0xf]
    %v2775 = vld [vmem:[%s2771 + $0xc] sm:$0xf]
    %v2776 = vld [vmem:[%s2771 + $0x10] sm:$0xf]
    %v2777 = vld [vmem:[%s2771 + $0x14] sm:$0xf]
    %v2778 = vld [vmem:[%s2771 + $0x18] sm:$0xf]
    %v2779 = vld [vmem:[%s2771 + $0x1c] sm:$0xf]
    %v2780 = vld [vmem:[%s2771 + $0x20] sm:$0xf]
    %v2781 = vld [vmem:[%s2771 + $0x24] sm:$0xf]
    %v2782 = vld [vmem:[%s2771 + $0x28] sm:$0xf]
    %v2783 = vld [vmem:[%s2771 + $0x2c] sm:$0xf]
    %v2784 = vld [vmem:[%s2771 + $0x30] sm:$0xf]
    %v2785 = vld [vmem:[%s2771 + $0x34] sm:$0xf]
    %v2786 = vld [vmem:[%s2771 + $0x38] sm:$0xf]
    %v2787 = vld [vmem:[%s2771 + $0x3c] sm:$0xf]
    %v2804 = vunpack.c.l.b16 %v2772
    %v2805 = vunpack.c.l.b16 %v2773
    %v2806 = vunpack.c.l.b16 %v2774
    %v2807 = vunpack.c.l.b16 %v2775
    %v2808 = vunpack.c.l.b16 %v2776
    %v2809 = vunpack.c.l.b16 %v2777
    %v2810 = vunpack.c.l.b16 %v2778
    %v2811 = vunpack.c.l.b16 %v2779
    %v2812 = vunpack.c.l.b16 %v2780
    %v2813 = vunpack.c.l.b16 %v2781
    %v2814 = vunpack.c.l.b16 %v2782
    %v2815 = vunpack.c.l.b16 %v2783
    %v2816 = vunpack.c.l.b16 %v2784
    %v2817 = vunpack.c.l.b16 %v2785
    %v2818 = vunpack.c.l.b16 %v2786
    %v2819 = vunpack.c.l.b16 %v2787
    %v2820 = vpack.c.b16 %v2805, %v2804
    %v2821 = vpack.c.b16 %v2807, %v2806
    %v2822 = vpack.c.b16 %v2809, %v2808
    %v2823 = vpack.c.b16 %v2811, %v2810
    %v2824 = vpack.c.b16 %v2813, %v2812
    %v2825 = vpack.c.b16 %v2815, %v2814
    %v2826 = vpack.c.b16 %v2817, %v2816
    %v2827 = vpack.c.b16 %v2819, %v2818
    %2836 = vmatpush.bf16.msra.mxu0 %v1040
    %2837 = vmatpush.bf16.msra.mxu0 %v1039
    %2838 = vmatpush.bf16.msra.mxu0 %v1038
    %2839 = vmatpush.bf16.msra.mxu0 %v1037
    %2840 = vmatpush.bf16.msra.mxu0 %v1036
    %2841 = vmatpush.bf16.msra.mxu0 %v1035
    %2842 = vmatpush.bf16.msra.mxu0 %v1034
    %2843 = vmatpush.bf16.msra.mxu0 %v1033
    %2844 = vmatmul.bf16.gmra.mxu0 %v2820
    %v2845 = vpop.f32.mrf.mxu0
    %v2846 = vadd.f32 0.0, %v2845
    %v2847 = vpop.f32.mrf.mxu0
    %v2848 = vadd.f32 0.0, %v2847
    %2849 = vmatmul.bf16.gmra.mxu0 %v2821
    %v2850 = vpop.f32.mrf.mxu0
    %v2851 = vadd.f32 0.0, %v2850
    %v2852 = vpop.f32.mrf.mxu0
    %v2853 = vadd.f32 0.0, %v2852
    %2854 = vmatmul.bf16.gmra.mxu0 %v2822
    %v2855 = vpop.f32.mrf.mxu0
    %v2856 = vadd.f32 0.0, %v2855
    %v2857 = vpop.f32.mrf.mxu0
    %v2858 = vadd.f32 0.0, %v2857
    %2859 = vmatmul.bf16.gmra.mxu0 %v2823
    %v2860 = vpop.f32.mrf.mxu0
    %v2861 = vadd.f32 0.0, %v2860
    %v2862 = vpop.f32.mrf.mxu0
    %v2863 = vadd.f32 0.0, %v2862
    %2864 = vmatmul.bf16.gmra.mxu0 %v2824
    %v2865 = vpop.f32.mrf.mxu0
    %v2866 = vadd.f32 0.0, %v2865
    %v2867 = vpop.f32.mrf.mxu0
    %v2868 = vadd.f32 0.0, %v2867
    %2869 = vmatmul.bf16.gmra.mxu0 %v2825
    %v2870 = vpop.f32.mrf.mxu0
    %v2871 = vadd.f32 0.0, %v2870
    %v2872 = vpop.f32.mrf.mxu0
    %v2873 = vadd.f32 0.0, %v2872
    %2874 = vmatmul.bf16.gmra.mxu0 %v2826
    %v2875 = vpop.f32.mrf.mxu0
    %v2876 = vadd.f32 0.0, %v2875
    %v2877 = vpop.f32.mrf.mxu0
    %v2878 = vadd.f32 0.0, %v2877
    %2879 = vmatmul.bf16.gmra.mxu0 %v2827
    %v2880 = vpop.f32.mrf.mxu0
    %v2881 = vadd.f32 0.0, %v2880
    %v2882 = vpop.f32.mrf.mxu0
    %v2883 = vadd.f32 0.0, %v2882
    %2884 = vdwg.mxu0
    %v2885 = vpack.c.bf16 %v2848, %v2846
    %v2886 = vpack.c.bf16 %v2853, %v2851
    %v2887 = vpack.c.bf16 %v2858, %v2856
    %v2888 = vpack.c.bf16 %v2863, %v2861
    %v2889 = vpack.c.bf16 %v2868, %v2866
    %v2890 = vpack.c.bf16 %v2873, %v2871
    %v2891 = vpack.c.bf16 %v2878, %v2876
    %v2892 = vpack.c.bf16 %v2883, %v2881
    %s2893 = scalar_lea.vmem %s5, 448
    %v2894 = vld [vmem:[%s2893] sm:$0xf]
    %v2895 = vld [vmem:[%s2893 + $0x4] sm:$0xf]
    %v2896 = vld [vmem:[%s2893 + $0x8] sm:$0xf]
    %v2897 = vld [vmem:[%s2893 + $0xc] sm:$0xf]
    %v2898 = vld [vmem:[%s2893 + $0x10] sm:$0xf]
    %v2899 = vld [vmem:[%s2893 + $0x14] sm:$0xf]
    %v2900 = vld [vmem:[%s2893 + $0x18] sm:$0xf]
    %v2901 = vld [vmem:[%s2893 + $0x1c] sm:$0xf]
    %v2902 = vld [vmem:[%s2893 + $0x20] sm:$0xf]
    %v2903 = vld [vmem:[%s2893 + $0x24] sm:$0xf]
    %v2904 = vld [vmem:[%s2893 + $0x28] sm:$0xf]
    %v2905 = vld [vmem:[%s2893 + $0x2c] sm:$0xf]
    %v2906 = vld [vmem:[%s2893 + $0x30] sm:$0xf]
    %v2907 = vld [vmem:[%s2893 + $0x34] sm:$0xf]
    %v2908 = vld [vmem:[%s2893 + $0x38] sm:$0xf]
    %v2909 = vld [vmem:[%s2893 + $0x3c] sm:$0xf]
    %v2926 = vunpack.c.l.b16 %v2894
    %v2927 = vunpack.c.l.b16 %v2895
    %v2928 = vunpack.c.l.b16 %v2896
    %v2929 = vunpack.c.l.b16 %v2897
    %v2930 = vunpack.c.l.b16 %v2898
    %v2931 = vunpack.c.l.b16 %v2899
    %v2932 = vunpack.c.l.b16 %v2900
    %v2933 = vunpack.c.l.b16 %v2901
    %v2934 = vunpack.c.l.b16 %v2902
    %v2935 = vunpack.c.l.b16 %v2903
    %v2936 = vunpack.c.l.b16 %v2904
    %v2937 = vunpack.c.l.b16 %v2905
    %v2938 = vunpack.c.l.b16 %v2906
    %v2939 = vunpack.c.l.b16 %v2907
    %v2940 = vunpack.c.l.b16 %v2908
    %v2941 = vunpack.c.l.b16 %v2909
    %v2942 = vpack.c.b16 %v2927, %v2926
    %v2943 = vpack.c.b16 %v2929, %v2928
    %v2944 = vpack.c.b16 %v2931, %v2930
    %v2945 = vpack.c.b16 %v2933, %v2932
    %v2946 = vpack.c.b16 %v2935, %v2934
    %v2947 = vpack.c.b16 %v2937, %v2936
    %v2948 = vpack.c.b16 %v2939, %v2938
    %v2949 = vpack.c.b16 %v2941, %v2940
    %2958 = vmatpush.bf16.msra.mxu0 %v2949
    %2959 = vmatpush.bf16.msra.mxu0 %v2948
    %2960 = vmatpush.bf16.msra.mxu0 %v2947
    %2961 = vmatpush.bf16.msra.mxu0 %v2946
    %2962 = vmatpush.bf16.msra.mxu0 %v2945
    %2963 = vmatpush.bf16.msra.mxu0 %v2944
    %2964 = vmatpush.bf16.msra.mxu0 %v2943
    %2965 = vmatpush.bf16.msra.mxu0 %v2942
    %2966 = vmatmul.bf16.gmra.mxu0 %v2885
    %v2967 = vpop.f32.mrf.mxu0
    %v2968 = vadd.f32 0.0, %v2967
    %v2969 = vpop.f32.mrf.mxu0
    %v2970 = vadd.f32 0.0, %v2969
    %2971 = vmatmul.bf16.gmra.mxu0 %v2886
    %v2972 = vpop.f32.mrf.mxu0
    %v2973 = vadd.f32 0.0, %v2972
    %v2974 = vpop.f32.mrf.mxu0
    %v2975 = vadd.f32 0.0, %v2974
    %2976 = vmatmul.bf16.gmra.mxu0 %v2887
    %v2977 = vpop.f32.mrf.mxu0
    %v2978 = vadd.f32 0.0, %v2977
    %v2979 = vpop.f32.mrf.mxu0
    %v2980 = vadd.f32 0.0, %v2979
    %2981 = vmatmul.bf16.gmra.mxu0 %v2888
    %v2982 = vpop.f32.mrf.mxu0
    %v2983 = vadd.f32 0.0, %v2982
    %v2984 = vpop.f32.mrf.mxu0
    %v2985 = vadd.f32 0.0, %v2984
    %2986 = vmatmul.bf16.gmra.mxu0 %v2889
    %v2987 = vpop.f32.mrf.mxu0
    %v2988 = vadd.f32 0.0, %v2987
    %v2989 = vpop.f32.mrf.mxu0
    %v2990 = vadd.f32 0.0, %v2989
    %2991 = vmatmul.bf16.gmra.mxu0 %v2890
    %v2992 = vpop.f32.mrf.mxu0
    %v2993 = vadd.f32 0.0, %v2992
    %v2994 = vpop.f32.mrf.mxu0
    %v2995 = vadd.f32 0.0, %v2994
    %2996 = vmatmul.bf16.gmra.mxu0 %v2891
    %v2997 = vpop.f32.mrf.mxu0
    %v2998 = vadd.f32 0.0, %v2997
    %v2999 = vpop.f32.mrf.mxu0
    %v3000 = vadd.f32 0.0, %v2999
    %3001 = vmatmul.bf16.gmra.mxu0 %v2892
    %v3002 = vpop.f32.mrf.mxu0
    %v3003 = vadd.f32 0.0, %v3002
    %v3004 = vpop.f32.mrf.mxu0
    %v3005 = vadd.f32 0.0, %v3004
    %3006 = vdwg.mxu0
    %v3007 = vadd.f32 %v2755, %v2968
    %v3008 = vadd.f32 %v2756, %v2970
    %v3009 = vadd.f32 %v2757, %v2973
    %v3010 = vadd.f32 %v2758, %v2975
    %v3011 = vadd.f32 %v2759, %v2978
    %v3012 = vadd.f32 %v2760, %v2980
    %v3013 = vadd.f32 %v2761, %v2983
    %v3014 = vadd.f32 %v2762, %v2985
    %v3015 = vadd.f32 %v2763, %v2988
    %v3016 = vadd.f32 %v2764, %v2990
    %v3017 = vadd.f32 %v2765, %v2993
    %v3018 = vadd.f32 %v2766, %v2995
    %v3019 = vadd.f32 %v2767, %v2998
    %v3020 = vadd.f32 %v2768, %v3000
    %v3021 = vadd.f32 %v2769, %v3003
    %v3022 = vadd.f32 %v2770, %v3005
    %s3023 = scalar_lea.vmem %s4, 512
    %v3024 = vld [vmem:[%s3023] sm:$0xf]
    %v3025 = vld [vmem:[%s3023 + $0x4] sm:$0xf]
    %v3026 = vld [vmem:[%s3023 + $0x8] sm:$0xf]
    %v3027 = vld [vmem:[%s3023 + $0xc] sm:$0xf]
    %v3028 = vld [vmem:[%s3023 + $0x10] sm:$0xf]
    %v3029 = vld [vmem:[%s3023 + $0x14] sm:$0xf]
    %v3030 = vld [vmem:[%s3023 + $0x18] sm:$0xf]
    %v3031 = vld [vmem:[%s3023 + $0x1c] sm:$0xf]
    %v3032 = vld [vmem:[%s3023 + $0x20] sm:$0xf]
    %v3033 = vld [vmem:[%s3023 + $0x24] sm:$0xf]
    %v3034 = vld [vmem:[%s3023 + $0x28] sm:$0xf]
    %v3035 = vld [vmem:[%s3023 + $0x2c] sm:$0xf]
    %v3036 = vld [vmem:[%s3023 + $0x30] sm:$0xf]
    %v3037 = vld [vmem:[%s3023 + $0x34] sm:$0xf]
    %v3038 = vld [vmem:[%s3023 + $0x38] sm:$0xf]
    %v3039 = vld [vmem:[%s3023 + $0x3c] sm:$0xf]
    %v3056 = vunpack.c.l.b16 %v3024
    %v3057 = vunpack.c.l.b16 %v3025
    %v3058 = vunpack.c.l.b16 %v3026
    %v3059 = vunpack.c.l.b16 %v3027
    %v3060 = vunpack.c.l.b16 %v3028
    %v3061 = vunpack.c.l.b16 %v3029
    %v3062 = vunpack.c.l.b16 %v3030
    %v3063 = vunpack.c.l.b16 %v3031
    %v3064 = vunpack.c.l.b16 %v3032
    %v3065 = vunpack.c.l.b16 %v3033
    %v3066 = vunpack.c.l.b16 %v3034
    %v3067 = vunpack.c.l.b16 %v3035
    %v3068 = vunpack.c.l.b16 %v3036
    %v3069 = vunpack.c.l.b16 %v3037
    %v3070 = vunpack.c.l.b16 %v3038
    %v3071 = vunpack.c.l.b16 %v3039
    %v3072 = vpack.c.b16 %v3057, %v3056
    %v3073 = vpack.c.b16 %v3059, %v3058
    %v3074 = vpack.c.b16 %v3061, %v3060
    %v3075 = vpack.c.b16 %v3063, %v3062
    %v3076 = vpack.c.b16 %v3065, %v3064
    %v3077 = vpack.c.b16 %v3067, %v3066
    %v3078 = vpack.c.b16 %v3069, %v3068
    %v3079 = vpack.c.b16 %v3071, %v3070
    %3088 = vmatpush.bf16.msra.mxu0 %v1040
    %3089 = vmatpush.bf16.msra.mxu0 %v1039
    %3090 = vmatpush.bf16.msra.mxu0 %v1038
    %3091 = vmatpush.bf16.msra.mxu0 %v1037
    %3092 = vmatpush.bf16.msra.mxu0 %v1036
    %3093 = vmatpush.bf16.msra.mxu0 %v1035
    %3094 = vmatpush.bf16.msra.mxu0 %v1034
    %3095 = vmatpush.bf16.msra.mxu0 %v1033
    %3096 = vmatmul.bf16.gmra.mxu0 %v3072
    %v3097 = vpop.f32.mrf.mxu0
    %v3098 = vadd.f32 0.0, %v3097
    %v3099 = vpop.f32.mrf.mxu0
    %v3100 = vadd.f32 0.0, %v3099
    %3101 = vmatmul.bf16.gmra.mxu0 %v3073
    %v3102 = vpop.f32.mrf.mxu0
    %v3103 = vadd.f32 0.0, %v3102
    %v3104 = vpop.f32.mrf.mxu0
    %v3105 = vadd.f32 0.0, %v3104
    %3106 = vmatmul.bf16.gmra.mxu0 %v3074
    %v3107 = vpop.f32.mrf.mxu0
    %v3108 = vadd.f32 0.0, %v3107
    %v3109 = vpop.f32.mrf.mxu0
    %v3110 = vadd.f32 0.0, %v3109
    %3111 = vmatmul.bf16.gmra.mxu0 %v3075
    %v3112 = vpop.f32.mrf.mxu0
    %v3113 = vadd.f32 0.0, %v3112
    %v3114 = vpop.f32.mrf.mxu0
    %v3115 = vadd.f32 0.0, %v3114
    %3116 = vmatmul.bf16.gmra.mxu0 %v3076
    %v3117 = vpop.f32.mrf.mxu0
    %v3118 = vadd.f32 0.0, %v3117
    %v3119 = vpop.f32.mrf.mxu0
    %v3120 = vadd.f32 0.0, %v3119
    %3121 = vmatmul.bf16.gmra.mxu0 %v3077
    %v3122 = vpop.f32.mrf.mxu0
    %v3123 = vadd.f32 0.0, %v3122
    %v3124 = vpop.f32.mrf.mxu0
    %v3125 = vadd.f32 0.0, %v3124
    %3126 = vmatmul.bf16.gmra.mxu0 %v3078
    %v3127 = vpop.f32.mrf.mxu0
    %v3128 = vadd.f32 0.0, %v3127
    %v3129 = vpop.f32.mrf.mxu0
    %v3130 = vadd.f32 0.0, %v3129
    %3131 = vmatmul.bf16.gmra.mxu0 %v3079
    %v3132 = vpop.f32.mrf.mxu0
    %v3133 = vadd.f32 0.0, %v3132
    %v3134 = vpop.f32.mrf.mxu0
    %v3135 = vadd.f32 0.0, %v3134
    %3136 = vdwg.mxu0
    %v3137 = vpack.c.bf16 %v3100, %v3098
    %v3138 = vpack.c.bf16 %v3105, %v3103
    %v3139 = vpack.c.bf16 %v3110, %v3108
    %v3140 = vpack.c.bf16 %v3115, %v3113
    %v3141 = vpack.c.bf16 %v3120, %v3118
    %v3142 = vpack.c.bf16 %v3125, %v3123
    %v3143 = vpack.c.bf16 %v3130, %v3128
    %v3144 = vpack.c.bf16 %v3135, %v3133
    %s3145 = scalar_lea.vmem %s5, 512
    %v3146 = vld [vmem:[%s3145] sm:$0xf]
    %v3147 = vld [vmem:[%s3145 + $0x4] sm:$0xf]
    %v3148 = vld [vmem:[%s3145 + $0x8] sm:$0xf]
    %v3149 = vld [vmem:[%s3145 + $0xc] sm:$0xf]
    %v3150 = vld [vmem:[%s3145 + $0x10] sm:$0xf]
    %v3151 = vld [vmem:[%s3145 + $0x14] sm:$0xf]
    %v3152 = vld [vmem:[%s3145 + $0x18] sm:$0xf]
    %v3153 = vld [vmem:[%s3145 + $0x1c] sm:$0xf]
    %v3154 = vld [vmem:[%s3145 + $0x20] sm:$0xf]
    %v3155 = vld [vmem:[%s3145 + $0x24] sm:$0xf]
    %v3156 = vld [vmem:[%s3145 + $0x28] sm:$0xf]
    %v3157 = vld [vmem:[%s3145 + $0x2c] sm:$0xf]
    %v3158 = vld [vmem:[%s3145 + $0x30] sm:$0xf]
    %v3159 = vld [vmem:[%s3145 + $0x34] sm:$0xf]
    %v3160 = vld [vmem:[%s3145 + $0x38] sm:$0xf]
    %v3161 = vld [vmem:[%s3145 + $0x3c] sm:$0xf]
    %v3178 = vunpack.c.l.b16 %v3146
    %v3179 = vunpack.c.l.b16 %v3147
    %v3180 = vunpack.c.l.b16 %v3148
    %v3181 = vunpack.c.l.b16 %v3149
    %v3182 = vunpack.c.l.b16 %v3150
    %v3183 = vunpack.c.l.b16 %v3151
    %v3184 = vunpack.c.l.b16 %v3152
    %v3185 = vunpack.c.l.b16 %v3153
    %v3186 = vunpack.c.l.b16 %v3154
    %v3187 = vunpack.c.l.b16 %v3155
    %v3188 = vunpack.c.l.b16 %v3156
    %v3189 = vunpack.c.l.b16 %v3157
    %v3190 = vunpack.c.l.b16 %v3158
    %v3191 = vunpack.c.l.b16 %v3159
    %v3192 = vunpack.c.l.b16 %v3160
    %v3193 = vunpack.c.l.b16 %v3161
    %v3194 = vpack.c.b16 %v3179, %v3178
    %v3195 = vpack.c.b16 %v3181, %v3180
    %v3196 = vpack.c.b16 %v3183, %v3182
    %v3197 = vpack.c.b16 %v3185, %v3184
    %v3198 = vpack.c.b16 %v3187, %v3186
    %v3199 = vpack.c.b16 %v3189, %v3188
    %v3200 = vpack.c.b16 %v3191, %v3190
    %v3201 = vpack.c.b16 %v3193, %v3192
    %3210 = vmatpush.bf16.msra.mxu0 %v3201
    %3211 = vmatpush.bf16.msra.mxu0 %v3200
    %3212 = vmatpush.bf16.msra.mxu0 %v3199
    %3213 = vmatpush.bf16.msra.mxu0 %v3198
    %3214 = vmatpush.bf16.msra.mxu0 %v3197
    %3215 = vmatpush.bf16.msra.mxu0 %v3196
    %3216 = vmatpush.bf16.msra.mxu0 %v3195
    %3217 = vmatpush.bf16.msra.mxu0 %v3194
    %3218 = vmatmul.bf16.gmra.mxu0 %v3137
    %v3219 = vpop.f32.mrf.mxu0
    %v3220 = vadd.f32 0.0, %v3219
    %v3221 = vpop.f32.mrf.mxu0
    %v3222 = vadd.f32 0.0, %v3221
    %3223 = vmatmul.bf16.gmra.mxu0 %v3138
    %v3224 = vpop.f32.mrf.mxu0
    %v3225 = vadd.f32 0.0, %v3224
    %v3226 = vpop.f32.mrf.mxu0
    %v3227 = vadd.f32 0.0, %v3226
    %3228 = vmatmul.bf16.gmra.mxu0 %v3139
    %v3229 = vpop.f32.mrf.mxu0
    %v3230 = vadd.f32 0.0, %v3229
    %v3231 = vpop.f32.mrf.mxu0
    %v3232 = vadd.f32 0.0, %v3231
    %3233 = vmatmul.bf16.gmra.mxu0 %v3140
    %v3234 = vpop.f32.mrf.mxu0
    %v3235 = vadd.f32 0.0, %v3234
    %v3236 = vpop.f32.mrf.mxu0
    %v3237 = vadd.f32 0.0, %v3236
    %3238 = vmatmul.bf16.gmra.mxu0 %v3141
    %v3239 = vpop.f32.mrf.mxu0
    %v3240 = vadd.f32 0.0, %v3239
    %v3241 = vpop.f32.mrf.mxu0
    %v3242 = vadd.f32 0.0, %v3241
    %3243 = vmatmul.bf16.gmra.mxu0 %v3142
    %v3244 = vpop.f32.mrf.mxu0
    %v3245 = vadd.f32 0.0, %v3244
    %v3246 = vpop.f32.mrf.mxu0
    %v3247 = vadd.f32 0.0, %v3246
    %3248 = vmatmul.bf16.gmra.mxu0 %v3143
    %v3249 = vpop.f32.mrf.mxu0
    %v3250 = vadd.f32 0.0, %v3249
    %v3251 = vpop.f32.mrf.mxu0
    %v3252 = vadd.f32 0.0, %v3251
    %3253 = vmatmul.bf16.gmra.mxu0 %v3144
    %v3254 = vpop.f32.mrf.mxu0
    %v3255 = vadd.f32 0.0, %v3254
    %v3256 = vpop.f32.mrf.mxu0
    %v3257 = vadd.f32 0.0, %v3256
    %3258 = vdwg.mxu0
    %v3259 = vadd.f32 %v3007, %v3220
    %v3260 = vadd.f32 %v3008, %v3222
    %v3261 = vadd.f32 %v3009, %v3225
    %v3262 = vadd.f32 %v3010, %v3227
    %v3263 = vadd.f32 %v3011, %v3230
    %v3264 = vadd.f32 %v3012, %v3232
    %v3265 = vadd.f32 %v3013, %v3235
    %v3266 = vadd.f32 %v3014, %v3237
    %v3267 = vadd.f32 %v3015, %v3240
    %v3268 = vadd.f32 %v3016, %v3242
    %v3269 = vadd.f32 %v3017, %v3245
    %v3270 = vadd.f32 %v3018, %v3247
    %v3271 = vadd.f32 %v3019, %v3250
    %v3272 = vadd.f32 %v3020, %v3252
    %v3273 = vadd.f32 %v3021, %v3255
    %v3274 = vadd.f32 %v3022, %v3257
    %v3275 = vld [vmem:[%s6] sm:$0x1]
    %v3277 = vperm.slane %v3275, 0
    %v3279 = vadd.f32 %v3259, %v3277
    %v3280 = vadd.f32 %v3260, %v3277
    %v3281 = vadd.f32 %v3261, %v3277
    %v3282 = vadd.f32 %v3262, %v3277
    %v3283 = vadd.f32 %v3263, %v3277
    %v3284 = vadd.f32 %v3264, %v3277
    %v3285 = vadd.f32 %v3265, %v3277
    %v3286 = vadd.f32 %v3266, %v3277
    %v3287 = vadd.f32 %v3267, %v3277
    %v3288 = vadd.f32 %v3268, %v3277
    %v3289 = vadd.f32 %v3269, %v3277
    %v3290 = vadd.f32 %v3270, %v3277
    %v3291 = vadd.f32 %v3271, %v3277
    %v3292 = vadd.f32 %v3272, %v3277
    %v3293 = vadd.f32 %v3273, %v3277
    %v3294 = vadd.f32 %v3274, %v3277
    %v3295 = vmax.f32 %v3279, 0.0
    %v3296 = vmax.f32 %v3280, 0.0
    %v3297 = vmax.f32 %v3281, 0.0
    %v3298 = vmax.f32 %v3282, 0.0
    %v3299 = vmax.f32 %v3283, 0.0
    %v3300 = vmax.f32 %v3284, 0.0
    %v3301 = vmax.f32 %v3285, 0.0
    %v3302 = vmax.f32 %v3286, 0.0
    %v3303 = vmax.f32 %v3287, 0.0
    %v3304 = vmax.f32 %v3288, 0.0
    %v3305 = vmax.f32 %v3289, 0.0
    %v3306 = vmax.f32 %v3290, 0.0
    %v3307 = vmax.f32 %v3291, 0.0
    %v3308 = vmax.f32 %v3292, 0.0
    %v3309 = vmax.f32 %v3293, 0.0
    %v3310 = vmax.f32 %v3294, 0.0
    %v3311 = vpack.c.bf16 %v3296, %v3295
    %v3312 = vpack.c.bf16 %v3298, %v3297
    %v3313 = vpack.c.bf16 %v3300, %v3299
    %v3314 = vpack.c.bf16 %v3302, %v3301
    %v3315 = vpack.c.bf16 %v3304, %v3303
    %v3316 = vpack.c.bf16 %v3306, %v3305
    %v3317 = vpack.c.bf16 %v3308, %v3307
    %v3318 = vpack.c.bf16 %v3310, %v3309
    %v3319 = vld [vmem:[%s7] sm:$0x1]
    %3320 = vmatpush.bf16.msra.mxu0 %v3318
    %3321 = vmatpush.bf16.msra.mxu0 %v3317
    %3322 = vmatpush.bf16.msra.mxu0 %v3316
    %3323 = vmatpush.bf16.msra.mxu0 %v3315
    %3324 = vmatpush.bf16.msra.mxu0 %v3314
    %3325 = vmatpush.bf16.msra.mxu0 %v3313
    %3326 = vmatpush.bf16.msra.mxu0 %v3312
    %3327 = vmatpush.bf16.msra.mxu0 %v3311
    %3328 = vmatmul.bf16.gmra.mxu0 %v3319
    %v3329 = vpop.f32.mrf.mxu0
    %v3330 = vadd.f32 0.0, %v3329
    %v3331 = vpop.f32.mrf.mxu0
    %3332 = vdwg.mxu0
    %3333 = vst [vmem:[#allocation2] sm:$0x3] %v3330
    %v3334 = vpack.c.bf16 %v3330, %v3330
    %v3335 = vld [vmem:[%s8] sm:$0xf]
    %v3336 = vld [vmem:[%s8 + $0x4] sm:$0xf]
    %v3337 = vld [vmem:[%s8 + $0x8] sm:$0xf]
    %v3338 = vld [vmem:[%s8 + $0xc] sm:$0xf]
    %v3339 = vld [vmem:[%s8 + $0x10] sm:$0xf]
    %v3340 = vld [vmem:[%s8 + $0x14] sm:$0xf]
    %v3341 = vld [vmem:[%s8 + $0x18] sm:$0xf]
    %v3342 = vld [vmem:[%s8 + $0x1c] sm:$0xf]
    %v3343 = vld [vmem:[%s8 + $0x20] sm:$0xf]
    %v3344 = vld [vmem:[%s8 + $0x24] sm:$0xf]
    %v3345 = vld [vmem:[%s8 + $0x28] sm:$0xf]
    %v3346 = vld [vmem:[%s8 + $0x2c] sm:$0xf]
    %v3347 = vld [vmem:[%s8 + $0x30] sm:$0xf]
    %v3348 = vld [vmem:[%s8 + $0x34] sm:$0xf]
    %v3349 = vld [vmem:[%s8 + $0x38] sm:$0xf]
    %v3350 = vld [vmem:[%s8 + $0x3c] sm:$0xf]
    %v3351 = vld [vmem:[%s9] sm:$0x1]
    %v3353 = vperm.slane %v3351, 0
    %v3371 = vunpack.c.l.b16 %v3335
    %v3372 = vunpack.c.l.b16 %v3336
    %v3373 = vunpack.c.l.b16 %v3337
    %v3374 = vunpack.c.l.b16 %v3338
    %v3375 = vunpack.c.l.b16 %v3339
    %v3376 = vunpack.c.l.b16 %v3340
    %v3377 = vunpack.c.l.b16 %v3341
    %v3378 = vunpack.c.l.b16 %v3342
    %v3379 = vunpack.c.l.b16 %v3343
    %v3380 = vunpack.c.l.b16 %v3344
    %v3381 = vunpack.c.l.b16 %v3345
    %v3382 = vunpack.c.l.b16 %v3346
    %v3383 = vunpack.c.l.b16 %v3347
    %v3384 = vunpack.c.l.b16 %v3348
    %v3385 = vunpack.c.l.b16 %v3349
    %v3386 = vunpack.c.l.b16 %v3350
    %v3387 = vpack.c.b16 %v3372, %v3371
    %v3388 = vpack.c.b16 %v3374, %v3373
    %v3389 = vpack.c.b16 %v3376, %v3375
    %v3390 = vpack.c.b16 %v3378, %v3377
    %v3391 = vpack.c.b16 %v3380, %v3379
    %v3392 = vpack.c.b16 %v3382, %v3381
    %v3393 = vpack.c.b16 %v3384, %v3383
    %v3394 = vpack.c.b16 %v3386, %v3385
    %3403 = vmatpush.bf16.msra.mxu0 %v3394
    %3404 = vmatpush.bf16.msra.mxu0 %v3393
    %3405 = vmatpush.bf16.msra.mxu0 %v3392
    %3406 = vmatpush.bf16.msra.mxu0 %v3391
    %3407 = vmatpush.bf16.msra.mxu0 %v3390
    %3408 = vmatpush.bf16.msra.mxu0 %v3389
    %3409 = vmatpush.bf16.msra.mxu0 %v3388
    %3410 = vmatpush.bf16.msra.mxu0 %v3387
    %3411 = vmatmul.bf16.gmra.mxu0 %v3334
    %v3412 = vpop.f32.mrf.mxu0
    %v3413 = vadd.f32 %v3353, %v3412
    %v3414 = vpop.f32.mrf.mxu0
    %3415 = vdwg.mxu0
    %3416 = vst [vmem:[%s11] sm:$0x3] %v3413
    // Predicated region
    $region42: #{forward.1} parent=1 // pred_check
      _
    $region43: #{forward.1} parent=1 // pred_check_branch
      %3418 = sbr.rel (0) target = $region45
    $region44: #{forward.1} parent=1 // pred_region
      %3420 = vsyncadd [#allocation3], 0
      %s3422 = sshll.u32 [#allocation2], 4
      %s3423 = int_to_ptr.vmem [resolvable:$true] %s3422
      %s3424 = sshll.u32 %s10, 4
      %s3425 = int_to_ptr.hbm [resolvable:$true] %s3424
      %3427 = dma.vmem_to_hbm [thread:$0]  %s3423, 32, %s3425, [#allocation3]
    $region45: #{forward.1} parent=1 // pred_fallthru
      _
    // Predicated region
    $region46: #{forward.1} parent=1 // pred_check
      _
    $region47: #{forward.1} parent=1 // pred_check_branch
      %3429 = sbr.rel (0) target = $region49
    $region48: #{forward.1} parent=1 // pred_region
      _
    $region49: #{forward.1} parent=1 // pred_fallthru
      _
    // Predicated region
    $region50: #{forward.1} parent=1 // pred_check
      _
    $region51: #{forward.1} parent=1 // pred_check_branch
      %3431 = sbr.rel (0) target = $region53
    $region52: #{forward.1} parent=1 // pred_region
      %3433 = dma.done [#allocation3], 32
    $region53: #{forward.1} parent=1 // pred_fallthru
      _
    // Predicated region
    $region54: #{forward.1} parent=1 // pred_check
      _
    $region55: #{forward.1} parent=1 // pred_check_branch
      %3435 = sbr.rel (0) target = $region57
    $region56: #{forward.1} parent=1 // pred_region
      _
    $region57: #{forward.1} parent=1 // pred_fallthru
      _
    %3436 = vsyncpa [#allocation3], 1

</llo_original>
